<compile_context>
chip_gen: v7x
topology: tpu7x:2x2x1
jax: 0.10.0
libtpu: 0.0.40
codegen_flags: <defaults>
</compile_context>

<pallas_src>
import functools

import jax
import jax.numpy as jnp
import numpy as np
from jax.experimental import pallas as pl
from jax.experimental.pallas import tpu as pltpu

EPS = 1e-5  # PyTorch LayerNorm default eps


def _round_up(a, m):
    return (a + m - 1) // m * m


def _cdiv(a, b):
    return (a + b - 1) // b


# ----------------------------------------------------------------------------
# Kernel
# ----------------------------------------------------------------------------
def tsmixer_kernel(
    x_ref,      # (TB, Cp, L)      f32  input batch tile, channels-first
    tng_ref,    # (NB, 1, Cp, 1)   f32  time-mix LN gamma (all blocks, resident)
    tnb_ref,    # (NB, 1, Cp, 1)   f32
    tw_ref,     # (NB, L, L)       cd   temporal Linear weight, stored (in, out)
    tb_ref,     # (NB, 1, 1, L)    f32
    fng_ref,    # (NB, 1, Cp, 1)   f32  feature-mix LN gamma
    fnb_ref,    # (NB, 1, Cp, 1)   f32
    fw1_ref,    # (NB, F, Cp)      cd   Linear(C->F) weight, PyTorch (out, in)
    fb1_ref,    # (NB, 1, F, 1)    f32
    fw2_ref,    # (NB, Cp, F)      cd   Linear(F->C) weight, PyTorch (out, in)
    fb2_ref,    # (NB, 1, Cp, 1)   f32
    pw_ref,     # (L, OUT_L)       cd   projection weight, stored (in, out)
    pb_ref,     # (1, OUT_L)       f32
    out_ref,    # (TB, Cp, OUT_L)  f32  output batch tile
    *, true_c, compute_dtype,
):
    cd = compute_dtype
    TB, Cp, L = x_ref.shape
    NB = tw_ref.shape[0]
    OUT_L = out_ref.shape[-1]

    # Channel mask (hoisted, built once): padded channels c >= true_c are
    # excluded from the LayerNorm statistics.
    cmask = (jax.lax.broadcasted_iota(jnp.int32, (1, Cp, 1), 1)
             < true_c).astype(jnp.float32)
    inv_c = 1.0 / float(true_c)

    def layernorm(v, g, b):
        # Two-pass LayerNorm over the channel (sublane) axis, masked to the
        # true channel count; statistics in f32 (review correctness note).
        mu = jnp.sum(v * cmask, axis=1, keepdims=True) * inv_c        # (TB,1,L)
        d = (v - mu) * cmask
        var = jnp.sum(d * d, axis=1, keepdims=True) * inv_c
        return d * jax.lax.rsqrt(var + EPS) * g + b

    # Batched (B, M, K) @ (B, K, N) -> (B, M, N)
    bdims = (((2,), (1,)), ((0,), (0,)))

    acc = x_ref[...].astype(jnp.float32)          # running activation (TB,Cp,L)

    for kb in range(NB):                          # weights resident; static idx
        # ------ time mixing: one (TB*Cp, L) @ (L, L) MXU matmul -------------
        y = layernorm(acc, tng_ref[kb], tnb_ref[kb])
        y = jnp.dot(y.reshape(TB * Cp, L).astype(cd), tw_ref[kb],
                    preferred_element_type=jnp.float32).reshape(TB, Cp, L)
        acc = acc + jnp.maximum(y + tb_ref[kb], 0.0)   # relu; dropout=id (eval)

        # ------ feature mixing: batched-over-TB MLP over channels -----------
        y = layernorm(acc, fng_ref[kb], fnb_ref[kb]).astype(cd)     # (TB,Cp,L)
        fw1_b = jnp.broadcast_to(fw1_ref[kb][None], (TB,) + fw1_ref.shape[1:])
        h = jax.lax.dot_general(fw1_b, y, bdims,
                                preferred_element_type=jnp.float32)  # (TB,F,L)
        h = jnp.maximum(h + fb1_ref[kb], 0.0).astype(cd)
        fw2_b = jnp.broadcast_to(fw2_ref[kb][None], (TB,) + fw2_ref.shape[1:])
        y = jax.lax.dot_general(fw2_b, h, bdims,
                                preferred_element_type=jnp.float32)  # (TB,Cp,L)
        acc = acc + y + fb2_ref[kb]

    # ------ feature projection over time: (TB*Cp, L) @ (L, OUT_L) -----------
    o = jnp.dot(acc.reshape(TB * Cp, L).astype(cd), pw_ref[...],
                preferred_element_type=jnp.float32) + pb_ref[...]
    out_ref[...] = o.reshape(TB, Cp, OUT_L).astype(out_ref.dtype)


# ----------------------------------------------------------------------------
# Wrapper
# ----------------------------------------------------------------------------
def _vmem_bytes(shape, dtype):
    """Rough VMEM footprint with native (sublane, lane) padding."""
    itemsize = jnp.dtype(dtype).itemsize
    if len(shape) == 1:
        return _round_up(int(shape[0]) * itemsize, 512)
    lead = 1
    for s in shape[:-2]:
        lead *= int(s)
    return (lead * _round_up(int(shape[-2]), 8)
            * _round_up(int(shape[-1]), 128) * itemsize)


def _pick_batch_tile(Cp, L, F, OUT_L, NB, cd, budget):
    f32 = jnp.float32
    # Resident weights (x2: the pipeline double-buffers inputs).
    w = 2 * (NB * (_vmem_bytes((L, L), cd) + _vmem_bytes((F, Cp), cd)
                   + _vmem_bytes((Cp, F), cd) + 4 * _vmem_bytes((Cp, 1), f32)
                   + _vmem_bytes((1, L), f32) + _vmem_bytes((F, 1), f32))
             + _vmem_bytes((L, OUT_L), cd) + _vmem_bytes((1, OUT_L), f32))
    # Per-sample working set: in/out tiles (double-buffered), running
    # activation + temporaries, feature-mix hidden, broadcast feature weights.
    per = (2 * _vmem_bytes((Cp, L), f32)
           + 2 * _vmem_bytes((Cp, OUT_L), f32)
           + 4 * _vmem_bytes((Cp, L), f32)
           + 2 * _vmem_bytes((Cp, L), cd)
           + _vmem_bytes((F, L), f32) + _vmem_bytes((F, L), cd)
           + _vmem_bytes((F, Cp), cd) + _vmem_bytes((Cp, F), cd))
    tb = (budget - w) // max(per, 1)
    return int(max(8, min(256, (tb // 8) * 8)))


def tsmixer_forward(x, params, *, out_seq_len, compute_dtype=jnp.bfloat16,
                    batch_tile=None):
    """TSMixer forward pass. x: (B, L, C) -> (B, out_seq_len, C)."""
    B, L, C = x.shape
    NB, F = params["fw1"].shape[0], params["fw1"].shape[1]
    OUT_L = out_seq_len
    assert params["tw_t"].shape == (NB, L, L)
    assert params["pw_t"].shape == (L, OUT_L)

    Cp = _round_up(C, 8)
    cd = compute_dtype
    f32 = jnp.float32

    # ---- VMEM budget (generation-aware: v7x 64 MiB, v5e/v6e 128 MiB) -------
    try:
        phys = int(pltpu.get_tpu_info().vmem_capacity_bytes)
    except Exception:
        phys = 64 * 2**20                      # conservative fallback
    phys = max(phys, 32 * 2**20)
    budget = min(int(phys * 0.55), 96 * 2**20)       # working-set target
    vmem_limit = int(min(phys * 4 // 5, 112 * 2**20))  # below physical ceiling

    # ---- batch tile: large (not "<=8"), padded batch, >=2 tiles if possible -
    if batch_tile is None:
        TB = _pick_batch_tile(Cp, L, F, OUT_L, NB, cd, budget)
    else:
        TB = _round_up(int(batch_tile), 8)
    TB = min(TB, _round_up(B, 8))
    if _cdiv(B, TB) == 1 and B > 8:
        TB = min(TB, _round_up(_cdiv(B, 2), 8))   # keep 2 tiles for megacore
    n_tiles = _cdiv(B, TB)
    B_pad = n_tiles * TB

    # ---- host-side layout plumbing (cheap XLA ops, outside the kernel) -----
    x_cf = jnp.transpose(x, (0, 2, 1)).astype(f32)               # (B, C, L)
    x_cf = jnp.pad(x_cf, ((0, B_pad - B), (0, Cp - C), (0, 0)))  # (B_pad,Cp,L)

    def pad_c(a, axis):
        pads = [(0, 0)] * a.ndim
        pads[axis] = (0, Cp - C)
        return jnp.pad(a, pads)

    tn_g = pad_c(params["tn_g"], 1).reshape(NB, 1, Cp, 1).astype(f32)
    tn_b = pad_c(params["tn_b"], 1).reshape(NB, 1, Cp, 1).astype(f32)
    fn_g = pad_c(params["fn_g"], 1).reshape(NB, 1, Cp, 1).astype(f32)
    fn_b = pad_c(params["fn_b"], 1).reshape(NB, 1, Cp, 1).astype(f32)
    tw = params["tw_t"].astype(cd)                               # (NB, L, L)
    tb = params["tb"].reshape(NB, 1, 1, L).astype(f32)
    fw1 = pad_c(params["fw1"], 2).astype(cd)                     # (NB, F, Cp)
    fb1 = params["fb1"].reshape(NB, 1, F, 1).astype(f32)
    fw2 = pad_c(params["fw2"], 1).astype(cd)                     # (NB, Cp, F)
    fb2 = pad_c(params["fb2"], 1).reshape(NB, 1, Cp, 1).astype(f32)
    pw = params["pw_t"].astype(cd)                               # (L, OUT_L)
    pb = params["pb"].astype(f32)                                # (1, OUT_L)

    tile_map = lambda i: (i, 0, 0)
    c2 = lambda i: (0, 0)
    c3 = lambda i: (0, 0, 0)
    c4 = lambda i: (0, 0, 0, 0)

    grid_spec = pltpu.PrefetchScalarGridSpec(
        num_scalar_prefetch=0,
        grid=(n_tiles,),                      # batch tiles only; blocks inside
        in_specs=[
            pl.BlockSpec((TB, Cp, L), tile_map),      # x (channels-first)
            pl.BlockSpec((NB, 1, Cp, 1), c4),         # tn_g   (resident)
            pl.BlockSpec((NB, 1, Cp, 1), c4),         # tn_b
            pl.BlockSpec((NB, L, L), c3),             # tw_t
            pl.BlockSpec((NB, 1, 1, L), c4),          # tb
            pl.BlockSpec((NB, 1, Cp, 1), c4),         # fn_g
            pl.BlockSpec((NB, 1, Cp, 1), c4),         # fn_b
            pl.BlockSpec((NB, F, Cp), c3),            # fw1
            pl.BlockSpec((NB, 1, F, 1), c4),          # fb1
            pl.BlockSpec((NB, Cp, F), c3),            # fw2
            pl.BlockSpec((NB, 1, Cp, 1), c4),         # fb2
            pl.BlockSpec((L, OUT_L), c2),             # pw_t
            pl.BlockSpec((1, OUT_L), c2),             # pb
        ],
        out_specs=pl.BlockSpec((TB, Cp, OUT_L), tile_map),
    )

    kernel = functools.partial(tsmixer_kernel, true_c=C, compute_dtype=cd)
    out_cf = pl.pallas_call(
        kernel,
        out_shape=jax.ShapeDtypeStruct((B_pad, Cp, OUT_L), f32),
        grid_spec=grid_spec,
        compiler_params=pltpu.CompilerParams(
            dimension_semantics=("parallel",),
            vmem_limit_bytes=vmem_limit,
        ),
    )(x_cf, tn_g, tn_b, tw, tb, fn_g, fn_b, fw1, fb1, fw2, fb2, pw, pb)

    # Drop padded batch / channels; rearrange back to (B, OUT_L, C).
    return jnp.transpose(out_cf[:B, :C], (0, 2, 1))


# ----------------------------------------------------------------------------
# Plain-JAX reference and parameter init (PyTorch-default style)
# ----------------------------------------------------------------------------
def tsmixer_reference(x, params):
    """Mirrors the PyTorch forward (eval mode), f32, HIGHEST precision."""
    hp = jax.lax.Precision.HIGHEST

    def ln(v, g, b):  # LayerNorm over channels (last axis of channels-last x)
        mu = jnp.mean(v, axis=-1, keepdims=True)
        var = jnp.mean((v - mu) ** 2, axis=-1, keepdims=True)
        return (v - mu) * jax.lax.rsqrt(var + EPS) * g + b

    x = x.astype(jnp.float32)
    NB = params["tw_t"].shape[0]
    for k in range(NB):
        y = ln(x, params["tn_g"][k, :, 0], params["tn_b"][k, :, 0])
        y = jnp.einsum("bjc,jl->blc", y, params["tw_t"][k], precision=hp)
        y = y + params["tb"][k, 0][None, :, None]
        x = x + jax.nn.relu(y)
        y = ln(x, params["fn_g"][k, :, 0], params["fn_b"][k, :, 0])
        h = jax.nn.relu(
            jnp.einsum("blc,fc->blf", y, params["fw1"][k], precision=hp)
            + params["fb1"][k, :, 0])
        y = (jnp.einsum("blf,cf->blc", h, params["fw2"][k], precision=hp)
             + params["fb2"][k, :, 0])
        x = x + y
    o = jnp.einsum("blc,lo->boc", x, params["pw_t"], precision=hp)
    return o + params["pb"][0][None, :, None]


def init_params(key, *, num_features, seq_len, out_seq_len, num_blocks, fc_dim):
    """Deterministic init mimicking PyTorch defaults (Linear U(+-1/sqrt(fan_in)),
    LayerNorm gamma=1 / beta=0).  tw_t / pw_t are the PyTorch (out, in) weights
    pre-transposed to (in, out); fw1 / fw2 keep the PyTorch (out, in) layout."""
    C, L, F, NB = num_features, seq_len, fc_dim, num_blocks
    keys = jax.random.split(key, 8)

    def u(k, shape, fan_in):
        bound = 1.0 / np.sqrt(fan_in)
        return jax.random.uniform(k, shape, jnp.float32, -bound, bound)

    return {
        "tn_g": jnp.ones((NB, C, 1), jnp.float32),
        "tn_b": jnp.zeros((NB, C, 1), jnp.float32),
        "tw_t": u(keys[0], (NB, L, L), L),            # W_time.T  -> (in, out)
        "tb":   u(keys[1], (NB, 1, L), L),
        "fn_g": jnp.ones((NB, C, 1), jnp.float32),
        "fn_b": jnp.zeros((NB, C, 1), jnp.float32),
        "fw1":  u(keys[2], (NB, F, C), C),            # PyTorch (out=F, in=C)
        "fb1":  u(keys[3], (NB, F, 1), C),
        "fw2":  u(keys[4], (NB, C, F), F),            # PyTorch (out=C, in=F)
        "fb2":  u(keys[5], (NB, C, 1), F),
        "pw_t": u(keys[6], (L, out_seq_len), L),      # W_proj.T  -> (in, out)
        "pb":   u(keys[7], (1, out_seq_len), L),
    }


if __name__ == "__main__":
    # Small shapes consistent with the module's forward contract.
    B, L, C = 2, 8, 4          # batch, seq_len, num_features
    OUT_L = 6                  # out_seq_len
    NB, F = 2, 32              # num_blocks, fc_dim

    key = jax.random.PRNGKey(0)
    k_x, k_p = jax.random.split(key)
    x = jax.random.normal(k_x, (B, L, C), jnp.float32)
    params = init_params(k_p, num_features=C, seq_len=L, out_seq_len=OUT_L,
                         num_blocks=NB, fc_dim=F)

    ref = jax.block_until_ready(tsmixer_reference(x, params))

    # f32 matmul-operand path.
    out_f32 = jax.block_until_ready(
        tsmixer_forward(x, params, out_seq_len=OUT_L,
                        compute_dtype=jnp.float32))
    assert out_f32.shape == (B, OUT_L, C)
    np.testing.assert_allclose(np.asarray(out_f32), np.asarray(ref),
                               rtol=2e-2, atol=2e-2)

    # Default bf16 matmul-operand path (f32 accumulation / LN / residual).
    out_bf16 = jax.block_until_ready(
        tsmixer_forward(x, params, out_seq_len=OUT_L,
                        compute_dtype=jnp.bfloat16))
    assert out_bf16.shape == (B, OUT_L, C)
    np.testing.assert_allclose(np.asarray(out_bf16), np.asarray(ref),
                               rtol=1e-1, atol=1e-1)

    print("KERNEL_OK")
</pallas_src>

<mosaic_0001>
module attributes {stable_mosaic.version = 11 : i64} {
  func.func @tsmixer_kernel(%arg0: i32, %arg1: memref<8x8x8xf32, #tpu.memory_space<vmem>>, %arg2: memref<2x1x8x1xf32, #tpu.memory_space<vmem>>, %arg3: memref<2x1x8x1xf32, #tpu.memory_space<vmem>>, %arg4: memref<2x8x8xf32, #tpu.memory_space<vmem>>, %arg5: memref<2x1x1x8xf32, #tpu.memory_space<vmem>>, %arg6: memref<2x1x8x1xf32, #tpu.memory_space<vmem>>, %arg7: memref<2x1x8x1xf32, #tpu.memory_space<vmem>>, %arg8: memref<2x32x8xf32, #tpu.memory_space<vmem>>, %arg9: memref<2x1x32x1xf32, #tpu.memory_space<vmem>>, %arg10: memref<2x8x32xf32, #tpu.memory_space<vmem>>, %arg11: memref<2x1x8x1xf32, #tpu.memory_space<vmem>>, %arg12: memref<8x6xf32, #tpu.memory_space<vmem>>, %arg13: memref<1x6xf32, #tpu.memory_space<vmem>>, %arg14: memref<8x8x6xf32, #tpu.memory_space<vmem>>) attributes {dimension_semantics = [#tpu.dimension_semantics<parallel>], iteration_bounds = array<i64: 1>, scalar_prefetch = 0 : i64, scratch_operands = 0 : i64, tpu.core_type = #tpu.core_type<tc>, window_params = [{transform_indices = @transform_0, window_bounds = array<i64: 8, 8, 8>}, {pipeline_mode = #tpu.pipeline_mode<synchronous>, transform_indices = @transform_1, window_bounds = array<i64: 2, 1, 8, 1>}, {pipeline_mode = #tpu.pipeline_mode<synchronous>, transform_indices = @transform_2, window_bounds = array<i64: 2, 1, 8, 1>}, {pipeline_mode = #tpu.pipeline_mode<synchronous>, transform_indices = @transform_3, window_bounds = array<i64: 2, 8, 8>}, {pipeline_mode = #tpu.pipeline_mode<synchronous>, transform_indices = @transform_4, window_bounds = array<i64: 2, 1, 1, 8>}, {pipeline_mode = #tpu.pipeline_mode<synchronous>, transform_indices = @transform_5, window_bounds = array<i64: 2, 1, 8, 1>}, {pipeline_mode = #tpu.pipeline_mode<synchronous>, transform_indices = @transform_6, window_bounds = array<i64: 2, 1, 8, 1>}, {pipeline_mode = #tpu.pipeline_mode<synchronous>, transform_indices = @transform_7, window_bounds = array<i64: 2, 32, 8>}, {pipeline_mode = #tpu.pipeline_mode<synchronous>, transform_indices = @transform_8, window_bounds = array<i64: 2, 1, 32, 1>}, {pipeline_mode = #tpu.pipeline_mode<synchronous>, transform_indices = @transform_9, window_bounds = array<i64: 2, 8, 32>}, {pipeline_mode = #tpu.pipeline_mode<synchronous>, transform_indices = @transform_10, window_bounds = array<i64: 2, 1, 8, 1>}, {pipeline_mode = #tpu.pipeline_mode<synchronous>, transform_indices = @transform_11, window_bounds = array<i64: 8, 6>}, {pipeline_mode = #tpu.pipeline_mode<synchronous>, transform_indices = @transform_12, window_bounds = array<i64: 1, 6>}, {transform_indices = @transform_13, window_bounds = array<i64: 8, 8, 6>}]} {
    %0 = tpu.iota {dimensions = array<i32: 1>} : vector<1x8x1xi32>
    %c4_i32 = arith.constant 4 : i32
    %1 = vector.broadcast %c4_i32 : i32 to vector<1x8x1xi32>
    %2 = arith.cmpi slt, %0, %1 : vector<1x8x1xi32>
    %3 = arith.extui %2 : vector<1x8x1xi1> to vector<1x8x1xi32>
    %4 = arith.sitofp %3 : vector<1x8x1xi32> to vector<1x8x1xf32>
    %c0 = arith.constant 0 : index
    %c0_0 = arith.constant 0 : index
    %c0_1 = arith.constant 0 : index
    %5 = vector.load %arg1[%c0, %c0_0, %c0_1] : memref<8x8x8xf32, #tpu.memory_space<vmem>>, vector<8x8x8xf32>
    %c0_2 = arith.constant 0 : index
    %c0_3 = arith.constant 0 : index
    %c0_4 = arith.constant 0 : index
    %c0_5 = arith.constant 0 : index
    %6 = vector.load %arg2[%c0_2, %c0_3, %c0_4, %c0_5] : memref<2x1x8x1xf32, #tpu.memory_space<vmem>>, vector<1x1x8x1xf32>
    %7 = vector.shape_cast %6 : vector<1x1x8x1xf32> to vector<1x8x1xf32>
    %c0_6 = arith.constant 0 : index
    %c0_7 = arith.constant 0 : index
    %c0_8 = arith.constant 0 : index
    %c0_9 = arith.constant 0 : index
    %8 = vector.load %arg3[%c0_6, %c0_7, %c0_8, %c0_9] : memref<2x1x8x1xf32, #tpu.memory_space<vmem>>, vector<1x1x8x1xf32>
    %9 = vector.shape_cast %8 : vector<1x1x8x1xf32> to vector<1x8x1xf32>
    %10 = vector.broadcast %4 : vector<1x8x1xf32> to vector<8x8x8xf32>
    %11 = arith.mulf %5, %10 : vector<8x8x8xf32>
    %cst = arith.constant dense<0.000000e+00> : vector<8x8xf32>
    %12 = vector.multi_reduction <add>, %11, %cst [1] : vector<8x8x8xf32> to vector<8x8xf32>
    %13 = vector.shape_cast %12 : vector<8x8xf32> to vector<8x1x8xf32>
    %cst_10 = arith.constant 2.500000e-01 : f32
    %14 = vector.broadcast %cst_10 : f32 to vector<8x1x8xf32>
    %15 = arith.mulf %13, %14 : vector<8x1x8xf32>
    %16 = vector.broadcast %15 : vector<8x1x8xf32> to vector<8x8x8xf32>
    %17 = arith.subf %5, %16 : vector<8x8x8xf32>
    %18 = vector.broadcast %4 : vector<1x8x1xf32> to vector<8x8x8xf32>
    %19 = arith.mulf %17, %18 : vector<8x8x8xf32>
    %20 = arith.mulf %19, %19 : vector<8x8x8xf32>
    %cst_11 = arith.constant dense<0.000000e+00> : vector<8x8xf32>
    %21 = vector.multi_reduction <add>, %20, %cst_11 [1] : vector<8x8x8xf32> to vector<8x8xf32>
    %22 = vector.shape_cast %21 : vector<8x8xf32> to vector<8x1x8xf32>
    %cst_12 = arith.constant 2.500000e-01 : f32
    %23 = vector.broadcast %cst_12 : f32 to vector<8x1x8xf32>
    %24 = arith.mulf %22, %23 : vector<8x1x8xf32>
    %cst_13 = arith.constant 9.99999974E-6 : f32
    %25 = vector.broadcast %cst_13 : f32 to vector<8x1x8xf32>
    %26 = arith.addf %24, %25 : vector<8x1x8xf32>
    %27 = math.rsqrt %26 : vector<8x1x8xf32>
    %28 = vector.broadcast %27 : vector<8x1x8xf32> to vector<8x8x8xf32>
    %29 = arith.mulf %19, %28 : vector<8x8x8xf32>
    %30 = vector.broadcast %7 : vector<1x8x1xf32> to vector<8x8x8xf32>
    %31 = arith.mulf %29, %30 : vector<8x8x8xf32>
    %32 = vector.broadcast %9 : vector<1x8x1xf32> to vector<8x8x8xf32>
    %33 = arith.addf %31, %32 : vector<8x8x8xf32>
    %34 = vector.shape_cast %33 : vector<8x8x8xf32> to vector<64x8xf32>
    %c0_14 = arith.constant 0 : index
    %c0_15 = arith.constant 0 : index
    %c0_16 = arith.constant 0 : index
    %35 = vector.load %arg4[%c0_14, %c0_15, %c0_16] : memref<2x8x8xf32, #tpu.memory_space<vmem>>, vector<1x8x8xf32>
    %36 = vector.shape_cast %35 : vector<1x8x8xf32> to vector<8x8xf32>
    %cst_17 = arith.constant dense<0.000000e+00> : vector<64x8xf32>
    %37 = tpu.matmul %34, %36, %cst_17 {dimension_numbers = #tpu.dot_dimension_numbers<[1], [0], [0], [1], [0, 0, 1, 1], [], []>} : vector<64x8xf32>, vector<8x8xf32>, vector<64x8xf32> -> vector<64x8xf32>
    %38 = vector.shape_cast %37 : vector<64x8xf32> to vector<8x8x8xf32>
    %c0_18 = arith.constant 0 : index
    %c0_19 = arith.constant 0 : index
    %c0_20 = arith.constant 0 : index
    %c0_21 = arith.constant 0 : index
    %39 = vector.load %arg5[%c0_18, %c0_19, %c0_20, %c0_21] : memref<2x1x1x8xf32, #tpu.memory_space<vmem>>, vector<1x1x1x8xf32>
    %40 = vector.shape_cast %39 : vector<1x1x1x8xf32> to vector<1x1x8xf32>
    %41 = vector.broadcast %40 : vector<1x1x8xf32> to vector<8x8x8xf32>
    %42 = arith.addf %38, %41 : vector<8x8x8xf32>
    %cst_22 = arith.constant 0.000000e+00 : f32
    %43 = vector.broadcast %cst_22 : f32 to vector<8x8x8xf32>
    %44 = arith.maximumf %42, %43 : vector<8x8x8xf32>
    %45 = arith.addf %5, %44 : vector<8x8x8xf32>
    %c0_23 = arith.constant 0 : index
    %c0_24 = arith.constant 0 : index
    %c0_25 = arith.constant 0 : index
    %c0_26 = arith.constant 0 : index
    %46 = vector.load %arg6[%c0_23, %c0_24, %c0_25, %c0_26] : memref<2x1x8x1xf32, #tpu.memory_space<vmem>>, vector<1x1x8x1xf32>
    %47 = vector.shape_cast %46 : vector<1x1x8x1xf32> to vector<1x8x1xf32>
    %c0_27 = arith.constant 0 : index
    %c0_28 = arith.constant 0 : index
    %c0_29 = arith.constant 0 : index
    %c0_30 = arith.constant 0 : index
    %48 = vector.load %arg7[%c0_27, %c0_28, %c0_29, %c0_30] : memref<2x1x8x1xf32, #tpu.memory_space<vmem>>, vector<1x1x8x1xf32>
    %49 = vector.shape_cast %48 : vector<1x1x8x1xf32> to vector<1x8x1xf32>
    %50 = vector.broadcast %4 : vector<1x8x1xf32> to vector<8x8x8xf32>
    %51 = arith.mulf %45, %50 : vector<8x8x8xf32>
    %cst_31 = arith.constant dense<0.000000e+00> : vector<8x8xf32>
    %52 = vector.multi_reduction <add>, %51, %cst_31 [1] : vector<8x8x8xf32> to vector<8x8xf32>
    %53 = vector.shape_cast %52 : vector<8x8xf32> to vector<8x1x8xf32>
    %cst_32 = arith.constant 2.500000e-01 : f32
    %54 = vector.broadcast %cst_32 : f32 to vector<8x1x8xf32>
    %55 = arith.mulf %53, %54 : vector<8x1x8xf32>
    %56 = vector.broadcast %55 : vector<8x1x8xf32> to vector<8x8x8xf32>
    %57 = arith.subf %45, %56 : vector<8x8x8xf32>
    %58 = vector.broadcast %4 : vector<1x8x1xf32> to vector<8x8x8xf32>
    %59 = arith.mulf %57, %58 : vector<8x8x8xf32>
    %60 = arith.mulf %59, %59 : vector<8x8x8xf32>
    %cst_33 = arith.constant dense<0.000000e+00> : vector<8x8xf32>
    %61 = vector.multi_reduction <add>, %60, %cst_33 [1] : vector<8x8x8xf32> to vector<8x8xf32>
    %62 = vector.shape_cast %61 : vector<8x8xf32> to vector<8x1x8xf32>
    %cst_34 = arith.constant 2.500000e-01 : f32
    %63 = vector.broadcast %cst_34 : f32 to vector<8x1x8xf32>
    %64 = arith.mulf %62, %63 : vector<8x1x8xf32>
    %cst_35 = arith.constant 9.99999974E-6 : f32
    %65 = vector.broadcast %cst_35 : f32 to vector<8x1x8xf32>
    %66 = arith.addf %64, %65 : vector<8x1x8xf32>
    %67 = math.rsqrt %66 : vector<8x1x8xf32>
    %68 = vector.broadcast %67 : vector<8x1x8xf32> to vector<8x8x8xf32>
    %69 = arith.mulf %59, %68 : vector<8x8x8xf32>
    %70 = vector.broadcast %47 : vector<1x8x1xf32> to vector<8x8x8xf32>
    %71 = arith.mulf %69, %70 : vector<8x8x8xf32>
    %72 = vector.broadcast %49 : vector<1x8x1xf32> to vector<8x8x8xf32>
    %73 = arith.addf %71, %72 : vector<8x8x8xf32>
    %c0_36 = arith.constant 0 : index
    %c0_37 = arith.constant 0 : index
    %c0_38 = arith.constant 0 : index
    %74 = vector.load %arg8[%c0_36, %c0_37, %c0_38] : memref<2x32x8xf32, #tpu.memory_space<vmem>>, vector<1x32x8xf32>
    %75 = vector.shape_cast %74 : vector<1x32x8xf32> to vector<32x8xf32>
    %76 = vector.shape_cast %75 : vector<32x8xf32> to vector<1x32x8xf32>
    %77 = vector.shape_cast %76 : vector<1x32x8xf32> to vector<1x32x8xf32>
    %78 = vector.broadcast %77 : vector<1x32x8xf32> to vector<8x32x8xf32>
    %cst_39 = arith.constant dense<0.000000e+00> : vector<8x32x8xf32>
    %79 = tpu.matmul %78, %73, %cst_39 {dimension_numbers = #tpu.dot_dimension_numbers<[2], [1], [1], [2], [0, 0, 0, 1, 1, 2], [0], [0]>} : vector<8x32x8xf32>, vector<8x8x8xf32>, vector<8x32x8xf32> -> vector<8x32x8xf32>
    %c0_40 = arith.constant 0 : index
    %c0_41 = arith.constant 0 : index
    %c0_42 = arith.constant 0 : index
    %c0_43 = arith.constant 0 : index
    %80 = vector.load %arg9[%c0_40, %c0_41, %c0_42, %c0_43] : memref<2x1x32x1xf32, #tpu.memory_space<vmem>>, vector<1x1x32x1xf32>
    %81 = vector.shape_cast %80 : vector<1x1x32x1xf32> to vector<1x32x1xf32>
    %82 = vector.broadcast %81 : vector<1x32x1xf32> to vector<8x32x8xf32>
    %83 = arith.addf %79, %82 : vector<8x32x8xf32>
    %cst_44 = arith.constant 0.000000e+00 : f32
    %84 = vector.broadcast %cst_44 : f32 to vector<8x32x8xf32>
    %85 = arith.maximumf %83, %84 : vector<8x32x8xf32>
    %c0_45 = arith.constant 0 : index
    %c0_46 = arith.constant 0 : index
    %c0_47 = arith.constant 0 : index
    %86 = vector.load %arg10[%c0_45, %c0_46, %c0_47] : memref<2x8x32xf32, #tpu.memory_space<vmem>>, vector<1x8x32xf32>
    %87 = vector.shape_cast %86 : vector<1x8x32xf32> to vector<8x32xf32>
    %88 = vector.shape_cast %87 : vector<8x32xf32> to vector<1x8x32xf32>
    %89 = vector.shape_cast %88 : vector<1x8x32xf32> to vector<1x8x32xf32>
    %90 = vector.broadcast %89 : vector<1x8x32xf32> to vector<8x8x32xf32>
    %cst_48 = arith.constant dense<0.000000e+00> : vector<8x8x8xf32>
    %91 = tpu.matmul %90, %85, %cst_48 {dimension_numbers = #tpu.dot_dimension_numbers<[2], [1], [1], [2], [0, 0, 0, 1, 1, 2], [0], [0]>} : vector<8x8x32xf32>, vector<8x32x8xf32>, vector<8x8x8xf32> -> vector<8x8x8xf32>
    %92 = arith.addf %45, %91 : vector<8x8x8xf32>
    %c0_49 = arith.constant 0 : index
    %c0_50 = arith.constant 0 : index
    %c0_51 = arith.constant 0 : index
    %c0_52 = arith.constant 0 : index
    %93 = vector.load %arg11[%c0_49, %c0_50, %c0_51, %c0_52] : memref<2x1x8x1xf32, #tpu.memory_space<vmem>>, vector<1x1x8x1xf32>
    %94 = vector.shape_cast %93 : vector<1x1x8x1xf32> to vector<1x8x1xf32>
    %95 = vector.broadcast %94 : vector<1x8x1xf32> to vector<8x8x8xf32>
    %96 = arith.addf %92, %95 : vector<8x8x8xf32>
    %c1 = arith.constant 1 : index
    %c0_53 = arith.constant 0 : index
    %c0_54 = arith.constant 0 : index
    %c0_55 = arith.constant 0 : index
    %97 = vector.load %arg2[%c1, %c0_53, %c0_54, %c0_55] : memref<2x1x8x1xf32, #tpu.memory_space<vmem>>, vector<1x1x8x1xf32>
    %98 = vector.shape_cast %97 : vector<1x1x8x1xf32> to vector<1x8x1xf32>
    %c1_56 = arith.constant 1 : index
    %c0_57 = arith.constant 0 : index
    %c0_58 = arith.constant 0 : index
    %c0_59 = arith.constant 0 : index
    %99 = vector.load %arg3[%c1_56, %c0_57, %c0_58, %c0_59] : memref<2x1x8x1xf32, #tpu.memory_space<vmem>>, vector<1x1x8x1xf32>
    %100 = vector.shape_cast %99 : vector<1x1x8x1xf32> to vector<1x8x1xf32>
    %101 = vector.broadcast %4 : vector<1x8x1xf32> to vector<8x8x8xf32>
    %102 = arith.mulf %96, %101 : vector<8x8x8xf32>
    %cst_60 = arith.constant dense<0.000000e+00> : vector<8x8xf32>
    %103 = vector.multi_reduction <add>, %102, %cst_60 [1] : vector<8x8x8xf32> to vector<8x8xf32>
    %104 = vector.shape_cast %103 : vector<8x8xf32> to vector<8x1x8xf32>
    %cst_61 = arith.constant 2.500000e-01 : f32
    %105 = vector.broadcast %cst_61 : f32 to vector<8x1x8xf32>
    %106 = arith.mulf %104, %105 : vector<8x1x8xf32>
    %107 = vector.broadcast %106 : vector<8x1x8xf32> to vector<8x8x8xf32>
    %108 = arith.subf %96, %107 : vector<8x8x8xf32>
    %109 = vector.broadcast %4 : vector<1x8x1xf32> to vector<8x8x8xf32>
    %110 = arith.mulf %108, %109 : vector<8x8x8xf32>
    %111 = arith.mulf %110, %110 : vector<8x8x8xf32>
    %cst_62 = arith.constant dense<0.000000e+00> : vector<8x8xf32>
    %112 = vector.multi_reduction <add>, %111, %cst_62 [1] : vector<8x8x8xf32> to vector<8x8xf32>
    %113 = vector.shape_cast %112 : vector<8x8xf32> to vector<8x1x8xf32>
    %cst_63 = arith.constant 2.500000e-01 : f32
    %114 = vector.broadcast %cst_63 : f32 to vector<8x1x8xf32>
    %115 = arith.mulf %113, %114 : vector<8x1x8xf32>
    %cst_64 = arith.constant 9.99999974E-6 : f32
    %116 = vector.broadcast %cst_64 : f32 to vector<8x1x8xf32>
    %117 = arith.addf %115, %116 : vector<8x1x8xf32>
    %118 = math.rsqrt %117 : vector<8x1x8xf32>
    %119 = vector.broadcast %118 : vector<8x1x8xf32> to vector<8x8x8xf32>
    %120 = arith.mulf %110, %119 : vector<8x8x8xf32>
    %121 = vector.broadcast %98 : vector<1x8x1xf32> to vector<8x8x8xf32>
    %122 = arith.mulf %120, %121 : vector<8x8x8xf32>
    %123 = vector.broadcast %100 : vector<1x8x1xf32> to vector<8x8x8xf32>
    %124 = arith.addf %122, %123 : vector<8x8x8xf32>
    %125 = vector.shape_cast %124 : vector<8x8x8xf32> to vector<64x8xf32>
    %c1_65 = arith.constant 1 : index
    %c0_66 = arith.constant 0 : index
    %c0_67 = arith.constant 0 : index
    %126 = vector.load %arg4[%c1_65, %c0_66, %c0_67] : memref<2x8x8xf32, #tpu.memory_space<vmem>>, vector<1x8x8xf32>
    %127 = vector.shape_cast %126 : vector<1x8x8xf32> to vector<8x8xf32>
    %cst_68 = arith.constant dense<0.000000e+00> : vector<64x8xf32>
    %128 = tpu.matmul %125, %127, %cst_68 {dimension_numbers = #tpu.dot_dimension_numbers<[1], [0], [0], [1], [0, 0, 1, 1], [], []>} : vector<64x8xf32>, vector<8x8xf32>, vector<64x8xf32> -> vector<64x8xf32>
    %129 = vector.shape_cast %128 : vector<64x8xf32> to vector<8x8x8xf32>
    %c1_69 = arith.constant 1 : index
    %c0_70 = arith.constant 0 : index
    %c0_71 = arith.constant 0 : index
    %c0_72 = arith.constant 0 : index
    %130 = vector.load %arg5[%c1_69, %c0_70, %c0_71, %c0_72] : memref<2x1x1x8xf32, #tpu.memory_space<vmem>>, vector<1x1x1x8xf32>
    %131 = vector.shape_cast %130 : vector<1x1x1x8xf32> to vector<1x1x8xf32>
    %132 = vector.broadcast %131 : vector<1x1x8xf32> to vector<8x8x8xf32>
    %133 = arith.addf %129, %132 : vector<8x8x8xf32>
    %cst_73 = arith.constant 0.000000e+00 : f32
    %134 = vector.broadcast %cst_73 : f32 to vector<8x8x8xf32>
    %135 = arith.maximumf %133, %134 : vector<8x8x8xf32>
    %136 = arith.addf %96, %135 : vector<8x8x8xf32>
    %c1_74 = arith.constant 1 : index
    %c0_75 = arith.constant 0 : index
    %c0_76 = arith.constant 0 : index
    %c0_77 = arith.constant 0 : index
    %137 = vector.load %arg6[%c1_74, %c0_75, %c0_76, %c0_77] : memref<2x1x8x1xf32, #tpu.memory_space<vmem>>, vector<1x1x8x1xf32>
    %138 = vector.shape_cast %137 : vector<1x1x8x1xf32> to vector<1x8x1xf32>
    %c1_78 = arith.constant 1 : index
    %c0_79 = arith.constant 0 : index
    %c0_80 = arith.constant 0 : index
    %c0_81 = arith.constant 0 : index
    %139 = vector.load %arg7[%c1_78, %c0_79, %c0_80, %c0_81] : memref<2x1x8x1xf32, #tpu.memory_space<vmem>>, vector<1x1x8x1xf32>
    %140 = vector.shape_cast %139 : vector<1x1x8x1xf32> to vector<1x8x1xf32>
    %141 = vector.broadcast %4 : vector<1x8x1xf32> to vector<8x8x8xf32>
    %142 = arith.mulf %136, %141 : vector<8x8x8xf32>
    %cst_82 = arith.constant dense<0.000000e+00> : vector<8x8xf32>
    %143 = vector.multi_reduction <add>, %142, %cst_82 [1] : vector<8x8x8xf32> to vector<8x8xf32>
    %144 = vector.shape_cast %143 : vector<8x8xf32> to vector<8x1x8xf32>
    %cst_83 = arith.constant 2.500000e-01 : f32
    %145 = vector.broadcast %cst_83 : f32 to vector<8x1x8xf32>
    %146 = arith.mulf %144, %145 : vector<8x1x8xf32>
    %147 = vector.broadcast %146 : vector<8x1x8xf32> to vector<8x8x8xf32>
    %148 = arith.subf %136, %147 : vector<8x8x8xf32>
    %149 = vector.broadcast %4 : vector<1x8x1xf32> to vector<8x8x8xf32>
    %150 = arith.mulf %148, %149 : vector<8x8x8xf32>
    %151 = arith.mulf %150, %150 : vector<8x8x8xf32>
    %cst_84 = arith.constant dense<0.000000e+00> : vector<8x8xf32>
    %152 = vector.multi_reduction <add>, %151, %cst_84 [1] : vector<8x8x8xf32> to vector<8x8xf32>
    %153 = vector.shape_cast %152 : vector<8x8xf32> to vector<8x1x8xf32>
    %cst_85 = arith.constant 2.500000e-01 : f32
    %154 = vector.broadcast %cst_85 : f32 to vector<8x1x8xf32>
    %155 = arith.mulf %153, %154 : vector<8x1x8xf32>
    %cst_86 = arith.constant 9.99999974E-6 : f32
    %156 = vector.broadcast %cst_86 : f32 to vector<8x1x8xf32>
    %157 = arith.addf %155, %156 : vector<8x1x8xf32>
    %158 = math.rsqrt %157 : vector<8x1x8xf32>
    %159 = vector.broadcast %158 : vector<8x1x8xf32> to vector<8x8x8xf32>
    %160 = arith.mulf %150, %159 : vector<8x8x8xf32>
    %161 = vector.broadcast %138 : vector<1x8x1xf32> to vector<8x8x8xf32>
    %162 = arith.mulf %160, %161 : vector<8x8x8xf32>
    %163 = vector.broadcast %140 : vector<1x8x1xf32> to vector<8x8x8xf32>
    %164 = arith.addf %162, %163 : vector<8x8x8xf32>
    %c1_87 = arith.constant 1 : index
    %c0_88 = arith.constant 0 : index
    %c0_89 = arith.constant 0 : index
    %165 = vector.load %arg8[%c1_87, %c0_88, %c0_89] : memref<2x32x8xf32, #tpu.memory_space<vmem>>, vector<1x32x8xf32>
    %166 = vector.shape_cast %165 : vector<1x32x8xf32> to vector<32x8xf32>
    %167 = vector.shape_cast %166 : vector<32x8xf32> to vector<1x32x8xf32>
    %168 = vector.shape_cast %167 : vector<1x32x8xf32> to vector<1x32x8xf32>
    %169 = vector.broadcast %168 : vector<1x32x8xf32> to vector<8x32x8xf32>
    %cst_90 = arith.constant dense<0.000000e+00> : vector<8x32x8xf32>
    %170 = tpu.matmul %169, %164, %cst_90 {dimension_numbers = #tpu.dot_dimension_numbers<[2], [1], [1], [2], [0, 0, 0, 1, 1, 2], [0], [0]>} : vector<8x32x8xf32>, vector<8x8x8xf32>, vector<8x32x8xf32> -> vector<8x32x8xf32>
    %c1_91 = arith.constant 1 : index
    %c0_92 = arith.constant 0 : index
    %c0_93 = arith.constant 0 : index
    %c0_94 = arith.constant 0 : index
    %171 = vector.load %arg9[%c1_91, %c0_92, %c0_93, %c0_94] : memref<2x1x32x1xf32, #tpu.memory_space<vmem>>, vector<1x1x32x1xf32>
    %172 = vector.shape_cast %171 : vector<1x1x32x1xf32> to vector<1x32x1xf32>
    %173 = vector.broadcast %172 : vector<1x32x1xf32> to vector<8x32x8xf32>
    %174 = arith.addf %170, %173 : vector<8x32x8xf32>
    %cst_95 = arith.constant 0.000000e+00 : f32
    %175 = vector.broadcast %cst_95 : f32 to vector<8x32x8xf32>
    %176 = arith.maximumf %174, %175 : vector<8x32x8xf32>
    %c1_96 = arith.constant 1 : index
    %c0_97 = arith.constant 0 : index
    %c0_98 = arith.constant 0 : index
    %177 = vector.load %arg10[%c1_96, %c0_97, %c0_98] : memref<2x8x32xf32, #tpu.memory_space<vmem>>, vector<1x8x32xf32>
    %178 = vector.shape_cast %177 : vector<1x8x32xf32> to vector<8x32xf32>
    %179 = vector.shape_cast %178 : vector<8x32xf32> to vector<1x8x32xf32>
    %180 = vector.shape_cast %179 : vector<1x8x32xf32> to vector<1x8x32xf32>
    %181 = vector.broadcast %180 : vector<1x8x32xf32> to vector<8x8x32xf32>
    %cst_99 = arith.constant dense<0.000000e+00> : vector<8x8x8xf32>
    %182 = tpu.matmul %181, %176, %cst_99 {dimension_numbers = #tpu.dot_dimension_numbers<[2], [1], [1], [2], [0, 0, 0, 1, 1, 2], [0], [0]>} : vector<8x8x32xf32>, vector<8x32x8xf32>, vector<8x8x8xf32> -> vector<8x8x8xf32>
    %183 = arith.addf %136, %182 : vector<8x8x8xf32>
    %c1_100 = arith.constant 1 : index
    %c0_101 = arith.constant 0 : index
    %c0_102 = arith.constant 0 : index
    %c0_103 = arith.constant 0 : index
    %184 = vector.load %arg11[%c1_100, %c0_101, %c0_102, %c0_103] : memref<2x1x8x1xf32, #tpu.memory_space<vmem>>, vector<1x1x8x1xf32>
    %185 = vector.shape_cast %184 : vector<1x1x8x1xf32> to vector<1x8x1xf32>
    %186 = vector.broadcast %185 : vector<1x8x1xf32> to vector<8x8x8xf32>
    %187 = arith.addf %183, %186 : vector<8x8x8xf32>
    %188 = vector.shape_cast %187 : vector<8x8x8xf32> to vector<64x8xf32>
    %c0_104 = arith.constant 0 : index
    %c0_105 = arith.constant 0 : index
    %189 = vector.load %arg12[%c0_104, %c0_105] : memref<8x6xf32, #tpu.memory_space<vmem>>, vector<8x6xf32>
    %cst_106 = arith.constant dense<0.000000e+00> : vector<64x6xf32>
    %190 = tpu.matmul %188, %189, %cst_106 {dimension_numbers = #tpu.dot_dimension_numbers<[1], [0], [0], [1], [0, 0, 1, 1], [], []>} : vector<64x8xf32>, vector<8x6xf32>, vector<64x6xf32> -> vector<64x6xf32>
    %c0_107 = arith.constant 0 : index
    %c0_108 = arith.constant 0 : index
    %191 = vector.load %arg13[%c0_107, %c0_108] : memref<1x6xf32, #tpu.memory_space<vmem>>, vector<1x6xf32>
    %192 = vector.broadcast %191 : vector<1x6xf32> to vector<64x6xf32>
    %193 = arith.addf %190, %192 : vector<64x6xf32>
    %194 = vector.shape_cast %193 : vector<64x6xf32> to vector<8x8x6xf32>
    %c0_109 = arith.constant 0 : index
    %c0_110 = arith.constant 0 : index
    %c0_111 = arith.constant 0 : index
    %195 = vector.load %arg14[%c0_109, %c0_110, %c0_111] : memref<8x8x6xf32, #tpu.memory_space<vmem>>, vector<8x8x6xf32>
    tpu.vector_store %arg14[%c0_109, %c0_110, %c0_111], %194 {strides = array<i32>} : memref<8x8x6xf32, #tpu.memory_space<vmem>>, vector<8x8x6xf32>,
    return
  }
  func.func @transform_0(%arg0: i32) -> (i32, i32, i32) {
    %c0_i32 = arith.constant 0 : i32
    %c0_i32_0 = arith.constant 0 : i32
    %c0_i32_1 = arith.constant 0 : i32
    return %arg0, %c0_i32, %c0_i32_0 : i32, i32, i32
  }
  func.func @transform_1(%arg0: i32) -> (i32, i32, i32, i32) {
    %c0_i32 = arith.constant 0 : i32
    %c0_i32_0 = arith.constant 0 : i32
    %c0_i32_1 = arith.constant 0 : i32
    %c0_i32_2 = arith.constant 0 : i32
    %c0_i32_3 = arith.constant 0 : i32
    return %c0_i32, %c0_i32_0, %c0_i32_1, %c0_i32_2 : i32, i32, i32, i32
  }
  func.func @transform_2(%arg0: i32) -> (i32, i32, i32, i32) {
    %c0_i32 = arith.constant 0 : i32
    %c0_i32_0 = arith.constant 0 : i32
    %c0_i32_1 = arith.constant 0 : i32
    %c0_i32_2 = arith.constant 0 : i32
    %c0_i32_3 = arith.constant 0 : i32
    return %c0_i32, %c0_i32_0, %c0_i32_1, %c0_i32_2 : i32, i32, i32, i32
  }
  func.func @transform_3(%arg0: i32) -> (i32, i32, i32) {
    %c0_i32 = arith.constant 0 : i32
    %c0_i32_0 = arith.constant 0 : i32
    %c0_i32_1 = arith.constant 0 : i32
    %c0_i32_2 = arith.constant 0 : i32
    return %c0_i32, %c0_i32_0, %c0_i32_1 : i32, i32, i32
  }
  func.func @transform_4(%arg0: i32) -> (i32, i32, i32, i32) {
    %c0_i32 = arith.constant 0 : i32
    %c0_i32_0 = arith.constant 0 : i32
    %c0_i32_1 = arith.constant 0 : i32
    %c0_i32_2 = arith.constant 0 : i32
    %c0_i32_3 = arith.constant 0 : i32
    return %c0_i32, %c0_i32_0, %c0_i32_1, %c0_i32_2 : i32, i32, i32, i32
  }
  func.func @transform_5(%arg0: i32) -> (i32, i32, i32, i32) {
    %c0_i32 = arith.constant 0 : i32
    %c0_i32_0 = arith.constant 0 : i32
    %c0_i32_1 = arith.constant 0 : i32
    %c0_i32_2 = arith.constant 0 : i32
    %c0_i32_3 = arith.constant 0 : i32
    return %c0_i32, %c0_i32_0, %c0_i32_1, %c0_i32_2 : i32, i32, i32, i32
  }
  func.func @transform_6(%arg0: i32) -> (i32, i32, i32, i32) {
    %c0_i32 = arith.constant 0 : i32
    %c0_i32_0 = arith.constant 0 : i32
    %c0_i32_1 = arith.constant 0 : i32
    %c0_i32_2 = arith.constant 0 : i32
    %c0_i32_3 = arith.constant 0 : i32
    return %c0_i32, %c0_i32_0, %c0_i32_1, %c0_i32_2 : i32, i32, i32, i32
  }
  func.func @transform_7(%arg0: i32) -> (i32, i32, i32) {
    %c0_i32 = arith.constant 0 : i32
    %c0_i32_0 = arith.constant 0 : i32
    %c0_i32_1 = arith.constant 0 : i32
    %c0_i32_2 = arith.constant 0 : i32
    return %c0_i32, %c0_i32_0, %c0_i32_1 : i32, i32, i32
  }
  func.func @transform_8(%arg0: i32) -> (i32, i32, i32, i32) {
    %c0_i32 = arith.constant 0 : i32
    %c0_i32_0 = arith.constant 0 : i32
    %c0_i32_1 = arith.constant 0 : i32
    %c0_i32_2 = arith.constant 0 : i32
    %c0_i32_3 = arith.constant 0 : i32
    return %c0_i32, %c0_i32_0, %c0_i32_1, %c0_i32_2 : i32, i32, i32, i32
  }
  func.func @transform_9(%arg0: i32) -> (i32, i32, i32) {
    %c0_i32 = arith.constant 0 : i32
    %c0_i32_0 = arith.constant 0 : i32
    %c0_i32_1 = arith.constant 0 : i32
    %c0_i32_2 = arith.constant 0 : i32
    return %c0_i32, %c0_i32_0, %c0_i32_1 : i32, i32, i32
  }
  func.func @transform_10(%arg0: i32) -> (i32, i32, i32, i32) {
    %c0_i32 = arith.constant 0 : i32
    %c0_i32_0 = arith.constant 0 : i32
    %c0_i32_1 = arith.constant 0 : i32
    %c0_i32_2 = arith.constant 0 : i32
    %c0_i32_3 = arith.constant 0 : i32
    return %c0_i32, %c0_i32_0, %c0_i32_1, %c0_i32_2 : i32, i32, i32, i32
  }
  func.func @transform_11(%arg0: i32) -> (i32, i32) {
    %c0_i32 = arith.constant 0 : i32
    %c0_i32_0 = arith.constant 0 : i32
    %c0_i32_1 = arith.constant 0 : i32
    return %c0_i32, %c0_i32_0 : i32, i32
  }
  func.func @transform_12(%arg0: i32) -> (i32, i32) {
    %c0_i32 = arith.constant 0 : i32
    %c0_i32_0 = arith.constant 0 : i32
    %c0_i32_1 = arith.constant 0 : i32
    return %c0_i32, %c0_i32_0 : i32, i32
  }
  func.func @transform_13(%arg0: i32) -> (i32, i32, i32) {
    %c0_i32 = arith.constant 0 : i32
    %c0_i32_0 = arith.constant 0 : i32
    %c0_i32_1 = arith.constant 0 : i32
    return %arg0, %c0_i32, %c0_i32_0 : i32, i32, i32
  }
}

</mosaic_0001>

<llo_original>
// kernel: tpu_custom_call.1
$region0: #{tpu_custom_call.1}
  #allocation0 [shape = 'u32[]', space=smem, size = 0x4, offset = 0x4, fixed_abs, tag = 'smem constant byte address 0x4 - core index']
  #allocation1 [shape = 'u32[144,128]{1,0:T(1,128)}', space=vmem, size = 0x12000, scoped, tag = 'internal scratch']
  %s0 = inlined_call_operand.vmem [shape: f32[8,8,8], index: 0, kind: input, shape index: {}]
  %s1 = inlined_call_operand.vmem [shape: f32[2,1,8,1], index: 1, kind: input, shape index: {}]
  %s2 = inlined_call_operand.vmem [shape: f32[2,1,8,1], index: 2, kind: input, shape index: {}]
  %s3 = inlined_call_operand.vmem [shape: f32[2,8,8], index: 3, kind: input, shape index: {}]
  %s4 = inlined_call_operand.vmem [shape: f32[2,1,1,8], index: 4, kind: input, shape index: {}]
  %s5 = inlined_call_operand.vmem [shape: f32[2,1,8,1], index: 5, kind: input, shape index: {}]
  %s6 = inlined_call_operand.vmem [shape: f32[2,1,8,1], index: 6, kind: input, shape index: {}]
  %s7 = inlined_call_operand.vmem [shape: f32[2,32,8], index: 7, kind: input, shape index: {}]
  %s8 = inlined_call_operand.vmem [shape: f32[2,1,32,1], index: 8, kind: input, shape index: {}]
  %s9 = inlined_call_operand.vmem [shape: f32[2,8,32], index: 9, kind: input, shape index: {}]
  %s10 = inlined_call_operand.vmem [shape: f32[2,1,8,1], index: 10, kind: input, shape index: {}]
  %s11 = inlined_call_operand.vmem [shape: f32[8,6], index: 11, kind: input, shape index: {}]
  %s12 = inlined_call_operand.vmem [shape: f32[1,6], index: 12, kind: input, shape index: {}]
  %s13 = inlined_call_operand.vmem [shape: f32[8,8,6], index: 13, kind: output, shape index: {}]
  %s14 = sld [smem:[#allocation0]]
  $region62: #{tpu_custom_call.1} parent=0
    _
  %s16 = ssub.s32 1, %s14
  %s17 = scalar_select 0, %s16, %s14
  // Predicated region
  $region2: #{tpu_custom_call.1} parent=0 // pred_check
    _
  $region3: #{tpu_custom_call.1} parent=0 // pred_check_branch
    %19 = sbr.rel (0) target = $region5
  $region4: #{tpu_custom_call.1} parent=0 // pred_region
    _
  $region5: #{tpu_custom_call.1} parent=0 // pred_fallthru
    _
  // Predicated region
  $region6: #{tpu_custom_call.1} parent=0 // pred_check
    _
  $region7: #{tpu_custom_call.1} parent=0 // pred_check_branch
    %21 = sbr.rel (0) target = $region9
  $region8: #{tpu_custom_call.1} parent=0 // pred_region
    _
  $region9: #{tpu_custom_call.1} parent=0 // pred_fallthru
    _
  // Predicated region
  $region10: #{tpu_custom_call.1} parent=0 // pred_check
    _
  $region11: #{tpu_custom_call.1} parent=0 // pred_check_branch
    %23 = sbr.rel (0) target = $region13
  $region12: #{tpu_custom_call.1} parent=0 // pred_region
    _
  $region13: #{tpu_custom_call.1} parent=0 // pred_fallthru
    _
  // Predicated region
  $region14: #{tpu_custom_call.1} parent=0 // pred_check
    _
  $region15: #{tpu_custom_call.1} parent=0 // pred_check_branch
    %25 = sbr.rel (0) target = $region17
  $region16: #{tpu_custom_call.1} parent=0 // pred_region
    _
  $region17: #{tpu_custom_call.1} parent=0 // pred_fallthru
    _
  // Predicated region
  $region18: #{tpu_custom_call.1} parent=0 // pred_check
    _
  $region19: #{tpu_custom_call.1} parent=0 // pred_check_branch
    %27 = sbr.rel (0) target = $region21
  $region20: #{tpu_custom_call.1} parent=0 // pred_region
    _
  $region21: #{tpu_custom_call.1} parent=0 // pred_fallthru
    _
  // Predicated region
  $region22: #{tpu_custom_call.1} parent=0 // pred_check
    _
  $region23: #{tpu_custom_call.1} parent=0 // pred_check_branch
    %29 = sbr.rel (0) target = $region25
  $region24: #{tpu_custom_call.1} parent=0 // pred_region
    _
  $region25: #{tpu_custom_call.1} parent=0 // pred_fallthru
    _
  // Predicated region
  $region26: #{tpu_custom_call.1} parent=0 // pred_check
    _
  $region27: #{tpu_custom_call.1} parent=0 // pred_check_branch
    %31 = sbr.rel (0) target = $region29
  $region28: #{tpu_custom_call.1} parent=0 // pred_region
    _
  $region29: #{tpu_custom_call.1} parent=0 // pred_fallthru
    _
  // Predicated region
  $region30: #{tpu_custom_call.1} parent=0 // pred_check
    _
  $region31: #{tpu_custom_call.1} parent=0 // pred_check_branch
    %33 = sbr.rel (0) target = $region33
  $region32: #{tpu_custom_call.1} parent=0 // pred_region
    _
  $region33: #{tpu_custom_call.1} parent=0 // pred_fallthru
    _
  // Predicated region
  $region34: #{tpu_custom_call.1} parent=0 // pred_check
    _
  $region35: #{tpu_custom_call.1} parent=0 // pred_check_branch
    %35 = sbr.rel (0) target = $region37
  $region36: #{tpu_custom_call.1} parent=0 // pred_region
    _
  $region37: #{tpu_custom_call.1} parent=0 // pred_fallthru
    _
  // Predicated region
  $region38: #{tpu_custom_call.1} parent=0 // pred_check
    _
  $region39: #{tpu_custom_call.1} parent=0 // pred_check_branch
    %37 = sbr.rel (0) target = $region41
  $region40: #{tpu_custom_call.1} parent=0 // pred_region
    _
  $region41: #{tpu_custom_call.1} parent=0 // pred_fallthru
    _
  // Predicated region
  $region42: #{tpu_custom_call.1} parent=0 // pred_check
    _
  $region43: #{tpu_custom_call.1} parent=0 // pred_check_branch
    %39 = sbr.rel (0) target = $region45
  $region44: #{tpu_custom_call.1} parent=0 // pred_region
    _
  $region45: #{tpu_custom_call.1} parent=0 // pred_fallthru
    _
  // Predicated region
  $region46: #{tpu_custom_call.1} parent=0 // pred_check
    _
  $region47: #{tpu_custom_call.1} parent=0 // pred_check_branch
    %41 = sbr.rel (0) target = $region49
  $region48: #{tpu_custom_call.1} parent=0 // pred_region
    _
  $region49: #{tpu_custom_call.1} parent=0 // pred_fallthru
    _
  // Predicated region
  $region50: #{tpu_custom_call.1} parent=0 // pred_check
    _
  $region51: #{tpu_custom_call.1} parent=0 // pred_check_branch
    %43 = sbr.rel (0) target = $region53
  $region52: #{tpu_custom_call.1} parent=0 // pred_region
    _
  $region53: #{tpu_custom_call.1} parent=0 // pred_fallthru
    _
  %v44 = vlaneseq
  %v45 = vshrl.u32 %v44, 7
  %vm46 = vcmp.lt.s32.totalorder %v45, 4
  %v47 = vsel %vm46, 1, 0
  %v48 = vcvt.s32.f32 %v47
  %v49 = vld [vmem:[%s0] sm:$0xff]
  %v50 = vld [vmem:[%s0 + $0x8] sm:$0xff]
  %v51 = vld [vmem:[%s0 + $0x10] sm:$0xff]
  %v52 = vld [vmem:[%s0 + $0x18] sm:$0xff]
  %v53 = vld [vmem:[%s0 + $0x20] sm:$0xff]
  %v54 = vld [vmem:[%s0 + $0x28] sm:$0xff]
  %v55 = vld [vmem:[%s0 + $0x30] sm:$0xff]
  %v56 = vld [vmem:[%s0 + $0x38] sm:$0xff]
  %v57 = vld [vmem:[%s1] sm:$0xff]
  %v58 = vld [vmem:[%s2] sm:$0xff]
  %v59 = vmul.f32 %v49, %v48
  %v60 = vmul.f32 %v50, %v48
  %v61 = vmul.f32 %v51, %v48
  %v62 = vmul.f32 %v52, %v48
  %v63 = vmul.f32 %v53, %v48
  %v64 = vmul.f32 %v54, %v48
  %v65 = vmul.f32 %v55, %v48
  %v66 = vmul.f32 %v56, %v48
  %vm67 = vcmask 64512
  %v68 = vsel %vm67, %v59, 0.0
  %v69 = vrot.slane %v68, 4
  %v70 = vadd.f32 %v68, %v69
  %v71 = vrot.slane %v70, 2
  %v72 = vadd.f32 %v70, %v71
  %v73 = vrot.slane %v72, 1
  %v74 = vadd.f32 %v72, %v73
  %v75 = vsel %vm67, %v60, 0.0
  %v76 = vrot.slane %v75, 4
  %v77 = vadd.f32 %v75, %v76
  %v78 = vrot.slane %v77, 2
  %v79 = vadd.f32 %v77, %v78
  %v80 = vrot.slane %v79, 1
  %v81 = vadd.f32 %v79, %v80
  %v82 = vsel %vm67, %v61, 0.0
  %v83 = vrot.slane %v82, 4
  %v84 = vadd.f32 %v82, %v83
  %v85 = vrot.slane %v84, 2
  %v86 = vadd.f32 %v84, %v85
  %v87 = vrot.slane %v86, 1
  %v88 = vadd.f32 %v86, %v87
  %v89 = vsel %vm67, %v62, 0.0
  %v90 = vrot.slane %v89, 4
  %v91 = vadd.f32 %v89, %v90
  %v92 = vrot.slane %v91, 2
  %v93 = vadd.f32 %v91, %v92
  %v94 = vrot.slane %v93, 1
  %v95 = vadd.f32 %v93, %v94
  %v96 = vsel %vm67, %v63, 0.0
  %v97 = vrot.slane %v96, 4
  %v98 = vadd.f32 %v96, %v97
  %v99 = vrot.slane %v98, 2
  %v100 = vadd.f32 %v98, %v99
  %v101 = vrot.slane %v100, 1
  %v102 = vadd.f32 %v100, %v101
  %v103 = vsel %vm67, %v64, 0.0
  %v104 = vrot.slane %v103, 4
  %v105 = vadd.f32 %v103, %v104
  %v106 = vrot.slane %v105, 2
  %v107 = vadd.f32 %v105, %v106
  %v108 = vrot.slane %v107, 1
  %v109 = vadd.f32 %v107, %v108
  %v110 = vsel %vm67, %v65, 0.0
  %v111 = vrot.slane %v110, 4
  %v112 = vadd.f32 %v110, %v111
  %v113 = vrot.slane %v112, 2
  %v114 = vadd.f32 %v112, %v113
  %v115 = vrot.slane %v114, 1
  %v116 = vadd.f32 %v114, %v115
  %v117 = vsel %vm67, %v66, 0.0
  %v118 = vrot.slane %v117, 4
  %v119 = vadd.f32 %v117, %v118
  %v120 = vrot.slane %v119, 2
  %v121 = vadd.f32 %v119, %v120
  %v122 = vrot.slane %v121, 1
  %v123 = vadd.f32 %v121, %v122
  %v124 = vmul.f32 %v74, 0.25
  %v125 = vmul.f32 %v81, 0.25
  %v126 = vmul.f32 %v88, 0.25
  %v127 = vmul.f32 %v95, 0.25
  %v128 = vmul.f32 %v102, 0.25
  %v129 = vmul.f32 %v109, 0.25
  %v130 = vmul.f32 %v116, 0.25
  %v131 = vmul.f32 %v123, 0.25
  %v132 = vsub.f32 %v49, %v124
  %v133 = vsub.f32 %v50, %v125
  %v134 = vsub.f32 %v51, %v126
  %v135 = vsub.f32 %v52, %v127
  %v136 = vsub.f32 %v53, %v128
  %v137 = vsub.f32 %v54, %v129
  %v138 = vsub.f32 %v55, %v130
  %v139 = vsub.f32 %v56, %v131
  %v140 = vmul.f32 %v132, %v48
  %v141 = vmul.f32 %v133, %v48
  %v142 = vmul.f32 %v134, %v48
  %v143 = vmul.f32 %v135, %v48
  %v144 = vmul.f32 %v136, %v48
  %v145 = vmul.f32 %v137, %v48
  %v146 = vmul.f32 %v138, %v48
  %v147 = vmul.f32 %v139, %v48
  %v148 = vmul.f32 %v140, %v140
  %v149 = vmul.f32 %v141, %v141
  %v150 = vmul.f32 %v142, %v142
  %v151 = vmul.f32 %v143, %v143
  %v152 = vmul.f32 %v144, %v144
  %v153 = vmul.f32 %v145, %v145
  %v154 = vmul.f32 %v146, %v146
  %v155 = vmul.f32 %v147, %v147
  %v156 = vsel %vm67, %v148, 0.0
  %v157 = vrot.slane %v156, 4
  %v158 = vadd.f32 %v156, %v157
  %v159 = vrot.slane %v158, 2
  %v160 = vadd.f32 %v158, %v159
  %v161 = vrot.slane %v160, 1
  %v162 = vadd.f32 %v160, %v161
  %v163 = vsel %vm67, %v149, 0.0
  %v164 = vrot.slane %v163, 4
  %v165 = vadd.f32 %v163, %v164
  %v166 = vrot.slane %v165, 2
  %v167 = vadd.f32 %v165, %v166
  %v168 = vrot.slane %v167, 1
  %v169 = vadd.f32 %v167, %v168
  %v170 = vsel %vm67, %v150, 0.0
  %v171 = vrot.slane %v170, 4
  %v172 = vadd.f32 %v170, %v171
  %v173 = vrot.slane %v172, 2
  %v174 = vadd.f32 %v172, %v173
  %v175 = vrot.slane %v174, 1
  %v176 = vadd.f32 %v174, %v175
  %v177 = vsel %vm67, %v151, 0.0
  %v178 = vrot.slane %v177, 4
  %v179 = vadd.f32 %v177, %v178
  %v180 = vrot.slane %v179, 2
  %v181 = vadd.f32 %v179, %v180
  %v182 = vrot.slane %v181, 1
  %v183 = vadd.f32 %v181, %v182
  %v184 = vsel %vm67, %v152, 0.0
  %v185 = vrot.slane %v184, 4
  %v186 = vadd.f32 %v184, %v185
  %v187 = vrot.slane %v186, 2
  %v188 = vadd.f32 %v186, %v187
  %v189 = vrot.slane %v188, 1
  %v190 = vadd.f32 %v188, %v189
  %v191 = vsel %vm67, %v153, 0.0
  %v192 = vrot.slane %v191, 4
  %v193 = vadd.f32 %v191, %v192
  %v194 = vrot.slane %v193, 2
  %v195 = vadd.f32 %v193, %v194
  %v196 = vrot.slane %v195, 1
  %v197 = vadd.f32 %v195, %v196
  %v198 = vsel %vm67, %v154, 0.0
  %v199 = vrot.slane %v198, 4
  %v200 = vadd.f32 %v198, %v199
  %v201 = vrot.slane %v200, 2
  %v202 = vadd.f32 %v200, %v201
  %v203 = vrot.slane %v202, 1
  %v204 = vadd.f32 %v202, %v203
  %v205 = vsel %vm67, %v155, 0.0
  %v206 = vrot.slane %v205, 4
  %v207 = vadd.f32 %v205, %v206
  %v208 = vrot.slane %v207, 2
  %v209 = vadd.f32 %v207, %v208
  %v210 = vrot.slane %v209, 1
  %v211 = vadd.f32 %v209, %v210
  %v212 = vmul.f32 %v162, 0.25
  %v213 = vmul.f32 %v169, 0.25
  %v214 = vmul.f32 %v176, 0.25
  %v215 = vmul.f32 %v183, 0.25
  %v216 = vmul.f32 %v190, 0.25
  %v217 = vmul.f32 %v197, 0.25
  %v218 = vmul.f32 %v204, 0.25
  %v219 = vmul.f32 %v211, 0.25
  %v220 = vadd.f32 %v212, 1e-05
  %v221 = vadd.f32 %v213, 1e-05
  %v222 = vadd.f32 %v214, 1e-05
  %v223 = vadd.f32 %v215, 1e-05
  %v224 = vadd.f32 %v216, 1e-05
  %v225 = vadd.f32 %v217, 1e-05
  %v226 = vadd.f32 %v218, 1e-05
  %v227 = vadd.f32 %v219, 1e-05
  %v228 = vrsqrt.pop %v220
  %v229 = vrsqrt.pop %v221
  %v230 = vrsqrt.pop %v222
  %v231 = vrsqrt.pop %v223
  %v232 = vrsqrt.pop %v224
  %v233 = vrsqrt.pop %v225
  %v234 = vrsqrt.pop %v226
  %v235 = vrsqrt.pop %v227
  %v236 = vmul.f32 %v140, %v228
  %v237 = vmul.f32 %v141, %v229
  %v238 = vmul.f32 %v142, %v230
  %v239 = vmul.f32 %v143, %v231
  %v240 = vmul.f32 %v144, %v232
  %v241 = vmul.f32 %v145, %v233
  %v242 = vmul.f32 %v146, %v234
  %v243 = vmul.f32 %v147, %v235
  %245 = vset.pattern.permute.xlu0 0
  %246 = vperm.xlu0 %245, %v57
  %v247 = vpop.permute.xlu0 %246
  %v249 = vmul.f32 %v236, %v247
  %v250 = vmul.f32 %v237, %v247
  %v251 = vmul.f32 %v238, %v247
  %v252 = vmul.f32 %v239, %v247
  %v253 = vmul.f32 %v240, %v247
  %v254 = vmul.f32 %v241, %v247
  %v255 = vmul.f32 %v242, %v247
  %v256 = vmul.f32 %v243, %v247
  %258 = vset.pattern.permute.xlu0 0
  %259 = vperm.xlu0 %258, %v58
  %v260 = vpop.permute.xlu0 %259
  %v262 = vadd.f32 %v249, %v260
  %v263 = vadd.f32 %v250, %v260
  %v264 = vadd.f32 %v251, %v260
  %v265 = vadd.f32 %v252, %v260
  %v266 = vadd.f32 %v253, %v260
  %v267 = vadd.f32 %v254, %v260
  %v268 = vadd.f32 %v255, %v260
  %v269 = vadd.f32 %v256, %v260
  %v270 = vld [vmem:[%s3] sm:$0xff]
  %v272 = vsel %vm67, %v262, 0
  %v275 = vsel %vm67, %v263, 0
  %v278 = vsel %vm67, %v264, 0
  %v281 = vsel %vm67, %v265, 0
  %v284 = vsel %vm67, %v266, 0
  %v287 = vsel %vm67, %v267, 0
  %v290 = vsel %vm67, %v268, 0
  %v293 = vsel %vm67, %v269, 0
  %295 = vmatprep.subr.mxu0 0.0
  %296 = vmatpush1.msra.mxu0 %v270
  %297 = vmatprep.subr.mxu0 0.0
  %298 = vmatpush1.msra.mxu0 0.0
  %299 = vmatprep.subr.mxu0 0.0
  %300 = vmatpush1.msra.mxu0 0.0
  %301 = vmatprep.subr.mxu0 0.0
  %302 = vmatpush1.msra.mxu0 0.0
  %303 = vmatprep.subr.mxu0 0.0
  %304 = vmatpush1.msra.mxu0 0.0
  %305 = vmatprep.subr.mxu0 0.0
  %306 = vmatpush1.msra.mxu0 0.0
  %307 = vmatprep.subr.mxu0 0.0
  %308 = vmatpush1.msra.mxu0 0.0
  %309 = vmatprep.subr.mxu0 0.0
  %310 = vmatpush1.msra.mxu0 0.0
  %311 = vmatprep.subr.mxu0 0.0
  %312 = vmatpush1.msra.mxu0 0.0
  %313 = vmatprep.subr.mxu0 0.0
  %314 = vmatpush1.msra.mxu0 0.0
  %315 = vmatprep.subr.mxu0 0.0
  %316 = vmatpush1.msra.mxu0 0.0
  %317 = vmatprep.subr.mxu0 0.0
  %318 = vmatpush1.msra.mxu0 0.0
  %319 = vmatprep.subr.mxu0 0.0
  %320 = vmatpush1.msra.mxu0 0.0
  %321 = vmatprep.subr.mxu0 0.0
  %322 = vmatpush1.msra.mxu0 0.0
  %323 = vmatprep.subr.mxu0 0.0
  %324 = vmatpush1.msra.mxu0 0.0
  %325 = vmatprep.subr.mxu0 0.0
  %326 = vmatpush1.msra.mxu0 0.0
  %327 = vmatprep.subr.mxu0 0.0
  %328 = vmatpush1.msra.mxu0 0.0
  %329 = vmatprep.subr.mxu0 0.0
  %330 = vmatpush1.msra.mxu0 0.0
  %331 = vmatprep.subr.mxu0 0.0
  %332 = vmatpush1.msra.mxu0 0.0
  %333 = vmatprep.subr.mxu0 0.0
  %334 = vmatpush1.msra.mxu0 0.0
  %335 = vmatprep.subr.mxu0 0.0
  %336 = vmatpush1.msra.mxu0 0.0
  %337 = vmatprep.subr.mxu0 0.0
  %338 = vmatpush1.msra.mxu0 0.0
  %339 = vmatprep.subr.mxu0 0.0
  %340 = vmatpush1.msra.mxu0 0.0
  %341 = vmatprep.subr.mxu0 0.0
  %342 = vmatpush1.msra.mxu0 0.0
  %343 = vmatprep.subr.mxu0 0.0
  %344 = vmatpush1.msra.mxu0 0.0
  %345 = vmatprep.subr.mxu0 0.0
  %346 = vmatpush1.msra.mxu0 0.0
  %347 = vmatprep.subr.mxu0 0.0
  %348 = vmatpush1.msra.mxu0 0.0
  %349 = vmatprep.subr.mxu0 0.0
  %350 = vmatpush1.msra.mxu0 0.0
  %351 = vmatprep.subr.mxu0 0.0
  %352 = vmatpush1.msra.mxu0 0.0
  %353 = vmatprep.subr.mxu0 0.0
  %354 = vmatpush1.msra.mxu0 0.0
  %355 = vmatprep.subr.mxu0 0.0
  %356 = vmatpush1.msra.mxu0 0.0
  %357 = vmatprep.subr.mxu0 0.0
  %358 = vmatpush1.msra.mxu0 0.0
  %359 = vmatprep.mubr.f32.mxu0 0.0
  %360 = vmatmul.mubr.f32.gmra.mrb[0].mxu0 %v272
  %v361 = vpop.f32.mrb[0].mxu0
  %v362 = vadd.f32 0.0, %v361
  %v363 = vpop.f32.mrb[0].mxu0
  %364 = vmatprep.mubr.f32.mxu0 0.0
  %365 = vmatmul.mubr.f32.gmra.mrb[0].mxu0 %v275
  %v366 = vpop.f32.mrb[0].mxu0
  %v367 = vadd.f32 0.0, %v366
  %v368 = vpop.f32.mrb[0].mxu0
  %369 = vmatprep.mubr.f32.mxu0 0.0
  %370 = vmatmul.mubr.f32.gmra.mrb[0].mxu0 %v278
  %v371 = vpop.f32.mrb[0].mxu0
  %v372 = vadd.f32 0.0, %v371
  %v373 = vpop.f32.mrb[0].mxu0
  %374 = vmatprep.mubr.f32.mxu0 0.0
  %375 = vmatmul.mubr.f32.gmra.mrb[0].mxu0 %v281
  %v376 = vpop.f32.mrb[0].mxu0
  %v377 = vadd.f32 0.0, %v376
  %v378 = vpop.f32.mrb[0].mxu0
  %379 = vmatprep.mubr.f32.mxu0 0.0
  %380 = vmatmul.mubr.f32.gmra.mrb[0].mxu0 %v284
  %v381 = vpop.f32.mrb[0].mxu0
  %v382 = vadd.f32 0.0, %v381
  %v383 = vpop.f32.mrb[0].mxu0
  %384 = vmatprep.mubr.f32.mxu0 0.0
  %385 = vmatmul.mubr.f32.gmra.mrb[0].mxu0 %v287
  %v386 = vpop.f32.mrb[0].mxu0
  %v387 = vadd.f32 0.0, %v386
  %v388 = vpop.f32.mrb[0].mxu0
  %389 = vmatprep.mubr.f32.mxu0 0.0
  %390 = vmatmul.mubr.f32.gmra.mrb[0].mxu0 %v290
  %v391 = vpop.f32.mrb[0].mxu0
  %v392 = vadd.f32 0.0, %v391
  %v393 = vpop.f32.mrb[0].mxu0
  %394 = vmatprep.mubr.f32.mxu0 0.0
  %395 = vmatmul.mubr.f32.gmra.mrb[0].mxu0 %v293
  %v396 = vpop.f32.mrb[0].mxu0
  %v397 = vadd.f32 0.0, %v396
  %v398 = vpop.f32.mrb[0].mxu0
  %399 = vdwg.mxu0
  %v400 = vld [vmem:[%s4] sm:$0x1]
  %v402 = vlaneseq
  %v403 = vshrl.u32 %v402, 7
  %v404 = vsub.s32 0, %v403
  %v405 = vrot.slane %v400, %v404
  %v407 = vadd.f32 %v362, %v405
  %v408 = vadd.f32 %v367, %v405
  %v409 = vadd.f32 %v372, %v405
  %v410 = vadd.f32 %v377, %v405
  %v411 = vadd.f32 %v382, %v405
  %v412 = vadd.f32 %v387, %v405
  %v413 = vadd.f32 %v392, %v405
  %v414 = vadd.f32 %v397, %v405
  %v415 = vmax.f32 %v407, 0.0
  %v416 = vmax.f32 %v408, 0.0
  %v417 = vmax.f32 %v409, 0.0
  %v418 = vmax.f32 %v410, 0.0
  %v419 = vmax.f32 %v411, 0.0
  %v420 = vmax.f32 %v412, 0.0
  %v421 = vmax.f32 %v413, 0.0
  %v422 = vmax.f32 %v414, 0.0
  %v423 = vadd.f32 %v49, %v415
  %v424 = vadd.f32 %v50, %v416
  %v425 = vadd.f32 %v51, %v417
  %v426 = vadd.f32 %v52, %v418
  %v427 = vadd.f32 %v53, %v419
  %v428 = vadd.f32 %v54, %v420
  %v429 = vadd.f32 %v55, %v421
  %v430 = vadd.f32 %v56, %v422
  %v431 = vld [vmem:[%s5] sm:$0xff]
  %v432 = vld [vmem:[%s6] sm:$0xff]
  %v433 = vmul.f32 %v423, %v48
  %v434 = vmul.f32 %v424, %v48
  %v435 = vmul.f32 %v425, %v48
  %v436 = vmul.f32 %v426, %v48
  %v437 = vmul.f32 %v427, %v48
  %v438 = vmul.f32 %v428, %v48
  %v439 = vmul.f32 %v429, %v48
  %v440 = vmul.f32 %v430, %v48
  %v441 = vsel %vm67, %v433, 0.0
  %v442 = vrot.slane %v441, 4
  %v443 = vadd.f32 %v441, %v442
  %v444 = vrot.slane %v443, 2
  %v445 = vadd.f32 %v443, %v444
  %v446 = vrot.slane %v445, 1
  %v447 = vadd.f32 %v445, %v446
  %v448 = vsel %vm67, %v434, 0.0
  %v449 = vrot.slane %v448, 4
  %v450 = vadd.f32 %v448, %v449
  %v451 = vrot.slane %v450, 2
  %v452 = vadd.f32 %v450, %v451
  %v453 = vrot.slane %v452, 1
  %v454 = vadd.f32 %v452, %v453
  %v455 = vsel %vm67, %v435, 0.0
  %v456 = vrot.slane %v455, 4
  %v457 = vadd.f32 %v455, %v456
  %v458 = vrot.slane %v457, 2
  %v459 = vadd.f32 %v457, %v458
  %v460 = vrot.slane %v459, 1
  %v461 = vadd.f32 %v459, %v460
  %v462 = vsel %vm67, %v436, 0.0
  %v463 = vrot.slane %v462, 4
  %v464 = vadd.f32 %v462, %v463
  %v465 = vrot.slane %v464, 2
  %v466 = vadd.f32 %v464, %v465
  %v467 = vrot.slane %v466, 1
  %v468 = vadd.f32 %v466, %v467
  %v469 = vsel %vm67, %v437, 0.0
  %v470 = vrot.slane %v469, 4
  %v471 = vadd.f32 %v469, %v470
  %v472 = vrot.slane %v471, 2
  %v473 = vadd.f32 %v471, %v472
  %v474 = vrot.slane %v473, 1
  %v475 = vadd.f32 %v473, %v474
  %v476 = vsel %vm67, %v438, 0.0
  %v477 = vrot.slane %v476, 4
  %v478 = vadd.f32 %v476, %v477
  %v479 = vrot.slane %v478, 2
  %v480 = vadd.f32 %v478, %v479
  %v481 = vrot.slane %v480, 1
  %v482 = vadd.f32 %v480, %v481
  %v483 = vsel %vm67, %v439, 0.0
  %v484 = vrot.slane %v483, 4
  %v485 = vadd.f32 %v483, %v484
  %v486 = vrot.slane %v485, 2
  %v487 = vadd.f32 %v485, %v486
  %v488 = vrot.slane %v487, 1
  %v489 = vadd.f32 %v487, %v488
  %v490 = vsel %vm67, %v440, 0.0
  %v491 = vrot.slane %v490, 4
  %v492 = vadd.f32 %v490, %v491
  %v493 = vrot.slane %v492, 2
  %v494 = vadd.f32 %v492, %v493
  %v495 = vrot.slane %v494, 1
  %v496 = vadd.f32 %v494, %v495
  %v497 = vmul.f32 %v447, 0.25
  %v498 = vmul.f32 %v454, 0.25
  %v499 = vmul.f32 %v461, 0.25
  %v500 = vmul.f32 %v468, 0.25
  %v501 = vmul.f32 %v475, 0.25
  %v502 = vmul.f32 %v482, 0.25
  %v503 = vmul.f32 %v489, 0.25
  %v504 = vmul.f32 %v496, 0.25
  %v505 = vsub.f32 %v423, %v497
  %v506 = vsub.f32 %v424, %v498
  %v507 = vsub.f32 %v425, %v499
  %v508 = vsub.f32 %v426, %v500
  %v509 = vsub.f32 %v427, %v501
  %v510 = vsub.f32 %v428, %v502
  %v511 = vsub.f32 %v429, %v503
  %v512 = vsub.f32 %v430, %v504
  %v513 = vmul.f32 %v505, %v48
  %v514 = vmul.f32 %v506, %v48
  %v515 = vmul.f32 %v507, %v48
  %v516 = vmul.f32 %v508, %v48
  %v517 = vmul.f32 %v509, %v48
  %v518 = vmul.f32 %v510, %v48
  %v519 = vmul.f32 %v511, %v48
  %v520 = vmul.f32 %v512, %v48
  %v521 = vmul.f32 %v513, %v513
  %v522 = vmul.f32 %v514, %v514
  %v523 = vmul.f32 %v515, %v515
  %v524 = vmul.f32 %v516, %v516
  %v525 = vmul.f32 %v517, %v517
  %v526 = vmul.f32 %v518, %v518
  %v527 = vmul.f32 %v519, %v519
  %v528 = vmul.f32 %v520, %v520
  %v529 = vsel %vm67, %v521, 0.0
  %v530 = vrot.slane %v529, 4
  %v531 = vadd.f32 %v529, %v530
  %v532 = vrot.slane %v531, 2
  %v533 = vadd.f32 %v531, %v532
  %v534 = vrot.slane %v533, 1
  %v535 = vadd.f32 %v533, %v534
  %v536 = vsel %vm67, %v522, 0.0
  %v537 = vrot.slane %v536, 4
  %v538 = vadd.f32 %v536, %v537
  %v539 = vrot.slane %v538, 2
  %v540 = vadd.f32 %v538, %v539
  %v541 = vrot.slane %v540, 1
  %v542 = vadd.f32 %v540, %v541
  %v543 = vsel %vm67, %v523, 0.0
  %v544 = vrot.slane %v543, 4
  %v545 = vadd.f32 %v543, %v544
  %v546 = vrot.slane %v545, 2
  %v547 = vadd.f32 %v545, %v546
  %v548 = vrot.slane %v547, 1
  %v549 = vadd.f32 %v547, %v548
  %v550 = vsel %vm67, %v524, 0.0
  %v551 = vrot.slane %v550, 4
  %v552 = vadd.f32 %v550, %v551
  %v553 = vrot.slane %v552, 2
  %v554 = vadd.f32 %v552, %v553
  %v555 = vrot.slane %v554, 1
  %v556 = vadd.f32 %v554, %v555
  %v557 = vsel %vm67, %v525, 0.0
  %v558 = vrot.slane %v557, 4
  %v559 = vadd.f32 %v557, %v558
  %v560 = vrot.slane %v559, 2
  %v561 = vadd.f32 %v559, %v560
  %v562 = vrot.slane %v561, 1
  %v563 = vadd.f32 %v561, %v562
  %v564 = vsel %vm67, %v526, 0.0
  %v565 = vrot.slane %v564, 4
  %v566 = vadd.f32 %v564, %v565
  %v567 = vrot.slane %v566, 2
  %v568 = vadd.f32 %v566, %v567
  %v569 = vrot.slane %v568, 1
  %v570 = vadd.f32 %v568, %v569
  %v571 = vsel %vm67, %v527, 0.0
  %v572 = vrot.slane %v571, 4
  %v573 = vadd.f32 %v571, %v572
  %v574 = vrot.slane %v573, 2
  %v575 = vadd.f32 %v573, %v574
  %v576 = vrot.slane %v575, 1
  %v577 = vadd.f32 %v575, %v576
  %v578 = vsel %vm67, %v528, 0.0
  %v579 = vrot.slane %v578, 4
  %v580 = vadd.f32 %v578, %v579
  %v581 = vrot.slane %v580, 2
  %v582 = vadd.f32 %v580, %v581
  %v583 = vrot.slane %v582, 1
  %v584 = vadd.f32 %v582, %v583
  %v585 = vmul.f32 %v535, 0.25
  %v586 = vmul.f32 %v542, 0.25
  %v587 = vmul.f32 %v549, 0.25
  %v588 = vmul.f32 %v556, 0.25
  %v589 = vmul.f32 %v563, 0.25
  %v590 = vmul.f32 %v570, 0.25
  %v591 = vmul.f32 %v577, 0.25
  %v592 = vmul.f32 %v584, 0.25
  %v593 = vadd.f32 %v585, 1e-05
  %v594 = vadd.f32 %v586, 1e-05
  %v595 = vadd.f32 %v587, 1e-05
  %v596 = vadd.f32 %v588, 1e-05
  %v597 = vadd.f32 %v589, 1e-05
  %v598 = vadd.f32 %v590, 1e-05
  %v599 = vadd.f32 %v591, 1e-05
  %v600 = vadd.f32 %v592, 1e-05
  %v601 = vrsqrt.pop %v593
  %v602 = vrsqrt.pop %v594
  %v603 = vrsqrt.pop %v595
  %v604 = vrsqrt.pop %v596
  %v605 = vrsqrt.pop %v597
  %v606 = vrsqrt.pop %v598
  %v607 = vrsqrt.pop %v599
  %v608 = vrsqrt.pop %v600
  %v609 = vmul.f32 %v513, %v601
  %v610 = vmul.f32 %v514, %v602
  %v611 = vmul.f32 %v515, %v603
  %v612 = vmul.f32 %v516, %v604
  %v613 = vmul.f32 %v517, %v605
  %v614 = vmul.f32 %v518, %v606
  %v615 = vmul.f32 %v519, %v607
  %v616 = vmul.f32 %v520, %v608
  %618 = vset.pattern.permute.xlu0 0
  %619 = vperm.xlu0 %618, %v431
  %v620 = vpop.permute.xlu0 %619
  %v622 = vmul.f32 %v609, %v620
  %v623 = vmul.f32 %v610, %v620
  %v624 = vmul.f32 %v611, %v620
  %v625 = vmul.f32 %v612, %v620
  %v626 = vmul.f32 %v613, %v620
  %v627 = vmul.f32 %v614, %v620
  %v628 = vmul.f32 %v615, %v620
  %v629 = vmul.f32 %v616, %v620
  %631 = vset.pattern.permute.xlu0 0
  %632 = vperm.xlu0 %631, %v432
  %v633 = vpop.permute.xlu0 %632
  %v635 = vadd.f32 %v622, %v633
  %v636 = vadd.f32 %v623, %v633
  %v637 = vadd.f32 %v624, %v633
  %v638 = vadd.f32 %v625, %v633
  %v639 = vadd.f32 %v626, %v633
  %v640 = vadd.f32 %v627, %v633
  %v641 = vadd.f32 %v628, %v633
  %v642 = vadd.f32 %v629, %v633
  %v643 = vld [vmem:[%s7] sm:$0xff]
  %v644 = vld [vmem:[%s7 + $0x8] sm:$0xff]
  %v645 = vld [vmem:[%s7 + $0x10] sm:$0xff]
  %v646 = vld [vmem:[%s7 + $0x18] sm:$0xff]
  %v647 = vld [vmem:[%s8] sm:$0xff]
  %v648 = vld [vmem:[%s8 + $0x8] sm:$0xff]
  %v649 = vld [vmem:[%s8 + $0x10] sm:$0xff]
  %v650 = vld [vmem:[%s8 + $0x18] sm:$0xff]
  %652 = vset.pattern.permute.xlu0 0
  %653 = vperm.xlu0 %652, %v647
  %v654 = vpop.permute.xlu0 %653
  %657 = vset.pattern.permute.xlu0 0
  %658 = vperm.xlu0 %657, %v648
  %v659 = vpop.permute.xlu0 %658
  %662 = vset.pattern.permute.xlu0 0
  %663 = vperm.xlu0 %662, %v649
  %v664 = vpop.permute.xlu0 %663
  %667 = vset.pattern.permute.xlu0 0
  %668 = vperm.xlu0 %667, %v650
  %v669 = vpop.permute.xlu0 %668
  %v672 = vsel %vm67, %v643, 0
  %v675 = vsel %vm67, %v644, 0
  %v678 = vsel %vm67, %v645, 0
  %v681 = vsel %vm67, %v646, 0
  %683 = vmatprep.subr.mxu0 0.0
  %684 = vmatpush1.msra.mxu0 %v635
  %685 = vmatprep.subr.mxu0 0.0
  %686 = vmatpush1.msra.mxu0 0.0
  %687 = vmatprep.subr.mxu0 0.0
  %688 = vmatpush1.msra.mxu0 0.0
  %689 = vmatprep.subr.mxu0 0.0
  %690 = vmatpush1.msra.mxu0 0.0
  %691 = vmatprep.subr.mxu0 0.0
  %692 = vmatpush1.msra.mxu0 0.0
  %693 = vmatprep.subr.mxu0 0.0
  %694 = vmatpush1.msra.mxu0 0.0
  %695 = vmatprep.subr.mxu0 0.0
  %696 = vmatpush1.msra.mxu0 0.0
  %697 = vmatprep.subr.mxu0 0.0
  %698 = vmatpush1.msra.mxu0 0.0
  %699 = vmatprep.subr.mxu0 0.0
  %700 = vmatpush1.msra.mxu0 0.0
  %701 = vmatprep.subr.mxu0 0.0
  %702 = vmatpush1.msra.mxu0 0.0
  %703 = vmatprep.subr.mxu0 0.0
  %704 = vmatpush1.msra.mxu0 0.0
  %705 = vmatprep.subr.mxu0 0.0
  %706 = vmatpush1.msra.mxu0 0.0
  %707 = vmatprep.subr.mxu0 0.0
  %708 = vmatpush1.msra.mxu0 0.0
  %709 = vmatprep.subr.mxu0 0.0
  %710 = vmatpush1.msra.mxu0 0.0
  %711 = vmatprep.subr.mxu0 0.0
  %712 = vmatpush1.msra.mxu0 0.0
  %713 = vmatprep.subr.mxu0 0.0
  %714 = vmatpush1.msra.mxu0 0.0
  %715 = vmatprep.subr.mxu0 0.0
  %716 = vmatpush1.msra.mxu0 0.0
  %717 = vmatprep.subr.mxu0 0.0
  %718 = vmatpush1.msra.mxu0 0.0
  %719 = vmatprep.subr.mxu0 0.0
  %720 = vmatpush1.msra.mxu0 0.0
  %721 = vmatprep.subr.mxu0 0.0
  %722 = vmatpush1.msra.mxu0 0.0
  %723 = vmatprep.subr.mxu0 0.0
  %724 = vmatpush1.msra.mxu0 0.0
  %725 = vmatprep.subr.mxu0 0.0
  %726 = vmatpush1.msra.mxu0 0.0
  %727 = vmatprep.subr.mxu0 0.0
  %728 = vmatpush1.msra.mxu0 0.0
  %729 = vmatprep.subr.mxu0 0.0
  %730 = vmatpush1.msra.mxu0 0.0
  %731 = vmatprep.subr.mxu0 0.0
  %732 = vmatpush1.msra.mxu0 0.0
  %733 = vmatprep.subr.mxu0 0.0
  %734 = vmatpush1.msra.mxu0 0.0
  %735 = vmatprep.subr.mxu0 0.0
  %736 = vmatpush1.msra.mxu0 0.0
  %737 = vmatprep.subr.mxu0 0.0
  %738 = vmatpush1.msra.mxu0 0.0
  %739 = vmatprep.subr.mxu0 0.0
  %740 = vmatpush1.msra.mxu0 0.0
  %741 = vmatprep.subr.mxu0 0.0
  %742 = vmatpush1.msra.mxu0 0.0
  %743 = vmatprep.subr.mxu0 0.0
  %744 = vmatpush1.msra.mxu0 0.0
  %745 = vmatprep.subr.mxu0 0.0
  %746 = vmatpush1.msra.mxu0 0.0
  %747 = vmatprep.mubr.f32.mxu0 0.0
  %748 = vmatmul.mubr.f32.gmra.mrb[0].mxu0 %v672
  %v749 = vpop.f32.mrb[0].mxu0
  %v750 = vadd.f32 %v654, %v749
  %v751 = vpop.f32.mrb[0].mxu0
  %752 = vmatprep.mubr.f32.mxu0 0.0
  %753 = vmatmul.mubr.f32.gmra.mrb[0].mxu0 %v675
  %v754 = vpop.f32.mrb[0].mxu0
  %v755 = vadd.f32 %v659, %v754
  %v756 = vpop.f32.mrb[0].mxu0
  %757 = vmatprep.mubr.f32.mxu0 0.0
  %758 = vmatmul.mubr.f32.gmra.mrb[0].mxu0 %v678
  %v759 = vpop.f32.mrb[0].mxu0
  %v760 = vadd.f32 %v664, %v759
  %v761 = vpop.f32.mrb[0].mxu0
  %762 = vmatprep.mubr.f32.mxu0 0.0
  %763 = vmatmul.mubr.f32.gmra.mrb[0].mxu0 %v681
  %v764 = vpop.f32.mrb[0].mxu0
  %v765 = vadd.f32 %v669, %v764
  %v766 = vpop.f32.mrb[0].mxu0
  %767 = vdwg.mxu0
  %768 = vmatprep.subr.mxu0 0.0
  %769 = vmatpush1.msra.mxu0 %v636
  %770 = vmatprep.subr.mxu0 0.0
  %771 = vmatpush1.msra.mxu0 0.0
  %772 = vmatprep.subr.mxu0 0.0
  %773 = vmatpush1.msra.mxu0 0.0
  %774 = vmatprep.subr.mxu0 0.0
  %775 = vmatpush1.msra.mxu0 0.0
  %776 = vmatprep.subr.mxu0 0.0
  %777 = vmatpush1.msra.mxu0 0.0
  %778 = vmatprep.subr.mxu0 0.0
  %779 = vmatpush1.msra.mxu0 0.0
  %780 = vmatprep.subr.mxu0 0.0
  %781 = vmatpush1.msra.mxu0 0.0
  %782 = vmatprep.subr.mxu0 0.0
  %783 = vmatpush1.msra.mxu0 0.0
  %784 = vmatprep.subr.mxu0 0.0
  %785 = vmatpush1.msra.mxu0 0.0
  %786 = vmatprep.subr.mxu0 0.0
  %787 = vmatpush1.msra.mxu0 0.0
  %788 = vmatprep.subr.mxu0 0.0
  %789 = vmatpush1.msra.mxu0 0.0
  %790 = vmatprep.subr.mxu0 0.0
  %791 = vmatpush1.msra.mxu0 0.0
  %792 = vmatprep.subr.mxu0 0.0
  %793 = vmatpush1.msra.mxu0 0.0
  %794 = vmatprep.subr.mxu0 0.0
  %795 = vmatpush1.msra.mxu0 0.0
  %796 = vmatprep.subr.mxu0 0.0
  %797 = vmatpush1.msra.mxu0 0.0
  %798 = vmatprep.subr.mxu0 0.0
  %799 = vmatpush1.msra.mxu0 0.0
  %800 = vmatprep.subr.mxu0 0.0
  %801 = vmatpush1.msra.mxu0 0.0
  %802 = vmatprep.subr.mxu0 0.0
  %803 = vmatpush1.msra.mxu0 0.0
  %804 = vmatprep.subr.mxu0 0.0
  %805 = vmatpush1.msra.mxu0 0.0
  %806 = vmatprep.subr.mxu0 0.0
  %807 = vmatpush1.msra.mxu0 0.0
  %808 = vmatprep.subr.mxu0 0.0
  %809 = vmatpush1.msra.mxu0 0.0
  %810 = vmatprep.subr.mxu0 0.0
  %811 = vmatpush1.msra.mxu0 0.0
  %812 = vmatprep.subr.mxu0 0.0
  %813 = vmatpush1.msra.mxu0 0.0
  %814 = vmatprep.subr.mxu0 0.0
  %815 = vmatpush1.msra.mxu0 0.0
  %816 = vmatprep.subr.mxu0 0.0
  %817 = vmatpush1.msra.mxu0 0.0
  %818 = vmatprep.subr.mxu0 0.0
  %819 = vmatpush1.msra.mxu0 0.0
  %820 = vmatprep.subr.mxu0 0.0
  %821 = vmatpush1.msra.mxu0 0.0
  %822 = vmatprep.subr.mxu0 0.0
  %823 = vmatpush1.msra.mxu0 0.0
  %824 = vmatprep.subr.mxu0 0.0
  %825 = vmatpush1.msra.mxu0 0.0
  %826 = vmatprep.subr.mxu0 0.0
  %827 = vmatpush1.msra.mxu0 0.0
  %828 = vmatprep.subr.mxu0 0.0
  %829 = vmatpush1.msra.mxu0 0.0
  %830 = vmatprep.subr.mxu0 0.0
  %831 = vmatpush1.msra.mxu0 0.0
  %832 = vmatprep.mubr.f32.mxu0 0.0
  %833 = vmatmul.mubr.f32.gmra.mrb[0].mxu0 %v672
  %v834 = vpop.f32.mrb[0].mxu0
  %v835 = vadd.f32 %v654, %v834
  %v836 = vpop.f32.mrb[0].mxu0
  %837 = vmatprep.mubr.f32.mxu0 0.0
  %838 = vmatmul.mubr.f32.gmra.mrb[0].mxu0 %v675
  %v839 = vpop.f32.mrb[0].mxu0
  %v840 = vadd.f32 %v659, %v839
  %v841 = vpop.f32.mrb[0].mxu0
  %842 = vmatprep.mubr.f32.mxu0 0.0
  %843 = vmatmul.mubr.f32.gmra.mrb[0].mxu0 %v678
  %v844 = vpop.f32.mrb[0].mxu0
  %v845 = vadd.f32 %v664, %v844
  %v846 = vpop.f32.mrb[0].mxu0
  %847 = vmatprep.mubr.f32.mxu0 0.0
  %848 = vmatmul.mubr.f32.gmra.mrb[0].mxu0 %v681
  %v849 = vpop.f32.mrb[0].mxu0
  %v850 = vadd.f32 %v669, %v849
  %v851 = vpop.f32.mrb[0].mxu0
  %852 = vdwg.mxu0
  %853 = vmatprep.subr.mxu0 0.0
  %854 = vmatpush1.msra.mxu0 %v637
  %855 = vmatprep.subr.mxu0 0.0
  %856 = vmatpush1.msra.mxu0 0.0
  %857 = vmatprep.subr.mxu0 0.0
  %858 = vmatpush1.msra.mxu0 0.0
  %859 = vmatprep.subr.mxu0 0.0
  %860 = vmatpush1.msra.mxu0 0.0
  %861 = vmatprep.subr.mxu0 0.0
  %862 = vmatpush1.msra.mxu0 0.0
  %863 = vmatprep.subr.mxu0 0.0
  %864 = vmatpush1.msra.mxu0 0.0
  %865 = vmatprep.subr.mxu0 0.0
  %866 = vmatpush1.msra.mxu0 0.0
  %867 = vmatprep.subr.mxu0 0.0
  %868 = vmatpush1.msra.mxu0 0.0
  %869 = vmatprep.subr.mxu0 0.0
  %870 = vmatpush1.msra.mxu0 0.0
  %871 = vmatprep.subr.mxu0 0.0
  %872 = vmatpush1.msra.mxu0 0.0
  %873 = vmatprep.subr.mxu0 0.0
  %874 = vmatpush1.msra.mxu0 0.0
  %875 = vmatprep.subr.mxu0 0.0
  %876 = vmatpush1.msra.mxu0 0.0
  %877 = vmatprep.subr.mxu0 0.0
  %878 = vmatpush1.msra.mxu0 0.0
  %879 = vmatprep.subr.mxu0 0.0
  %880 = vmatpush1.msra.mxu0 0.0
  %881 = vmatprep.subr.mxu0 0.0
  %882 = vmatpush1.msra.mxu0 0.0
  %883 = vmatprep.subr.mxu0 0.0
  %884 = vmatpush1.msra.mxu0 0.0
  %885 = vmatprep.subr.mxu0 0.0
  %886 = vmatpush1.msra.mxu0 0.0
  %887 = vmatprep.subr.mxu0 0.0
  %888 = vmatpush1.msra.mxu0 0.0
  %889 = vmatprep.subr.mxu0 0.0
  %890 = vmatpush1.msra.mxu0 0.0
  %891 = vmatprep.subr.mxu0 0.0
  %892 = vmatpush1.msra.mxu0 0.0
  %893 = vmatprep.subr.mxu0 0.0
  %894 = vmatpush1.msra.mxu0 0.0
  %895 = vmatprep.subr.mxu0 0.0
  %896 = vmatpush1.msra.mxu0 0.0
  %897 = vmatprep.subr.mxu0 0.0
  %898 = vmatpush1.msra.mxu0 0.0
  %899 = vmatprep.subr.mxu0 0.0
  %900 = vmatpush1.msra.mxu0 0.0
  %901 = vmatprep.subr.mxu0 0.0
  %902 = vmatpush1.msra.mxu0 0.0
  %903 = vmatprep.subr.mxu0 0.0
  %904 = vmatpush1.msra.mxu0 0.0
  %905 = vmatprep.subr.mxu0 0.0
  %906 = vmatpush1.msra.mxu0 0.0
  %907 = vmatprep.subr.mxu0 0.0
  %908 = vmatpush1.msra.mxu0 0.0
  %909 = vmatprep.subr.mxu0 0.0
  %910 = vmatpush1.msra.mxu0 0.0
  %911 = vmatprep.subr.mxu0 0.0
  %912 = vmatpush1.msra.mxu0 0.0
  %913 = vmatprep.subr.mxu0 0.0
  %914 = vmatpush1.msra.mxu0 0.0
  %915 = vmatprep.subr.mxu0 0.0
  %916 = vmatpush1.msra.mxu0 0.0
  %917 = vmatprep.mubr.f32.mxu0 0.0
  %918 = vmatmul.mubr.f32.gmra.mrb[0].mxu0 %v672
  %v919 = vpop.f32.mrb[0].mxu0
  %v920 = vadd.f32 %v654, %v919
  %v921 = vpop.f32.mrb[0].mxu0
  %922 = vmatprep.mubr.f32.mxu0 0.0
  %923 = vmatmul.mubr.f32.gmra.mrb[0].mxu0 %v675
  %v924 = vpop.f32.mrb[0].mxu0
  %v925 = vadd.f32 %v659, %v924
  %v926 = vpop.f32.mrb[0].mxu0
  %927 = vmatprep.mubr.f32.mxu0 0.0
  %928 = vmatmul.mubr.f32.gmra.mrb[0].mxu0 %v678
  %v929 = vpop.f32.mrb[0].mxu0
  %v930 = vadd.f32 %v664, %v929
  %v931 = vpop.f32.mrb[0].mxu0
  %932 = vmatprep.mubr.f32.mxu0 0.0
  %933 = vmatmul.mubr.f32.gmra.mrb[0].mxu0 %v681
  %v934 = vpop.f32.mrb[0].mxu0
  %v935 = vadd.f32 %v669, %v934
  %v936 = vpop.f32.mrb[0].mxu0
  %937 = vdwg.mxu0
  %938 = vmatprep.subr.mxu0 0.0
  %939 = vmatpush1.msra.mxu0 %v638
  %940 = vmatprep.subr.mxu0 0.0
  %941 = vmatpush1.msra.mxu0 0.0
  %942 = vmatprep.subr.mxu0 0.0
  %943 = vmatpush1.msra.mxu0 0.0
  %944 = vmatprep.subr.mxu0 0.0
  %945 = vmatpush1.msra.mxu0 0.0
  %946 = vmatprep.subr.mxu0 0.0
  %947 = vmatpush1.msra.mxu0 0.0
  %948 = vmatprep.subr.mxu0 0.0
  %949 = vmatpush1.msra.mxu0 0.0
  %950 = vmatprep.subr.mxu0 0.0
  %951 = vmatpush1.msra.mxu0 0.0
  %952 = vmatprep.subr.mxu0 0.0
  %953 = vmatpush1.msra.mxu0 0.0
  %954 = vmatprep.subr.mxu0 0.0
  %955 = vmatpush1.msra.mxu0 0.0
  %956 = vmatprep.subr.mxu0 0.0
  %957 = vmatpush1.msra.mxu0 0.0
  %958 = vmatprep.subr.mxu0 0.0
  %959 = vmatpush1.msra.mxu0 0.0
  %960 = vmatprep.subr.mxu0 0.0
  %961 = vmatpush1.msra.mxu0 0.0
  %962 = vmatprep.subr.mxu0 0.0
  %963 = vmatpush1.msra.mxu0 0.0
  %964 = vmatprep.subr.mxu0 0.0
  %965 = vmatpush1.msra.mxu0 0.0
  %966 = vmatprep.subr.mxu0 0.0
  %967 = vmatpush1.msra.mxu0 0.0
  %968 = vmatprep.subr.mxu0 0.0
  %969 = vmatpush1.msra.mxu0 0.0
  %970 = vmatprep.subr.mxu0 0.0
  %971 = vmatpush1.msra.mxu0 0.0
  %972 = vmatprep.subr.mxu0 0.0
  %973 = vmatpush1.msra.mxu0 0.0
  %974 = vmatprep.subr.mxu0 0.0
  %975 = vmatpush1.msra.mxu0 0.0
  %976 = vmatprep.subr.mxu0 0.0
  %977 = vmatpush1.msra.mxu0 0.0
  %978 = vmatprep.subr.mxu0 0.0
  %979 = vmatpush1.msra.mxu0 0.0
  %980 = vmatprep.subr.mxu0 0.0
  %981 = vmatpush1.msra.mxu0 0.0
  %982 = vmatprep.subr.mxu0 0.0
  %983 = vmatpush1.msra.mxu0 0.0
  %984 = vmatprep.subr.mxu0 0.0
  %985 = vmatpush1.msra.mxu0 0.0
  %986 = vmatprep.subr.mxu0 0.0
  %987 = vmatpush1.msra.mxu0 0.0
  %988 = vmatprep.subr.mxu0 0.0
  %989 = vmatpush1.msra.mxu0 0.0
  %990 = vmatprep.subr.mxu0 0.0
  %991 = vmatpush1.msra.mxu0 0.0
  %992 = vmatprep.subr.mxu0 0.0
  %993 = vmatpush1.msra.mxu0 0.0
  %994 = vmatprep.subr.mxu0 0.0
  %995 = vmatpush1.msra.mxu0 0.0
  %996 = vmatprep.subr.mxu0 0.0
  %997 = vmatpush1.msra.mxu0 0.0
  %998 = vmatprep.subr.mxu0 0.0
  %999 = vmatpush1.msra.mxu0 0.0
  %1000 = vmatprep.subr.mxu0 0.0
  %1001 = vmatpush1.msra.mxu0 0.0
  %1002 = vmatprep.mubr.f32.mxu0 0.0
  %1003 = vmatmul.mubr.f32.gmra.mrb[0].mxu0 %v672
  %v1004 = vpop.f32.mrb[0].mxu0
  %v1005 = vadd.f32 %v654, %v1004
  %v1006 = vpop.f32.mrb[0].mxu0
  %1007 = vmatprep.mubr.f32.mxu0 0.0
  %1008 = vmatmul.mubr.f32.gmra.mrb[0].mxu0 %v675
  %v1009 = vpop.f32.mrb[0].mxu0
  %v1010 = vadd.f32 %v659, %v1009
  %v1011 = vpop.f32.mrb[0].mxu0
  %1012 = vmatprep.mubr.f32.mxu0 0.0
  %1013 = vmatmul.mubr.f32.gmra.mrb[0].mxu0 %v678
  %v1014 = vpop.f32.mrb[0].mxu0
  %v1015 = vadd.f32 %v664, %v1014
  %v1016 = vpop.f32.mrb[0].mxu0
  %1017 = vmatprep.mubr.f32.mxu0 0.0
  %1018 = vmatmul.mubr.f32.gmra.mrb[0].mxu0 %v681
  %v1019 = vpop.f32.mrb[0].mxu0
  %v1020 = vadd.f32 %v669, %v1019
  %v1021 = vpop.f32.mrb[0].mxu0
  %1022 = vdwg.mxu0
  %1023 = vmatprep.subr.mxu0 0.0
  %1024 = vmatpush1.msra.mxu0 %v639
  %1025 = vmatprep.subr.mxu0 0.0
  %1026 = vmatpush1.msra.mxu0 0.0
  %1027 = vmatprep.subr.mxu0 0.0
  %1028 = vmatpush1.msra.mxu0 0.0
  %1029 = vmatprep.subr.mxu0 0.0
  %1030 = vmatpush1.msra.mxu0 0.0
  %1031 = vmatprep.subr.mxu0 0.0
  %1032 = vmatpush1.msra.mxu0 0.0
  %1033 = vmatprep.subr.mxu0 0.0
  %1034 = vmatpush1.msra.mxu0 0.0
  %1035 = vmatprep.subr.mxu0 0.0
  %1036 = vmatpush1.msra.mxu0 0.0
  %1037 = vmatprep.subr.mxu0 0.0
  %1038 = vmatpush1.msra.mxu0 0.0
  %1039 = vmatprep.subr.mxu0 0.0
  %1040 = vmatpush1.msra.mxu0 0.0
  %1041 = vmatprep.subr.mxu0 0.0
  %1042 = vmatpush1.msra.mxu0 0.0
  %1043 = vmatprep.subr.mxu0 0.0
  %1044 = vmatpush1.msra.mxu0 0.0
  %1045 = vmatprep.subr.mxu0 0.0
  %1046 = vmatpush1.msra.mxu0 0.0
  %1047 = vmatprep.subr.mxu0 0.0
  %1048 = vmatpush1.msra.mxu0 0.0
  %1049 = vmatprep.subr.mxu0 0.0
  %1050 = vmatpush1.msra.mxu0 0.0
  %1051 = vmatprep.subr.mxu0 0.0
  %1052 = vmatpush1.msra.mxu0 0.0
  %1053 = vmatprep.subr.mxu0 0.0
  %1054 = vmatpush1.msra.mxu0 0.0
  %1055 = vmatprep.subr.mxu0 0.0
  %1056 = vmatpush1.msra.mxu0 0.0
  %1057 = vmatprep.subr.mxu0 0.0
  %1058 = vmatpush1.msra.mxu0 0.0
  %1059 = vmatprep.subr.mxu0 0.0
  %1060 = vmatpush1.msra.mxu0 0.0
  %1061 = vmatprep.subr.mxu0 0.0
  %1062 = vmatpush1.msra.mxu0 0.0
  %1063 = vmatprep.subr.mxu0 0.0
  %1064 = vmatpush1.msra.mxu0 0.0
  %1065 = vmatprep.subr.mxu0 0.0
  %1066 = vmatpush1.msra.mxu0 0.0
  %1067 = vmatprep.subr.mxu0 0.0
  %1068 = vmatpush1.msra.mxu0 0.0
  %1069 = vmatprep.subr.mxu0 0.0
  %1070 = vmatpush1.msra.mxu0 0.0
  %1071 = vmatprep.subr.mxu0 0.0
  %1072 = vmatpush1.msra.mxu0 0.0
  %1073 = vmatprep.subr.mxu0 0.0
  %1074 = vmatpush1.msra.mxu0 0.0
  %1075 = vmatprep.subr.mxu0 0.0
  %1076 = vmatpush1.msra.mxu0 0.0
  %1077 = vmatprep.subr.mxu0 0.0
  %1078 = vmatpush1.msra.mxu0 0.0
  %1079 = vmatprep.subr.mxu0 0.0
  %1080 = vmatpush1.msra.mxu0 0.0
  %1081 = vmatprep.subr.mxu0 0.0
  %1082 = vmatpush1.msra.mxu0 0.0
  %1083 = vmatprep.subr.mxu0 0.0
  %1084 = vmatpush1.msra.mxu0 0.0
  %1085 = vmatprep.subr.mxu0 0.0
  %1086 = vmatpush1.msra.mxu0 0.0
  %1087 = vmatprep.mubr.f32.mxu0 0.0
  %1088 = vmatmul.mubr.f32.gmra.mrb[0].mxu0 %v672
  %v1089 = vpop.f32.mrb[0].mxu0
  %v1090 = vadd.f32 %v654, %v1089
  %v1091 = vpop.f32.mrb[0].mxu0
  %1092 = vmatprep.mubr.f32.mxu0 0.0
  %1093 = vmatmul.mubr.f32.gmra.mrb[0].mxu0 %v675
  %v1094 = vpop.f32.mrb[0].mxu0
  %v1095 = vadd.f32 %v659, %v1094
  %v1096 = vpop.f32.mrb[0].mxu0
  %1097 = vmatprep.mubr.f32.mxu0 0.0
  %1098 = vmatmul.mubr.f32.gmra.mrb[0].mxu0 %v678
  %v1099 = vpop.f32.mrb[0].mxu0
  %v1100 = vadd.f32 %v664, %v1099
  %v1101 = vpop.f32.mrb[0].mxu0
  %1102 = vmatprep.mubr.f32.mxu0 0.0
  %1103 = vmatmul.mubr.f32.gmra.mrb[0].mxu0 %v681
  %v1104 = vpop.f32.mrb[0].mxu0
  %v1105 = vadd.f32 %v669, %v1104
  %v1106 = vpop.f32.mrb[0].mxu0
  %1107 = vdwg.mxu0
  %1108 = vmatprep.subr.mxu0 0.0
  %1109 = vmatpush1.msra.mxu0 %v640
  %1110 = vmatprep.subr.mxu0 0.0
  %1111 = vmatpush1.msra.mxu0 0.0
  %1112 = vmatprep.subr.mxu0 0.0
  %1113 = vmatpush1.msra.mxu0 0.0
  %1114 = vmatprep.subr.mxu0 0.0
  %1115 = vmatpush1.msra.mxu0 0.0
  %1116 = vmatprep.subr.mxu0 0.0
  %1117 = vmatpush1.msra.mxu0 0.0
  %1118 = vmatprep.subr.mxu0 0.0
  %1119 = vmatpush1.msra.mxu0 0.0
  %1120 = vmatprep.subr.mxu0 0.0
  %1121 = vmatpush1.msra.mxu0 0.0
  %1122 = vmatprep.subr.mxu0 0.0
  %1123 = vmatpush1.msra.mxu0 0.0
  %1124 = vmatprep.subr.mxu0 0.0
  %1125 = vmatpush1.msra.mxu0 0.0
  %1126 = vmatprep.subr.mxu0 0.0
  %1127 = vmatpush1.msra.mxu0 0.0
  %1128 = vmatprep.subr.mxu0 0.0
  %1129 = vmatpush1.msra.mxu0 0.0
  %1130 = vmatprep.subr.mxu0 0.0
  %1131 = vmatpush1.msra.mxu0 0.0
  %1132 = vmatprep.subr.mxu0 0.0
  %1133 = vmatpush1.msra.mxu0 0.0
  %1134 = vmatprep.subr.mxu0 0.0
  %1135 = vmatpush1.msra.mxu0 0.0
  %1136 = vmatprep.subr.mxu0 0.0
  %1137 = vmatpush1.msra.mxu0 0.0
  %1138 = vmatprep.subr.mxu0 0.0
  %1139 = vmatpush1.msra.mxu0 0.0
  %1140 = vmatprep.subr.mxu0 0.0
  %1141 = vmatpush1.msra.mxu0 0.0
  %1142 = vmatprep.subr.mxu0 0.0
  %1143 = vmatpush1.msra.mxu0 0.0
  %1144 = vmatprep.subr.mxu0 0.0
  %1145 = vmatpush1.msra.mxu0 0.0
  %1146 = vmatprep.subr.mxu0 0.0
  %1147 = vmatpush1.msra.mxu0 0.0
  %1148 = vmatprep.subr.mxu0 0.0
  %1149 = vmatpush1.msra.mxu0 0.0
  %1150 = vmatprep.subr.mxu0 0.0
  %1151 = vmatpush1.msra.mxu0 0.0
  %1152 = vmatprep.subr.mxu0 0.0
  %1153 = vmatpush1.msra.mxu0 0.0
  %1154 = vmatprep.subr.mxu0 0.0
  %1155 = vmatpush1.msra.mxu0 0.0
  %1156 = vmatprep.subr.mxu0 0.0
  %1157 = vmatpush1.msra.mxu0 0.0
  %1158 = vmatprep.subr.mxu0 0.0
  %1159 = vmatpush1.msra.mxu0 0.0
  %1160 = vmatprep.subr.mxu0 0.0
  %1161 = vmatpush1.msra.mxu0 0.0
  %1162 = vmatprep.subr.mxu0 0.0
  %1163 = vmatpush1.msra.mxu0 0.0
  %1164 = vmatprep.subr.mxu0 0.0
  %1165 = vmatpush1.msra.mxu0 0.0
  %1166 = vmatprep.subr.mxu0 0.0
  %1167 = vmatpush1.msra.mxu0 0.0
  %1168 = vmatprep.subr.mxu0 0.0
  %1169 = vmatpush1.msra.mxu0 0.0
  %1170 = vmatprep.subr.mxu0 0.0
  %1171 = vmatpush1.msra.mxu0 0.0
  %1172 = vmatprep.mubr.f32.mxu0 0.0
  %1173 = vmatmul.mubr.f32.gmra.mrb[0].mxu0 %v672
  %v1174 = vpop.f32.mrb[0].mxu0
  %v1175 = vadd.f32 %v654, %v1174
  %v1176 = vpop.f32.mrb[0].mxu0
  %1177 = vmatprep.mubr.f32.mxu0 0.0
  %1178 = vmatmul.mubr.f32.gmra.mrb[0].mxu0 %v675
  %v1179 = vpop.f32.mrb[0].mxu0
  %v1180 = vadd.f32 %v659, %v1179
  %v1181 = vpop.f32.mrb[0].mxu0
  %1182 = vmatprep.mubr.f32.mxu0 0.0
  %1183 = vmatmul.mubr.f32.gmra.mrb[0].mxu0 %v678
  %v1184 = vpop.f32.mrb[0].mxu0
  %v1185 = vadd.f32 %v664, %v1184
  %v1186 = vpop.f32.mrb[0].mxu0
  %1187 = vmatprep.mubr.f32.mxu0 0.0
  %1188 = vmatmul.mubr.f32.gmra.mrb[0].mxu0 %v681
  %v1189 = vpop.f32.mrb[0].mxu0
  %v1190 = vadd.f32 %v669, %v1189
  %v1191 = vpop.f32.mrb[0].mxu0
  %1192 = vdwg.mxu0
  %1193 = vmatprep.subr.mxu0 0.0
  %1194 = vmatpush1.msra.mxu0 %v641
  %1195 = vmatprep.subr.mxu0 0.0
  %1196 = vmatpush1.msra.mxu0 0.0
  %1197 = vmatprep.subr.mxu0 0.0
  %1198 = vmatpush1.msra.mxu0 0.0
  %1199 = vmatprep.subr.mxu0 0.0
  %1200 = vmatpush1.msra.mxu0 0.0
  %1201 = vmatprep.subr.mxu0 0.0
  %1202 = vmatpush1.msra.mxu0 0.0
  %1203 = vmatprep.subr.mxu0 0.0
  %1204 = vmatpush1.msra.mxu0 0.0
  %1205 = vmatprep.subr.mxu0 0.0
  %1206 = vmatpush1.msra.mxu0 0.0
  %1207 = vmatprep.subr.mxu0 0.0
  %1208 = vmatpush1.msra.mxu0 0.0
  %1209 = vmatprep.subr.mxu0 0.0
  %1210 = vmatpush1.msra.mxu0 0.0
  %1211 = vmatprep.subr.mxu0 0.0
  %1212 = vmatpush1.msra.mxu0 0.0
  %1213 = vmatprep.subr.mxu0 0.0
  %1214 = vmatpush1.msra.mxu0 0.0
  %1215 = vmatprep.subr.mxu0 0.0
  %1216 = vmatpush1.msra.mxu0 0.0
  %1217 = vmatprep.subr.mxu0 0.0
  %1218 = vmatpush1.msra.mxu0 0.0
  %1219 = vmatprep.subr.mxu0 0.0
  %1220 = vmatpush1.msra.mxu0 0.0
  %1221 = vmatprep.subr.mxu0 0.0
  %1222 = vmatpush1.msra.mxu0 0.0
  %1223 = vmatprep.subr.mxu0 0.0
  %1224 = vmatpush1.msra.mxu0 0.0
  %1225 = vmatprep.subr.mxu0 0.0
  %1226 = vmatpush1.msra.mxu0 0.0
  %1227 = vmatprep.subr.mxu0 0.0
  %1228 = vmatpush1.msra.mxu0 0.0
  %1229 = vmatprep.subr.mxu0 0.0
  %1230 = vmatpush1.msra.mxu0 0.0
  %1231 = vmatprep.subr.mxu0 0.0
  %1232 = vmatpush1.msra.mxu0 0.0
  %1233 = vmatprep.subr.mxu0 0.0
  %1234 = vmatpush1.msra.mxu0 0.0
  %1235 = vmatprep.subr.mxu0 0.0
  %1236 = vmatpush1.msra.mxu0 0.0
  %1237 = vmatprep.subr.mxu0 0.0
  %1238 = vmatpush1.msra.mxu0 0.0
  %1239 = vmatprep.subr.mxu0 0.0
  %1240 = vmatpush1.msra.mxu0 0.0
  %1241 = vmatprep.subr.mxu0 0.0
  %1242 = vmatpush1.msra.mxu0 0.0
  %1243 = vmatprep.subr.mxu0 0.0
  %1244 = vmatpush1.msra.mxu0 0.0
  %1245 = vmatprep.subr.mxu0 0.0
  %1246 = vmatpush1.msra.mxu0 0.0
  %1247 = vmatprep.subr.mxu0 0.0
  %1248 = vmatpush1.msra.mxu0 0.0
  %1249 = vmatprep.subr.mxu0 0.0
  %1250 = vmatpush1.msra.mxu0 0.0
  %1251 = vmatprep.subr.mxu0 0.0
  %1252 = vmatpush1.msra.mxu0 0.0
  %1253 = vmatprep.subr.mxu0 0.0
  %1254 = vmatpush1.msra.mxu0 0.0
  %1255 = vmatprep.subr.mxu0 0.0
  %1256 = vmatpush1.msra.mxu0 0.0
  %1257 = vmatprep.mubr.f32.mxu0 0.0
  %1258 = vmatmul.mubr.f32.gmra.mrb[0].mxu0 %v672
  %v1259 = vpop.f32.mrb[0].mxu0
  %v1260 = vadd.f32 %v654, %v1259
  %v1261 = vpop.f32.mrb[0].mxu0
  %1262 = vmatprep.mubr.f32.mxu0 0.0
  %1263 = vmatmul.mubr.f32.gmra.mrb[0].mxu0 %v675
  %v1264 = vpop.f32.mrb[0].mxu0
  %v1265 = vadd.f32 %v659, %v1264
  %v1266 = vpop.f32.mrb[0].mxu0
  %1267 = vmatprep.mubr.f32.mxu0 0.0
  %1268 = vmatmul.mubr.f32.gmra.mrb[0].mxu0 %v678
  %v1269 = vpop.f32.mrb[0].mxu0
  %v1270 = vadd.f32 %v664, %v1269
  %v1271 = vpop.f32.mrb[0].mxu0
  %1272 = vmatprep.mubr.f32.mxu0 0.0
  %1273 = vmatmul.mubr.f32.gmra.mrb[0].mxu0 %v681
  %v1274 = vpop.f32.mrb[0].mxu0
  %v1275 = vadd.f32 %v669, %v1274
  %v1276 = vpop.f32.mrb[0].mxu0
  %1277 = vdwg.mxu0
  %1278 = vmatprep.subr.mxu0 0.0
  %1279 = vmatpush1.msra.mxu0 %v642
  %1280 = vmatprep.subr.mxu0 0.0
  %1281 = vmatpush1.msra.mxu0 0.0
  %1282 = vmatprep.subr.mxu0 0.0
  %1283 = vmatpush1.msra.mxu0 0.0
  %1284 = vmatprep.subr.mxu0 0.0
  %1285 = vmatpush1.msra.mxu0 0.0
  %1286 = vmatprep.subr.mxu0 0.0
  %1287 = vmatpush1.msra.mxu0 0.0
  %1288 = vmatprep.subr.mxu0 0.0
  %1289 = vmatpush1.msra.mxu0 0.0
  %1290 = vmatprep.subr.mxu0 0.0
  %1291 = vmatpush1.msra.mxu0 0.0
  %1292 = vmatprep.subr.mxu0 0.0
  %1293 = vmatpush1.msra.mxu0 0.0
  %1294 = vmatprep.subr.mxu0 0.0
  %1295 = vmatpush1.msra.mxu0 0.0
  %1296 = vmatprep.subr.mxu0 0.0
  %1297 = vmatpush1.msra.mxu0 0.0
  %1298 = vmatprep.subr.mxu0 0.0
  %1299 = vmatpush1.msra.mxu0 0.0
  %1300 = vmatprep.subr.mxu0 0.0
  %1301 = vmatpush1.msra.mxu0 0.0
  %1302 = vmatprep.subr.mxu0 0.0
  %1303 = vmatpush1.msra.mxu0 0.0
  %1304 = vmatprep.subr.mxu0 0.0
  %1305 = vmatpush1.msra.mxu0 0.0
  %1306 = vmatprep.subr.mxu0 0.0
  %1307 = vmatpush1.msra.mxu0 0.0
  %1308 = vmatprep.subr.mxu0 0.0
  %1309 = vmatpush1.msra.mxu0 0.0
  %1310 = vmatprep.subr.mxu0 0.0
  %1311 = vmatpush1.msra.mxu0 0.0
  %1312 = vmatprep.subr.mxu0 0.0
  %1313 = vmatpush1.msra.mxu0 0.0
  %1314 = vmatprep.subr.mxu0 0.0
  %1315 = vmatpush1.msra.mxu0 0.0
  %1316 = vmatprep.subr.mxu0 0.0
  %1317 = vmatpush1.msra.mxu0 0.0
  %1318 = vmatprep.subr.mxu0 0.0
  %1319 = vmatpush1.msra.mxu0 0.0
  %1320 = vmatprep.subr.mxu0 0.0
  %1321 = vmatpush1.msra.mxu0 0.0
  %1322 = vmatprep.subr.mxu0 0.0
  %1323 = vmatpush1.msra.mxu0 0.0
  %1324 = vmatprep.subr.mxu0 0.0
  %1325 = vmatpush1.msra.mxu0 0.0
  %1326 = vmatprep.subr.mxu0 0.0
  %1327 = vmatpush1.msra.mxu0 0.0
  %1328 = vmatprep.subr.mxu0 0.0
  %1329 = vmatpush1.msra.mxu0 0.0
  %1330 = vmatprep.subr.mxu0 0.0
  %1331 = vmatpush1.msra.mxu0 0.0
  %1332 = vmatprep.subr.mxu0 0.0
  %1333 = vmatpush1.msra.mxu0 0.0
  %1334 = vmatprep.subr.mxu0 0.0
  %1335 = vmatpush1.msra.mxu0 0.0
  %1336 = vmatprep.subr.mxu0 0.0
  %1337 = vmatpush1.msra.mxu0 0.0
  %1338 = vmatprep.subr.mxu0 0.0
  %1339 = vmatpush1.msra.mxu0 0.0
  %1340 = vmatprep.subr.mxu0 0.0
  %1341 = vmatpush1.msra.mxu0 0.0
  %1342 = vmatprep.mubr.f32.mxu0 0.0
  %1343 = vmatmul.mubr.f32.gmra.mrb[0].mxu0 %v672
  %v1344 = vpop.f32.mrb[0].mxu0
  %v1345 = vadd.f32 %v654, %v1344
  %v1346 = vpop.f32.mrb[0].mxu0
  %1347 = vmatprep.mubr.f32.mxu0 0.0
  %1348 = vmatmul.mubr.f32.gmra.mrb[0].mxu0 %v675
  %v1349 = vpop.f32.mrb[0].mxu0
  %v1350 = vadd.f32 %v659, %v1349
  %v1351 = vpop.f32.mrb[0].mxu0
  %1352 = vmatprep.mubr.f32.mxu0 0.0
  %1353 = vmatmul.mubr.f32.gmra.mrb[0].mxu0 %v678
  %v1354 = vpop.f32.mrb[0].mxu0
  %v1355 = vadd.f32 %v664, %v1354
  %v1356 = vpop.f32.mrb[0].mxu0
  %1357 = vmatprep.mubr.f32.mxu0 0.0
  %1358 = vmatmul.mubr.f32.gmra.mrb[0].mxu0 %v681
  %v1359 = vpop.f32.mrb[0].mxu0
  %v1360 = vadd.f32 %v669, %v1359
  %v1361 = vpop.f32.mrb[0].mxu0
  %1362 = vdwg.mxu0
  %v1363 = vmax.f32 %v750, 0.0
  %v1364 = vmax.f32 %v755, 0.0
  %v1365 = vmax.f32 %v760, 0.0
  %v1366 = vmax.f32 %v765, 0.0
  %v1367 = vmax.f32 %v835, 0.0
  %v1368 = vmax.f32 %v840, 0.0
  %v1369 = vmax.f32 %v845, 0.0
  %v1370 = vmax.f32 %v850, 0.0
  %v1371 = vmax.f32 %v920, 0.0
  %v1372 = vmax.f32 %v925, 0.0
  %v1373 = vmax.f32 %v930, 0.0
  %v1374 = vmax.f32 %v935, 0.0
  %v1375 = vmax.f32 %v1005, 0.0
  %v1376 = vmax.f32 %v1010, 0.0
  %v1377 = vmax.f32 %v1015, 0.0
  %v1378 = vmax.f32 %v1020, 0.0
  %v1379 = vmax.f32 %v1090, 0.0
  %v1380 = vmax.f32 %v1095, 0.0
  %v1381 = vmax.f32 %v1100, 0.0
  %v1382 = vmax.f32 %v1105, 0.0
  %v1383 = vmax.f32 %v1175, 0.0
  %v1384 = vmax.f32 %v1180, 0.0
  %v1385 = vmax.f32 %v1185, 0.0
  %v1386 = vmax.f32 %v1190, 0.0
  %v1387 = vmax.f32 %v1260, 0.0
  %v1388 = vmax.f32 %v1265, 0.0
  %v1389 = vmax.f32 %v1270, 0.0
  %v1390 = vmax.f32 %v1275, 0.0
  %v1391 = vmax.f32 %v1345, 0.0
  %v1392 = vmax.f32 %v1350, 0.0
  %v1393 = vmax.f32 %v1355, 0.0
  %v1394 = vmax.f32 %v1360, 0.0
  %v1395 = vld [vmem:[%s9] sm:$0xff]
  %vm1396 = vcmask 261120
  %v1398 = vsel %vm1396, %v1395, 0
  %1400 = vmatprep.subr.mxu0 0.0
  %1401 = vmatpush1.msra.mxu0 %v1363
  %1402 = vmatprep.subr.mxu0 0.0
  %1403 = vmatpush1.msra.mxu0 %v1364
  %1404 = vmatprep.subr.mxu0 0.0
  %1405 = vmatpush1.msra.mxu0 %v1365
  %1406 = vmatprep.subr.mxu0 0.0
  %1407 = vmatpush1.msra.mxu0 %v1366
  %1408 = vmatprep.subr.mxu0 0.0
  %1409 = vmatpush1.msra.mxu0 0.0
  %1410 = vmatprep.subr.mxu0 0.0
  %1411 = vmatpush1.msra.mxu0 0.0
  %1412 = vmatprep.subr.mxu0 0.0
  %1413 = vmatpush1.msra.mxu0 0.0
  %1414 = vmatprep.subr.mxu0 0.0
  %1415 = vmatpush1.msra.mxu0 0.0
  %1416 = vmatprep.subr.mxu0 0.0
  %1417 = vmatpush1.msra.mxu0 0.0
  %1418 = vmatprep.subr.mxu0 0.0
  %1419 = vmatpush1.msra.mxu0 0.0
  %1420 = vmatprep.subr.mxu0 0.0
  %1421 = vmatpush1.msra.mxu0 0.0
  %1422 = vmatprep.subr.mxu0 0.0
  %1423 = vmatpush1.msra.mxu0 0.0
  %1424 = vmatprep.subr.mxu0 0.0
  %1425 = vmatpush1.msra.mxu0 0.0
  %1426 = vmatprep.subr.mxu0 0.0
  %1427 = vmatpush1.msra.mxu0 0.0
  %1428 = vmatprep.subr.mxu0 0.0
  %1429 = vmatpush1.msra.mxu0 0.0
  %1430 = vmatprep.subr.mxu0 0.0
  %1431 = vmatpush1.msra.mxu0 0.0
  %1432 = vmatprep.subr.mxu0 0.0
  %1433 = vmatpush1.msra.mxu0 0.0
  %1434 = vmatprep.subr.mxu0 0.0
  %1435 = vmatpush1.msra.mxu0 0.0
  %1436 = vmatprep.subr.mxu0 0.0
  %1437 = vmatpush1.msra.mxu0 0.0
  %1438 = vmatprep.subr.mxu0 0.0
  %1439 = vmatpush1.msra.mxu0 0.0
  %1440 = vmatprep.subr.mxu0 0.0
  %1441 = vmatpush1.msra.mxu0 0.0
  %1442 = vmatprep.subr.mxu0 0.0
  %1443 = vmatpush1.msra.mxu0 0.0
  %1444 = vmatprep.subr.mxu0 0.0
  %1445 = vmatpush1.msra.mxu0 0.0
  %1446 = vmatprep.subr.mxu0 0.0
  %1447 = vmatpush1.msra.mxu0 0.0
  %1448 = vmatprep.subr.mxu0 0.0
  %1449 = vmatpush1.msra.mxu0 0.0
  %1450 = vmatprep.subr.mxu0 0.0
  %1451 = vmatpush1.msra.mxu0 0.0
  %1452 = vmatprep.subr.mxu0 0.0
  %1453 = vmatpush1.msra.mxu0 0.0
  %1454 = vmatprep.subr.mxu0 0.0
  %1455 = vmatpush1.msra.mxu0 0.0
  %1456 = vmatprep.subr.mxu0 0.0
  %1457 = vmatpush1.msra.mxu0 0.0
  %1458 = vmatprep.subr.mxu0 0.0
  %1459 = vmatpush1.msra.mxu0 0.0
  %1460 = vmatprep.subr.mxu0 0.0
  %1461 = vmatpush1.msra.mxu0 0.0
  %1462 = vmatprep.subr.mxu0 0.0
  %1463 = vmatpush1.msra.mxu0 0.0
  %1464 = vmatprep.mubr.f32.mxu0 0.0
  %1465 = vmatmul.mubr.f32.gmra.mrb[0].mxu0 %v1398
  %v1466 = vpop.f32.mrb[0].mxu0
  %v1467 = vadd.f32 0.0, %v1466
  %v1468 = vpop.f32.mrb[0].mxu0
  %1469 = vdwg.mxu0
  %1470 = vmatprep.subr.mxu0 0.0
  %1471 = vmatpush1.msra.mxu0 %v1367
  %1472 = vmatprep.subr.mxu0 0.0
  %1473 = vmatpush1.msra.mxu0 %v1368
  %1474 = vmatprep.subr.mxu0 0.0
  %1475 = vmatpush1.msra.mxu0 %v1369
  %1476 = vmatprep.subr.mxu0 0.0
  %1477 = vmatpush1.msra.mxu0 %v1370
  %1478 = vmatprep.subr.mxu0 0.0
  %1479 = vmatpush1.msra.mxu0 0.0
  %1480 = vmatprep.subr.mxu0 0.0
  %1481 = vmatpush1.msra.mxu0 0.0
  %1482 = vmatprep.subr.mxu0 0.0
  %1483 = vmatpush1.msra.mxu0 0.0
  %1484 = vmatprep.subr.mxu0 0.0
  %1485 = vmatpush1.msra.mxu0 0.0
  %1486 = vmatprep.subr.mxu0 0.0
  %1487 = vmatpush1.msra.mxu0 0.0
  %1488 = vmatprep.subr.mxu0 0.0
  %1489 = vmatpush1.msra.mxu0 0.0
  %1490 = vmatprep.subr.mxu0 0.0
  %1491 = vmatpush1.msra.mxu0 0.0
  %1492 = vmatprep.subr.mxu0 0.0
  %1493 = vmatpush1.msra.mxu0 0.0
  %1494 = vmatprep.subr.mxu0 0.0
  %1495 = vmatpush1.msra.mxu0 0.0
  %1496 = vmatprep.subr.mxu0 0.0
  %1497 = vmatpush1.msra.mxu0 0.0
  %1498 = vmatprep.subr.mxu0 0.0
  %1499 = vmatpush1.msra.mxu0 0.0
  %1500 = vmatprep.subr.mxu0 0.0
  %1501 = vmatpush1.msra.mxu0 0.0
  %1502 = vmatprep.subr.mxu0 0.0
  %1503 = vmatpush1.msra.mxu0 0.0
  %1504 = vmatprep.subr.mxu0 0.0
  %1505 = vmatpush1.msra.mxu0 0.0
  %1506 = vmatprep.subr.mxu0 0.0
  %1507 = vmatpush1.msra.mxu0 0.0
  %1508 = vmatprep.subr.mxu0 0.0
  %1509 = vmatpush1.msra.mxu0 0.0
  %1510 = vmatprep.subr.mxu0 0.0
  %1511 = vmatpush1.msra.mxu0 0.0
  %1512 = vmatprep.subr.mxu0 0.0
  %1513 = vmatpush1.msra.mxu0 0.0
  %1514 = vmatprep.subr.mxu0 0.0
  %1515 = vmatpush1.msra.mxu0 0.0
  %1516 = vmatprep.subr.mxu0 0.0
  %1517 = vmatpush1.msra.mxu0 0.0
  %1518 = vmatprep.subr.mxu0 0.0
  %1519 = vmatpush1.msra.mxu0 0.0
  %1520 = vmatprep.subr.mxu0 0.0
  %1521 = vmatpush1.msra.mxu0 0.0
  %1522 = vmatprep.subr.mxu0 0.0
  %1523 = vmatpush1.msra.mxu0 0.0
  %1524 = vmatprep.subr.mxu0 0.0
  %1525 = vmatpush1.msra.mxu0 0.0
  %1526 = vmatprep.subr.mxu0 0.0
  %1527 = vmatpush1.msra.mxu0 0.0
  %1528 = vmatprep.subr.mxu0 0.0
  %1529 = vmatpush1.msra.mxu0 0.0
  %1530 = vmatprep.subr.mxu0 0.0
  %1531 = vmatpush1.msra.mxu0 0.0
  %1532 = vmatprep.subr.mxu0 0.0
  %1533 = vmatpush1.msra.mxu0 0.0
  %1534 = vmatprep.mubr.f32.mxu0 0.0
  %1535 = vmatmul.mubr.f32.gmra.mrb[0].mxu0 %v1398
  %v1536 = vpop.f32.mrb[0].mxu0
  %v1537 = vadd.f32 0.0, %v1536
  %v1538 = vpop.f32.mrb[0].mxu0
  %1539 = vdwg.mxu0
  %1540 = vmatprep.subr.mxu0 0.0
  %1541 = vmatpush1.msra.mxu0 %v1371
  %1542 = vmatprep.subr.mxu0 0.0
  %1543 = vmatpush1.msra.mxu0 %v1372
  %1544 = vmatprep.subr.mxu0 0.0
  %1545 = vmatpush1.msra.mxu0 %v1373
  %1546 = vmatprep.subr.mxu0 0.0
  %1547 = vmatpush1.msra.mxu0 %v1374
  %1548 = vmatprep.subr.mxu0 0.0
  %1549 = vmatpush1.msra.mxu0 0.0
  %1550 = vmatprep.subr.mxu0 0.0
  %1551 = vmatpush1.msra.mxu0 0.0
  %1552 = vmatprep.subr.mxu0 0.0
  %1553 = vmatpush1.msra.mxu0 0.0
  %1554 = vmatprep.subr.mxu0 0.0
  %1555 = vmatpush1.msra.mxu0 0.0
  %1556 = vmatprep.subr.mxu0 0.0
  %1557 = vmatpush1.msra.mxu0 0.0
  %1558 = vmatprep.subr.mxu0 0.0
  %1559 = vmatpush1.msra.mxu0 0.0
  %1560 = vmatprep.subr.mxu0 0.0
  %1561 = vmatpush1.msra.mxu0 0.0
  %1562 = vmatprep.subr.mxu0 0.0
  %1563 = vmatpush1.msra.mxu0 0.0
  %1564 = vmatprep.subr.mxu0 0.0
  %1565 = vmatpush1.msra.mxu0 0.0
  %1566 = vmatprep.subr.mxu0 0.0
  %1567 = vmatpush1.msra.mxu0 0.0
  %1568 = vmatprep.subr.mxu0 0.0
  %1569 = vmatpush1.msra.mxu0 0.0
  %1570 = vmatprep.subr.mxu0 0.0
  %1571 = vmatpush1.msra.mxu0 0.0
  %1572 = vmatprep.subr.mxu0 0.0
  %1573 = vmatpush1.msra.mxu0 0.0
  %1574 = vmatprep.subr.mxu0 0.0
  %1575 = vmatpush1.msra.mxu0 0.0
  %1576 = vmatprep.subr.mxu0 0.0
  %1577 = vmatpush1.msra.mxu0 0.0
  %1578 = vmatprep.subr.mxu0 0.0
  %1579 = vmatpush1.msra.mxu0 0.0
  %1580 = vmatprep.subr.mxu0 0.0
  %1581 = vmatpush1.msra.mxu0 0.0
  %1582 = vmatprep.subr.mxu0 0.0
  %1583 = vmatpush1.msra.mxu0 0.0
  %1584 = vmatprep.subr.mxu0 0.0
  %1585 = vmatpush1.msra.mxu0 0.0
  %1586 = vmatprep.subr.mxu0 0.0
  %1587 = vmatpush1.msra.mxu0 0.0
  %1588 = vmatprep.subr.mxu0 0.0
  %1589 = vmatpush1.msra.mxu0 0.0
  %1590 = vmatprep.subr.mxu0 0.0
  %1591 = vmatpush1.msra.mxu0 0.0
  %1592 = vmatprep.subr.mxu0 0.0
  %1593 = vmatpush1.msra.mxu0 0.0
  %1594 = vmatprep.subr.mxu0 0.0
  %1595 = vmatpush1.msra.mxu0 0.0
  %1596 = vmatprep.subr.mxu0 0.0
  %1597 = vmatpush1.msra.mxu0 0.0
  %1598 = vmatprep.subr.mxu0 0.0
  %1599 = vmatpush1.msra.mxu0 0.0
  %1600 = vmatprep.subr.mxu0 0.0
  %1601 = vmatpush1.msra.mxu0 0.0
  %1602 = vmatprep.subr.mxu0 0.0
  %1603 = vmatpush1.msra.mxu0 0.0
  %1604 = vmatprep.mubr.f32.mxu0 0.0
  %1605 = vmatmul.mubr.f32.gmra.mrb[0].mxu0 %v1398
  %v1606 = vpop.f32.mrb[0].mxu0
  %v1607 = vadd.f32 0.0, %v1606
  %v1608 = vpop.f32.mrb[0].mxu0
  %1609 = vdwg.mxu0
  %1610 = vmatprep.subr.mxu0 0.0
  %1611 = vmatpush1.msra.mxu0 %v1375
  %1612 = vmatprep.subr.mxu0 0.0
  %1613 = vmatpush1.msra.mxu0 %v1376
  %1614 = vmatprep.subr.mxu0 0.0
  %1615 = vmatpush1.msra.mxu0 %v1377
  %1616 = vmatprep.subr.mxu0 0.0
  %1617 = vmatpush1.msra.mxu0 %v1378
  %1618 = vmatprep.subr.mxu0 0.0
  %1619 = vmatpush1.msra.mxu0 0.0
  %1620 = vmatprep.subr.mxu0 0.0
  %1621 = vmatpush1.msra.mxu0 0.0
  %1622 = vmatprep.subr.mxu0 0.0
  %1623 = vmatpush1.msra.mxu0 0.0
  %1624 = vmatprep.subr.mxu0 0.0
  %1625 = vmatpush1.msra.mxu0 0.0
  %1626 = vmatprep.subr.mxu0 0.0
  %1627 = vmatpush1.msra.mxu0 0.0
  %1628 = vmatprep.subr.mxu0 0.0
  %1629 = vmatpush1.msra.mxu0 0.0
  %1630 = vmatprep.subr.mxu0 0.0
  %1631 = vmatpush1.msra.mxu0 0.0
  %1632 = vmatprep.subr.mxu0 0.0
  %1633 = vmatpush1.msra.mxu0 0.0
  %1634 = vmatprep.subr.mxu0 0.0
  %1635 = vmatpush1.msra.mxu0 0.0
  %1636 = vmatprep.subr.mxu0 0.0
  %1637 = vmatpush1.msra.mxu0 0.0
  %1638 = vmatprep.subr.mxu0 0.0
  %1639 = vmatpush1.msra.mxu0 0.0
  %1640 = vmatprep.subr.mxu0 0.0
  %1641 = vmatpush1.msra.mxu0 0.0
  %1642 = vmatprep.subr.mxu0 0.0
  %1643 = vmatpush1.msra.mxu0 0.0
  %1644 = vmatprep.subr.mxu0 0.0
  %1645 = vmatpush1.msra.mxu0 0.0
  %1646 = vmatprep.subr.mxu0 0.0
  %1647 = vmatpush1.msra.mxu0 0.0
  %1648 = vmatprep.subr.mxu0 0.0
  %1649 = vmatpush1.msra.mxu0 0.0
  %1650 = vmatprep.subr.mxu0 0.0
  %1651 = vmatpush1.msra.mxu0 0.0
  %1652 = vmatprep.subr.mxu0 0.0
  %1653 = vmatpush1.msra.mxu0 0.0
  %1654 = vmatprep.subr.mxu0 0.0
  %1655 = vmatpush1.msra.mxu0 0.0
  %1656 = vmatprep.subr.mxu0 0.0
  %1657 = vmatpush1.msra.mxu0 0.0
  %1658 = vmatprep.subr.mxu0 0.0
  %1659 = vmatpush1.msra.mxu0 0.0
  %1660 = vmatprep.subr.mxu0 0.0
  %1661 = vmatpush1.msra.mxu0 0.0
  %1662 = vmatprep.subr.mxu0 0.0
  %1663 = vmatpush1.msra.mxu0 0.0
  %1664 = vmatprep.subr.mxu0 0.0
  %1665 = vmatpush1.msra.mxu0 0.0
  %1666 = vmatprep.subr.mxu0 0.0
  %1667 = vmatpush1.msra.mxu0 0.0
  %1668 = vmatprep.subr.mxu0 0.0
  %1669 = vmatpush1.msra.mxu0 0.0
  %1670 = vmatprep.subr.mxu0 0.0
  %1671 = vmatpush1.msra.mxu0 0.0
  %1672 = vmatprep.subr.mxu0 0.0
  %1673 = vmatpush1.msra.mxu0 0.0
  %1674 = vmatprep.mubr.f32.mxu0 0.0
  %1675 = vmatmul.mubr.f32.gmra.mrb[0].mxu0 %v1398
  %v1676 = vpop.f32.mrb[0].mxu0
  %v1677 = vadd.f32 0.0, %v1676
  %v1678 = vpop.f32.mrb[0].mxu0
  %1679 = vdwg.mxu0
  %1680 = vmatprep.subr.mxu0 0.0
  %1681 = vmatpush1.msra.mxu0 %v1379
  %1682 = vmatprep.subr.mxu0 0.0
  %1683 = vmatpush1.msra.mxu0 %v1380
  %1684 = vmatprep.subr.mxu0 0.0
  %1685 = vmatpush1.msra.mxu0 %v1381
  %1686 = vmatprep.subr.mxu0 0.0
  %1687 = vmatpush1.msra.mxu0 %v1382
  %1688 = vmatprep.subr.mxu0 0.0
  %1689 = vmatpush1.msra.mxu0 0.0
  %1690 = vmatprep.subr.mxu0 0.0
  %1691 = vmatpush1.msra.mxu0 0.0
  %1692 = vmatprep.subr.mxu0 0.0
  %1693 = vmatpush1.msra.mxu0 0.0
  %1694 = vmatprep.subr.mxu0 0.0
  %1695 = vmatpush1.msra.mxu0 0.0
  %1696 = vmatprep.subr.mxu0 0.0
  %1697 = vmatpush1.msra.mxu0 0.0
  %1698 = vmatprep.subr.mxu0 0.0
  %1699 = vmatpush1.msra.mxu0 0.0
  %1700 = vmatprep.subr.mxu0 0.0
  %1701 = vmatpush1.msra.mxu0 0.0
  %1702 = vmatprep.subr.mxu0 0.0
  %1703 = vmatpush1.msra.mxu0 0.0
  %1704 = vmatprep.subr.mxu0 0.0
  %1705 = vmatpush1.msra.mxu0 0.0
  %1706 = vmatprep.subr.mxu0 0.0
  %1707 = vmatpush1.msra.mxu0 0.0
  %1708 = vmatprep.subr.mxu0 0.0
  %1709 = vmatpush1.msra.mxu0 0.0
  %1710 = vmatprep.subr.mxu0 0.0
  %1711 = vmatpush1.msra.mxu0 0.0
  %1712 = vmatprep.subr.mxu0 0.0
  %1713 = vmatpush1.msra.mxu0 0.0
  %1714 = vmatprep.subr.mxu0 0.0
  %1715 = vmatpush1.msra.mxu0 0.0
  %1716 = vmatprep.subr.mxu0 0.0
  %1717 = vmatpush1.msra.mxu0 0.0
  %1718 = vmatprep.subr.mxu0 0.0
  %1719 = vmatpush1.msra.mxu0 0.0
  %1720 = vmatprep.subr.mxu0 0.0
  %1721 = vmatpush1.msra.mxu0 0.0
  %1722 = vmatprep.subr.mxu0 0.0
  %1723 = vmatpush1.msra.mxu0 0.0
  %1724 = vmatprep.subr.mxu0 0.0
  %1725 = vmatpush1.msra.mxu0 0.0
  %1726 = vmatprep.subr.mxu0 0.0
  %1727 = vmatpush1.msra.mxu0 0.0
  %1728 = vmatprep.subr.mxu0 0.0
  %1729 = vmatpush1.msra.mxu0 0.0
  %1730 = vmatprep.subr.mxu0 0.0
  %1731 = vmatpush1.msra.mxu0 0.0
  %1732 = vmatprep.subr.mxu0 0.0
  %1733 = vmatpush1.msra.mxu0 0.0
  %1734 = vmatprep.subr.mxu0 0.0
  %1735 = vmatpush1.msra.mxu0 0.0
  %1736 = vmatprep.subr.mxu0 0.0
  %1737 = vmatpush1.msra.mxu0 0.0
  %1738 = vmatprep.subr.mxu0 0.0
  %1739 = vmatpush1.msra.mxu0 0.0
  %1740 = vmatprep.subr.mxu0 0.0
  %1741 = vmatpush1.msra.mxu0 0.0
  %1742 = vmatprep.subr.mxu0 0.0
  %1743 = vmatpush1.msra.mxu0 0.0
  %1744 = vmatprep.mubr.f32.mxu0 0.0
  %1745 = vmatmul.mubr.f32.gmra.mrb[0].mxu0 %v1398
  %v1746 = vpop.f32.mrb[0].mxu0
  %v1747 = vadd.f32 0.0, %v1746
  %v1748 = vpop.f32.mrb[0].mxu0
  %1749 = vdwg.mxu0
  %1750 = vmatprep.subr.mxu0 0.0
  %1751 = vmatpush1.msra.mxu0 %v1383
  %1752 = vmatprep.subr.mxu0 0.0
  %1753 = vmatpush1.msra.mxu0 %v1384
  %1754 = vmatprep.subr.mxu0 0.0
  %1755 = vmatpush1.msra.mxu0 %v1385
  %1756 = vmatprep.subr.mxu0 0.0
  %1757 = vmatpush1.msra.mxu0 %v1386
  %1758 = vmatprep.subr.mxu0 0.0
  %1759 = vmatpush1.msra.mxu0 0.0
  %1760 = vmatprep.subr.mxu0 0.0
  %1761 = vmatpush1.msra.mxu0 0.0
  %1762 = vmatprep.subr.mxu0 0.0
  %1763 = vmatpush1.msra.mxu0 0.0
  %1764 = vmatprep.subr.mxu0 0.0
  %1765 = vmatpush1.msra.mxu0 0.0
  %1766 = vmatprep.subr.mxu0 0.0
  %1767 = vmatpush1.msra.mxu0 0.0
  %1768 = vmatprep.subr.mxu0 0.0
  %1769 = vmatpush1.msra.mxu0 0.0
  %1770 = vmatprep.subr.mxu0 0.0
  %1771 = vmatpush1.msra.mxu0 0.0
  %1772 = vmatprep.subr.mxu0 0.0
  %1773 = vmatpush1.msra.mxu0 0.0
  %1774 = vmatprep.subr.mxu0 0.0
  %1775 = vmatpush1.msra.mxu0 0.0
  %1776 = vmatprep.subr.mxu0 0.0
  %1777 = vmatpush1.msra.mxu0 0.0
  %1778 = vmatprep.subr.mxu0 0.0
  %1779 = vmatpush1.msra.mxu0 0.0
  %1780 = vmatprep.subr.mxu0 0.0
  %1781 = vmatpush1.msra.mxu0 0.0
  %1782 = vmatprep.subr.mxu0 0.0
  %1783 = vmatpush1.msra.mxu0 0.0
  %1784 = vmatprep.subr.mxu0 0.0
  %1785 = vmatpush1.msra.mxu0 0.0
  %1786 = vmatprep.subr.mxu0 0.0
  %1787 = vmatpush1.msra.mxu0 0.0
  %1788 = vmatprep.subr.mxu0 0.0
  %1789 = vmatpush1.msra.mxu0 0.0
  %1790 = vmatprep.subr.mxu0 0.0
  %1791 = vmatpush1.msra.mxu0 0.0
  %1792 = vmatprep.subr.mxu0 0.0
  %1793 = vmatpush1.msra.mxu0 0.0
  %1794 = vmatprep.subr.mxu0 0.0
  %1795 = vmatpush1.msra.mxu0 0.0
  %1796 = vmatprep.subr.mxu0 0.0
  %1797 = vmatpush1.msra.mxu0 0.0
  %1798 = vmatprep.subr.mxu0 0.0
  %1799 = vmatpush1.msra.mxu0 0.0
  %1800 = vmatprep.subr.mxu0 0.0
  %1801 = vmatpush1.msra.mxu0 0.0
  %1802 = vmatprep.subr.mxu0 0.0
  %1803 = vmatpush1.msra.mxu0 0.0
  %1804 = vmatprep.subr.mxu0 0.0
  %1805 = vmatpush1.msra.mxu0 0.0
  %1806 = vmatprep.subr.mxu0 0.0
  %1807 = vmatpush1.msra.mxu0 0.0
  %1808 = vmatprep.subr.mxu0 0.0
  %1809 = vmatpush1.msra.mxu0 0.0
  %1810 = vmatprep.subr.mxu0 0.0
  %1811 = vmatpush1.msra.mxu0 0.0
  %1812 = vmatprep.subr.mxu0 0.0
  %1813 = vmatpush1.msra.mxu0 0.0
  %1814 = vmatprep.mubr.f32.mxu0 0.0
  %1815 = vmatmul.mubr.f32.gmra.mrb[0].mxu0 %v1398
  %v1816 = vpop.f32.mrb[0].mxu0
  %v1817 = vadd.f32 0.0, %v1816
  %v1818 = vpop.f32.mrb[0].mxu0
  %1819 = vdwg.mxu0
  %1820 = vmatprep.subr.mxu0 0.0
  %1821 = vmatpush1.msra.mxu0 %v1387
  %1822 = vmatprep.subr.mxu0 0.0
  %1823 = vmatpush1.msra.mxu0 %v1388
  %1824 = vmatprep.subr.mxu0 0.0
  %1825 = vmatpush1.msra.mxu0 %v1389
  %1826 = vmatprep.subr.mxu0 0.0
  %1827 = vmatpush1.msra.mxu0 %v1390
  %1828 = vmatprep.subr.mxu0 0.0
  %1829 = vmatpush1.msra.mxu0 0.0
  %1830 = vmatprep.subr.mxu0 0.0
  %1831 = vmatpush1.msra.mxu0 0.0
  %1832 = vmatprep.subr.mxu0 0.0
  %1833 = vmatpush1.msra.mxu0 0.0
  %1834 = vmatprep.subr.mxu0 0.0
  %1835 = vmatpush1.msra.mxu0 0.0
  %1836 = vmatprep.subr.mxu0 0.0
  %1837 = vmatpush1.msra.mxu0 0.0
  %1838 = vmatprep.subr.mxu0 0.0
  %1839 = vmatpush1.msra.mxu0 0.0
  %1840 = vmatprep.subr.mxu0 0.0
  %1841 = vmatpush1.msra.mxu0 0.0
  %1842 = vmatprep.subr.mxu0 0.0
  %1843 = vmatpush1.msra.mxu0 0.0
  %1844 = vmatprep.subr.mxu0 0.0
  %1845 = vmatpush1.msra.mxu0 0.0
  %1846 = vmatprep.subr.mxu0 0.0
  %1847 = vmatpush1.msra.mxu0 0.0
  %1848 = vmatprep.subr.mxu0 0.0
  %1849 = vmatpush1.msra.mxu0 0.0
  %1850 = vmatprep.subr.mxu0 0.0
  %1851 = vmatpush1.msra.mxu0 0.0
  %1852 = vmatprep.subr.mxu0 0.0
  %1853 = vmatpush1.msra.mxu0 0.0
  %1854 = vmatprep.subr.mxu0 0.0
  %1855 = vmatpush1.msra.mxu0 0.0
  %1856 = vmatprep.subr.mxu0 0.0
  %1857 = vmatpush1.msra.mxu0 0.0
  %1858 = vmatprep.subr.mxu0 0.0
  %1859 = vmatpush1.msra.mxu0 0.0
  %1860 = vmatprep.subr.mxu0 0.0
  %1861 = vmatpush1.msra.mxu0 0.0
  %1862 = vmatprep.subr.mxu0 0.0
  %1863 = vmatpush1.msra.mxu0 0.0
  %1864 = vmatprep.subr.mxu0 0.0
  %1865 = vmatpush1.msra.mxu0 0.0
  %1866 = vmatprep.subr.mxu0 0.0
  %1867 = vmatpush1.msra.mxu0 0.0
  %1868 = vmatprep.subr.mxu0 0.0
  %1869 = vmatpush1.msra.mxu0 0.0
  %1870 = vmatprep.subr.mxu0 0.0
  %1871 = vmatpush1.msra.mxu0 0.0
  %1872 = vmatprep.subr.mxu0 0.0
  %1873 = vmatpush1.msra.mxu0 0.0
  %1874 = vmatprep.subr.mxu0 0.0
  %1875 = vmatpush1.msra.mxu0 0.0
  %1876 = vmatprep.subr.mxu0 0.0
  %1877 = vmatpush1.msra.mxu0 0.0
  %1878 = vmatprep.subr.mxu0 0.0
  %1879 = vmatpush1.msra.mxu0 0.0
  %1880 = vmatprep.subr.mxu0 0.0
  %1881 = vmatpush1.msra.mxu0 0.0
  %1882 = vmatprep.subr.mxu0 0.0
  %1883 = vmatpush1.msra.mxu0 0.0
  %1884 = vmatprep.mubr.f32.mxu0 0.0
  %1885 = vmatmul.mubr.f32.gmra.mrb[0].mxu0 %v1398
  %v1886 = vpop.f32.mrb[0].mxu0
  %v1887 = vadd.f32 0.0, %v1886
  %v1888 = vpop.f32.mrb[0].mxu0
  %1889 = vdwg.mxu0
  %1890 = vmatprep.subr.mxu0 0.0
  %1891 = vmatpush1.msra.mxu0 %v1391
  %1892 = vmatprep.subr.mxu0 0.0
  %1893 = vmatpush1.msra.mxu0 %v1392
  %1894 = vmatprep.subr.mxu0 0.0
  %1895 = vmatpush1.msra.mxu0 %v1393
  %1896 = vmatprep.subr.mxu0 0.0
  %1897 = vmatpush1.msra.mxu0 %v1394
  %1898 = vmatprep.subr.mxu0 0.0
  %1899 = vmatpush1.msra.mxu0 0.0
  %1900 = vmatprep.subr.mxu0 0.0
  %1901 = vmatpush1.msra.mxu0 0.0
  %1902 = vmatprep.subr.mxu0 0.0
  %1903 = vmatpush1.msra.mxu0 0.0
  %1904 = vmatprep.subr.mxu0 0.0
  %1905 = vmatpush1.msra.mxu0 0.0
  %1906 = vmatprep.subr.mxu0 0.0
  %1907 = vmatpush1.msra.mxu0 0.0
  %1908 = vmatprep.subr.mxu0 0.0
  %1909 = vmatpush1.msra.mxu0 0.0
  %1910 = vmatprep.subr.mxu0 0.0
  %1911 = vmatpush1.msra.mxu0 0.0
  %1912 = vmatprep.subr.mxu0 0.0
  %1913 = vmatpush1.msra.mxu0 0.0
  %1914 = vmatprep.subr.mxu0 0.0
  %1915 = vmatpush1.msra.mxu0 0.0
  %1916 = vmatprep.subr.mxu0 0.0
  %1917 = vmatpush1.msra.mxu0 0.0
  %1918 = vmatprep.subr.mxu0 0.0
  %1919 = vmatpush1.msra.mxu0 0.0
  %1920 = vmatprep.subr.mxu0 0.0
  %1921 = vmatpush1.msra.mxu0 0.0
  %1922 = vmatprep.subr.mxu0 0.0
  %1923 = vmatpush1.msra.mxu0 0.0
  %1924 = vmatprep.subr.mxu0 0.0
  %1925 = vmatpush1.msra.mxu0 0.0
  %1926 = vmatprep.subr.mxu0 0.0
  %1927 = vmatpush1.msra.mxu0 0.0
  %1928 = vmatprep.subr.mxu0 0.0
  %1929 = vmatpush1.msra.mxu0 0.0
  %1930 = vmatprep.subr.mxu0 0.0
  %1931 = vmatpush1.msra.mxu0 0.0
  %1932 = vmatprep.subr.mxu0 0.0
  %1933 = vmatpush1.msra.mxu0 0.0
  %1934 = vmatprep.subr.mxu0 0.0
  %1935 = vmatpush1.msra.mxu0 0.0
  %1936 = vmatprep.subr.mxu0 0.0
  %1937 = vmatpush1.msra.mxu0 0.0
  %1938 = vmatprep.subr.mxu0 0.0
  %1939 = vmatpush1.msra.mxu0 0.0
  %1940 = vmatprep.subr.mxu0 0.0
  %1941 = vmatpush1.msra.mxu0 0.0
  %1942 = vmatprep.subr.mxu0 0.0
  %1943 = vmatpush1.msra.mxu0 0.0
  %1944 = vmatprep.subr.mxu0 0.0
  %1945 = vmatpush1.msra.mxu0 0.0
  %1946 = vmatprep.subr.mxu0 0.0
  %1947 = vmatpush1.msra.mxu0 0.0
  %1948 = vmatprep.subr.mxu0 0.0
  %1949 = vmatpush1.msra.mxu0 0.0
  %1950 = vmatprep.subr.mxu0 0.0
  %1951 = vmatpush1.msra.mxu0 0.0
  %1952 = vmatprep.subr.mxu0 0.0
  %1953 = vmatpush1.msra.mxu0 0.0
  %1954 = vmatprep.mubr.f32.mxu0 0.0
  %1955 = vmatmul.mubr.f32.gmra.mrb[0].mxu0 %v1398
  %v1956 = vpop.f32.mrb[0].mxu0
  %v1957 = vadd.f32 0.0, %v1956
  %v1958 = vpop.f32.mrb[0].mxu0
  %1959 = vdwg.mxu0
  %v1960 = vadd.f32 %v423, %v1467
  %v1961 = vadd.f32 %v424, %v1537
  %v1962 = vadd.f32 %v425, %v1607
  %v1963 = vadd.f32 %v426, %v1677
  %v1964 = vadd.f32 %v427, %v1747
  %v1965 = vadd.f32 %v428, %v1817
  %v1966 = vadd.f32 %v429, %v1887
  %v1967 = vadd.f32 %v430, %v1957
  %v1968 = vld [vmem:[%s10] sm:$0xff]
  %1970 = vset.pattern.permute.xlu0 0
  %1971 = vperm.xlu0 %1970, %v1968
  %v1972 = vpop.permute.xlu0 %1971
  %v1974 = vadd.f32 %v1960, %v1972
  %v1975 = vadd.f32 %v1961, %v1972
  %v1976 = vadd.f32 %v1962, %v1972
  %v1977 = vadd.f32 %v1963, %v1972
  %v1978 = vadd.f32 %v1964, %v1972
  %v1979 = vadd.f32 %v1965, %v1972
  %v1980 = vadd.f32 %v1966, %v1972
  %v1981 = vadd.f32 %v1967, %v1972
  %s1982 = scalar_lea.vmem %s1, 8
  %v1983 = vld [vmem:[%s1982] sm:$0xff]
  %s1984 = scalar_lea.vmem %s2, 8
  %v1985 = vld [vmem:[%s1984] sm:$0xff]
  %v1986 = vmul.f32 %v1974, %v48
  %v1987 = vmul.f32 %v1975, %v48
  %v1988 = vmul.f32 %v1976, %v48
  %v1989 = vmul.f32 %v1977, %v48
  %v1990 = vmul.f32 %v1978, %v48
  %v1991 = vmul.f32 %v1979, %v48
  %v1992 = vmul.f32 %v1980, %v48
  %v1993 = vmul.f32 %v1981, %v48
  %v1994 = vsel %vm67, %v1986, 0.0
  %v1995 = vrot.slane %v1994, 4
  %v1996 = vadd.f32 %v1994, %v1995
  %v1997 = vrot.slane %v1996, 2
  %v1998 = vadd.f32 %v1996, %v1997
  %v1999 = vrot.slane %v1998, 1
  %v2000 = vadd.f32 %v1998, %v1999
  %v2001 = vsel %vm67, %v1987, 0.0
  %v2002 = vrot.slane %v2001, 4
  %v2003 = vadd.f32 %v2001, %v2002
  %v2004 = vrot.slane %v2003, 2
  %v2005 = vadd.f32 %v2003, %v2004
  %v2006 = vrot.slane %v2005, 1
  %v2007 = vadd.f32 %v2005, %v2006
  %v2008 = vsel %vm67, %v1988, 0.0
  %v2009 = vrot.slane %v2008, 4
  %v2010 = vadd.f32 %v2008, %v2009
  %v2011 = vrot.slane %v2010, 2
  %v2012 = vadd.f32 %v2010, %v2011
  %v2013 = vrot.slane %v2012, 1
  %v2014 = vadd.f32 %v2012, %v2013
  %v2015 = vsel %vm67, %v1989, 0.0
  %v2016 = vrot.slane %v2015, 4
  %v2017 = vadd.f32 %v2015, %v2016
  %v2018 = vrot.slane %v2017, 2
  %v2019 = vadd.f32 %v2017, %v2018
  %v2020 = vrot.slane %v2019, 1
  %v2021 = vadd.f32 %v2019, %v2020
  %v2022 = vsel %vm67, %v1990, 0.0
  %v2023 = vrot.slane %v2022, 4
  %v2024 = vadd.f32 %v2022, %v2023
  %v2025 = vrot.slane %v2024, 2
  %v2026 = vadd.f32 %v2024, %v2025
  %v2027 = vrot.slane %v2026, 1
  %v2028 = vadd.f32 %v2026, %v2027
  %v2029 = vsel %vm67, %v1991, 0.0
  %v2030 = vrot.slane %v2029, 4
  %v2031 = vadd.f32 %v2029, %v2030
  %v2032 = vrot.slane %v2031, 2
  %v2033 = vadd.f32 %v2031, %v2032
  %v2034 = vrot.slane %v2033, 1
  %v2035 = vadd.f32 %v2033, %v2034
  %v2036 = vsel %vm67, %v1992, 0.0
  %v2037 = vrot.slane %v2036, 4
  %v2038 = vadd.f32 %v2036, %v2037
  %v2039 = vrot.slane %v2038, 2
  %v2040 = vadd.f32 %v2038, %v2039
  %v2041 = vrot.slane %v2040, 1
  %v2042 = vadd.f32 %v2040, %v2041
  %v2043 = vsel %vm67, %v1993, 0.0
  %v2044 = vrot.slane %v2043, 4
  %v2045 = vadd.f32 %v2043, %v2044
  %v2046 = vrot.slane %v2045, 2
  %v2047 = vadd.f32 %v2045, %v2046
  %v2048 = vrot.slane %v2047, 1
  %v2049 = vadd.f32 %v2047, %v2048
  %v2050 = vmul.f32 %v2000, 0.25
  %v2051 = vmul.f32 %v2007, 0.25
  %v2052 = vmul.f32 %v2014, 0.25
  %v2053 = vmul.f32 %v2021, 0.25
  %v2054 = vmul.f32 %v2028, 0.25
  %v2055 = vmul.f32 %v2035, 0.25
  %v2056 = vmul.f32 %v2042, 0.25
  %v2057 = vmul.f32 %v2049, 0.25
  %v2058 = vsub.f32 %v1974, %v2050
  %v2059 = vsub.f32 %v1975, %v2051
  %v2060 = vsub.f32 %v1976, %v2052
  %v2061 = vsub.f32 %v1977, %v2053
  %v2062 = vsub.f32 %v1978, %v2054
  %v2063 = vsub.f32 %v1979, %v2055
  %v2064 = vsub.f32 %v1980, %v2056
  %v2065 = vsub.f32 %v1981, %v2057
  %v2066 = vmul.f32 %v2058, %v48
  %v2067 = vmul.f32 %v2059, %v48
  %v2068 = vmul.f32 %v2060, %v48
  %v2069 = vmul.f32 %v2061, %v48
  %v2070 = vmul.f32 %v2062, %v48
  %v2071 = vmul.f32 %v2063, %v48
  %v2072 = vmul.f32 %v2064, %v48
  %v2073 = vmul.f32 %v2065, %v48
  %v2074 = vmul.f32 %v2066, %v2066
  %v2075 = vmul.f32 %v2067, %v2067
  %v2076 = vmul.f32 %v2068, %v2068
  %v2077 = vmul.f32 %v2069, %v2069
  %v2078 = vmul.f32 %v2070, %v2070
  %v2079 = vmul.f32 %v2071, %v2071
  %v2080 = vmul.f32 %v2072, %v2072
  %v2081 = vmul.f32 %v2073, %v2073
  %v2082 = vsel %vm67, %v2074, 0.0
  %v2083 = vrot.slane %v2082, 4
  %v2084 = vadd.f32 %v2082, %v2083
  %v2085 = vrot.slane %v2084, 2
  %v2086 = vadd.f32 %v2084, %v2085
  %v2087 = vrot.slane %v2086, 1
  %v2088 = vadd.f32 %v2086, %v2087
  %v2089 = vsel %vm67, %v2075, 0.0
  %v2090 = vrot.slane %v2089, 4
  %v2091 = vadd.f32 %v2089, %v2090
  %v2092 = vrot.slane %v2091, 2
  %v2093 = vadd.f32 %v2091, %v2092
  %v2094 = vrot.slane %v2093, 1
  %v2095 = vadd.f32 %v2093, %v2094
  %v2096 = vsel %vm67, %v2076, 0.0
  %v2097 = vrot.slane %v2096, 4
  %v2098 = vadd.f32 %v2096, %v2097
  %v2099 = vrot.slane %v2098, 2
  %v2100 = vadd.f32 %v2098, %v2099
  %v2101 = vrot.slane %v2100, 1
  %v2102 = vadd.f32 %v2100, %v2101
  %v2103 = vsel %vm67, %v2077, 0.0
  %v2104 = vrot.slane %v2103, 4
  %v2105 = vadd.f32 %v2103, %v2104
  %v2106 = vrot.slane %v2105, 2
  %v2107 = vadd.f32 %v2105, %v2106
  %v2108 = vrot.slane %v2107, 1
  %v2109 = vadd.f32 %v2107, %v2108
  %v2110 = vsel %vm67, %v2078, 0.0
  %v2111 = vrot.slane %v2110, 4
  %v2112 = vadd.f32 %v2110, %v2111
  %v2113 = vrot.slane %v2112, 2
  %v2114 = vadd.f32 %v2112, %v2113
  %v2115 = vrot.slane %v2114, 1
  %v2116 = vadd.f32 %v2114, %v2115
  %v2117 = vsel %vm67, %v2079, 0.0
  %v2118 = vrot.slane %v2117, 4
  %v2119 = vadd.f32 %v2117, %v2118
  %v2120 = vrot.slane %v2119, 2
  %v2121 = vadd.f32 %v2119, %v2120
  %v2122 = vrot.slane %v2121, 1
  %v2123 = vadd.f32 %v2121, %v2122
  %v2124 = vsel %vm67, %v2080, 0.0
  %v2125 = vrot.slane %v2124, 4
  %v2126 = vadd.f32 %v2124, %v2125
  %v2127 = vrot.slane %v2126, 2
  %v2128 = vadd.f32 %v2126, %v2127
  %v2129 = vrot.slane %v2128, 1
  %v2130 = vadd.f32 %v2128, %v2129
  %v2131 = vsel %vm67, %v2081, 0.0
  %v2132 = vrot.slane %v2131, 4
  %v2133 = vadd.f32 %v2131, %v2132
  %v2134 = vrot.slane %v2133, 2
  %v2135 = vadd.f32 %v2133, %v2134
  %v2136 = vrot.slane %v2135, 1
  %v2137 = vadd.f32 %v2135, %v2136
  %v2138 = vmul.f32 %v2088, 0.25
  %v2139 = vmul.f32 %v2095, 0.25
  %v2140 = vmul.f32 %v2102, 0.25
  %v2141 = vmul.f32 %v2109, 0.25
  %v2142 = vmul.f32 %v2116, 0.25
  %v2143 = vmul.f32 %v2123, 0.25
  %v2144 = vmul.f32 %v2130, 0.25
  %v2145 = vmul.f32 %v2137, 0.25
  %v2146 = vadd.f32 %v2138, 1e-05
  %v2147 = vadd.f32 %v2139, 1e-05
  %v2148 = vadd.f32 %v2140, 1e-05
  %v2149 = vadd.f32 %v2141, 1e-05
  %v2150 = vadd.f32 %v2142, 1e-05
  %v2151 = vadd.f32 %v2143, 1e-05
  %v2152 = vadd.f32 %v2144, 1e-05
  %v2153 = vadd.f32 %v2145, 1e-05
  %v2154 = vrsqrt.pop %v2146
  %v2155 = vrsqrt.pop %v2147
  %v2156 = vrsqrt.pop %v2148
  %v2157 = vrsqrt.pop %v2149
  %v2158 = vrsqrt.pop %v2150
  %v2159 = vrsqrt.pop %v2151
  %v2160 = vrsqrt.pop %v2152
  %v2161 = vrsqrt.pop %v2153
  %v2162 = vmul.f32 %v2066, %v2154
  %v2163 = vmul.f32 %v2067, %v2155
  %v2164 = vmul.f32 %v2068, %v2156
  %v2165 = vmul.f32 %v2069, %v2157
  %v2166 = vmul.f32 %v2070, %v2158
  %v2167 = vmul.f32 %v2071, %v2159
  %v2168 = vmul.f32 %v2072, %v2160
  %v2169 = vmul.f32 %v2073, %v2161
  %2171 = vset.pattern.permute.xlu0 0
  %2172 = vperm.xlu0 %2171, %v1983
  %v2173 = vpop.permute.xlu0 %2172
  %v2175 = vmul.f32 %v2162, %v2173
  %v2176 = vmul.f32 %v2163, %v2173
  %v2177 = vmul.f32 %v2164, %v2173
  %v2178 = vmul.f32 %v2165, %v2173
  %v2179 = vmul.f32 %v2166, %v2173
  %v2180 = vmul.f32 %v2167, %v2173
  %v2181 = vmul.f32 %v2168, %v2173
  %v2182 = vmul.f32 %v2169, %v2173
  %2184 = vset.pattern.permute.xlu0 0
  %2185 = vperm.xlu0 %2184, %v1985
  %v2186 = vpop.permute.xlu0 %2185
  %v2188 = vadd.f32 %v2175, %v2186
  %v2189 = vadd.f32 %v2176, %v2186
  %v2190 = vadd.f32 %v2177, %v2186
  %v2191 = vadd.f32 %v2178, %v2186
  %v2192 = vadd.f32 %v2179, %v2186
  %v2193 = vadd.f32 %v2180, %v2186
  %v2194 = vadd.f32 %v2181, %v2186
  %v2195 = vadd.f32 %v2182, %v2186
  %s2196 = scalar_lea.vmem %s3, 8
  %v2197 = vld [vmem:[%s2196] sm:$0xff]
  %v2199 = vsel %vm67, %v2188, 0
  %v2202 = vsel %vm67, %v2189, 0
  %v2205 = vsel %vm67, %v2190, 0
  %v2208 = vsel %vm67, %v2191, 0
  %v2211 = vsel %vm67, %v2192, 0
  %v2214 = vsel %vm67, %v2193, 0
  %v2217 = vsel %vm67, %v2194, 0
  %v2220 = vsel %vm67, %v2195, 0
  %2222 = vmatprep.subr.mxu0 0.0
  %2223 = vmatpush1.msra.mxu0 %v2197
  %2224 = vmatprep.subr.mxu0 0.0
  %2225 = vmatpush1.msra.mxu0 0.0
  %2226 = vmatprep.subr.mxu0 0.0
  %2227 = vmatpush1.msra.mxu0 0.0
  %2228 = vmatprep.subr.mxu0 0.0
  %2229 = vmatpush1.msra.mxu0 0.0
  %2230 = vmatprep.subr.mxu0 0.0
  %2231 = vmatpush1.msra.mxu0 0.0
  %2232 = vmatprep.subr.mxu0 0.0
  %2233 = vmatpush1.msra.mxu0 0.0
  %2234 = vmatprep.subr.mxu0 0.0
  %2235 = vmatpush1.msra.mxu0 0.0
  %2236 = vmatprep.subr.mxu0 0.0
  %2237 = vmatpush1.msra.mxu0 0.0
  %2238 = vmatprep.subr.mxu0 0.0
  %2239 = vmatpush1.msra.mxu0 0.0
  %2240 = vmatprep.subr.mxu0 0.0
  %2241 = vmatpush1.msra.mxu0 0.0
  %2242 = vmatprep.subr.mxu0 0.0
  %2243 = vmatpush1.msra.mxu0 0.0
  %2244 = vmatprep.subr.mxu0 0.0
  %2245 = vmatpush1.msra.mxu0 0.0
  %2246 = vmatprep.subr.mxu0 0.0
  %2247 = vmatpush1.msra.mxu0 0.0
  %2248 = vmatprep.subr.mxu0 0.0
  %2249 = vmatpush1.msra.mxu0 0.0
  %2250 = vmatprep.subr.mxu0 0.0
  %2251 = vmatpush1.msra.mxu0 0.0
  %2252 = vmatprep.subr.mxu0 0.0
  %2253 = vmatpush1.msra.mxu0 0.0
  %2254 = vmatprep.subr.mxu0 0.0
  %2255 = vmatpush1.msra.mxu0 0.0
  %2256 = vmatprep.subr.mxu0 0.0
  %2257 = vmatpush1.msra.mxu0 0.0
  %2258 = vmatprep.subr.mxu0 0.0
  %2259 = vmatpush1.msra.mxu0 0.0
  %2260 = vmatprep.subr.mxu0 0.0
  %2261 = vmatpush1.msra.mxu0 0.0
  %2262 = vmatprep.subr.mxu0 0.0
  %2263 = vmatpush1.msra.mxu0 0.0
  %2264 = vmatprep.subr.mxu0 0.0
  %2265 = vmatpush1.msra.mxu0 0.0
  %2266 = vmatprep.subr.mxu0 0.0
  %2267 = vmatpush1.msra.mxu0 0.0
  %2268 = vmatprep.subr.mxu0 0.0
  %2269 = vmatpush1.msra.mxu0 0.0
  %2270 = vmatprep.subr.mxu0 0.0
  %2271 = vmatpush1.msra.mxu0 0.0
  %2272 = vmatprep.subr.mxu0 0.0
  %2273 = vmatpush1.msra.mxu0 0.0
  %2274 = vmatprep.subr.mxu0 0.0
  %2275 = vmatpush1.msra.mxu0 0.0
  %2276 = vmatprep.subr.mxu0 0.0
  %2277 = vmatpush1.msra.mxu0 0.0
  %2278 = vmatprep.subr.mxu0 0.0
  %2279 = vmatpush1.msra.mxu0 0.0
  %2280 = vmatprep.subr.mxu0 0.0
  %2281 = vmatpush1.msra.mxu0 0.0
  %2282 = vmatprep.subr.mxu0 0.0
  %2283 = vmatpush1.msra.mxu0 0.0
  %2284 = vmatprep.subr.mxu0 0.0
  %2285 = vmatpush1.msra.mxu0 0.0
  %2286 = vmatprep.mubr.f32.mxu0 0.0
  %2287 = vmatmul.mubr.f32.gmra.mrb[0].mxu0 %v2199
  %v2288 = vpop.f32.mrb[0].mxu0
  %v2289 = vadd.f32 0.0, %v2288
  %v2290 = vpop.f32.mrb[0].mxu0
  %2291 = vmatprep.mubr.f32.mxu0 0.0
  %2292 = vmatmul.mubr.f32.gmra.mrb[0].mxu0 %v2202
  %v2293 = vpop.f32.mrb[0].mxu0
  %v2294 = vadd.f32 0.0, %v2293
  %v2295 = vpop.f32.mrb[0].mxu0
  %2296 = vmatprep.mubr.f32.mxu0 0.0
  %2297 = vmatmul.mubr.f32.gmra.mrb[0].mxu0 %v2205
  %v2298 = vpop.f32.mrb[0].mxu0
  %v2299 = vadd.f32 0.0, %v2298
  %v2300 = vpop.f32.mrb[0].mxu0
  %2301 = vmatprep.mubr.f32.mxu0 0.0
  %2302 = vmatmul.mubr.f32.gmra.mrb[0].mxu0 %v2208
  %v2303 = vpop.f32.mrb[0].mxu0
  %v2304 = vadd.f32 0.0, %v2303
  %v2305 = vpop.f32.mrb[0].mxu0
  %2306 = vmatprep.mubr.f32.mxu0 0.0
  %2307 = vmatmul.mubr.f32.gmra.mrb[0].mxu0 %v2211
  %v2308 = vpop.f32.mrb[0].mxu0
  %v2309 = vadd.f32 0.0, %v2308
  %v2310 = vpop.f32.mrb[0].mxu0
  %2311 = vmatprep.mubr.f32.mxu0 0.0
  %2312 = vmatmul.mubr.f32.gmra.mrb[0].mxu0 %v2214
  %v2313 = vpop.f32.mrb[0].mxu0
  %v2314 = vadd.f32 0.0, %v2313
  %v2315 = vpop.f32.mrb[0].mxu0
  %2316 = vmatprep.mubr.f32.mxu0 0.0
  %2317 = vmatmul.mubr.f32.gmra.mrb[0].mxu0 %v2217
  %v2318 = vpop.f32.mrb[0].mxu0
  %v2319 = vadd.f32 0.0, %v2318
  %v2320 = vpop.f32.mrb[0].mxu0
  %2321 = vmatprep.mubr.f32.mxu0 0.0
  %2322 = vmatmul.mubr.f32.gmra.mrb[0].mxu0 %v2220
  %v2323 = vpop.f32.mrb[0].mxu0
  %v2324 = vadd.f32 0.0, %v2323
  %v2325 = vpop.f32.mrb[0].mxu0
  %2326 = vdwg.mxu0
  %s2327 = scalar_lea.vmem %s4, 1
  %v2328 = vld [vmem:[%s2327] sm:$0x1]
  %v2330 = vlaneseq
  %v2331 = vshrl.u32 %v2330, 7
  %v2332 = vsub.s32 0, %v2331
  %v2333 = vrot.slane %v2328, %v2332
  %v2335 = vadd.f32 %v2289, %v2333
  %v2336 = vadd.f32 %v2294, %v2333
  %v2337 = vadd.f32 %v2299, %v2333
  %v2338 = vadd.f32 %v2304, %v2333
  %v2339 = vadd.f32 %v2309, %v2333
  %v2340 = vadd.f32 %v2314, %v2333
  %v2341 = vadd.f32 %v2319, %v2333
  %v2342 = vadd.f32 %v2324, %v2333
  %v2343 = vmax.f32 %v2335, 0.0
  %v2344 = vmax.f32 %v2336, 0.0
  %v2345 = vmax.f32 %v2337, 0.0
  %v2346 = vmax.f32 %v2338, 0.0
  %v2347 = vmax.f32 %v2339, 0.0
  %v2348 = vmax.f32 %v2340, 0.0
  %v2349 = vmax.f32 %v2341, 0.0
  %v2350 = vmax.f32 %v2342, 0.0
  %v2351 = vadd.f32 %v1974, %v2343
  %v2352 = vadd.f32 %v1975, %v2344
  %v2353 = vadd.f32 %v1976, %v2345
  %v2354 = vadd.f32 %v1977, %v2346
  %v2355 = vadd.f32 %v1978, %v2347
  %v2356 = vadd.f32 %v1979, %v2348
  %v2357 = vadd.f32 %v1980, %v2349
  %v2358 = vadd.f32 %v1981, %v2350
  %s2359 = scalar_lea.vmem %s5, 8
  %v2360 = vld [vmem:[%s2359] sm:$0xff]
  %s2361 = scalar_lea.vmem %s6, 8
  %v2362 = vld [vmem:[%s2361] sm:$0xff]
  %v2363 = vmul.f32 %v2351, %v48
  %v2364 = vmul.f32 %v2352, %v48
  %v2365 = vmul.f32 %v2353, %v48
  %v2366 = vmul.f32 %v2354, %v48
  %v2367 = vmul.f32 %v2355, %v48
  %v2368 = vmul.f32 %v2356, %v48
  %v2369 = vmul.f32 %v2357, %v48
  %v2370 = vmul.f32 %v2358, %v48
  %v2371 = vsel %vm67, %v2363, 0.0
  %v2372 = vrot.slane %v2371, 4
  %v2373 = vadd.f32 %v2371, %v2372
  %v2374 = vrot.slane %v2373, 2
  %v2375 = vadd.f32 %v2373, %v2374
  %v2376 = vrot.slane %v2375, 1
  %v2377 = vadd.f32 %v2375, %v2376
  %v2378 = vsel %vm67, %v2364, 0.0
  %v2379 = vrot.slane %v2378, 4
  %v2380 = vadd.f32 %v2378, %v2379
  %v2381 = vrot.slane %v2380, 2
  %v2382 = vadd.f32 %v2380, %v2381
  %v2383 = vrot.slane %v2382, 1
  %v2384 = vadd.f32 %v2382, %v2383
  %v2385 = vsel %vm67, %v2365, 0.0
  %v2386 = vrot.slane %v2385, 4
  %v2387 = vadd.f32 %v2385, %v2386
  %v2388 = vrot.slane %v2387, 2
  %v2389 = vadd.f32 %v2387, %v2388
  %v2390 = vrot.slane %v2389, 1
  %v2391 = vadd.f32 %v2389, %v2390
  %v2392 = vsel %vm67, %v2366, 0.0
  %v2393 = vrot.slane %v2392, 4
  %v2394 = vadd.f32 %v2392, %v2393
  %v2395 = vrot.slane %v2394, 2
  %v2396 = vadd.f32 %v2394, %v2395
  %v2397 = vrot.slane %v2396, 1
  %v2398 = vadd.f32 %v2396, %v2397
  %v2399 = vsel %vm67, %v2367, 0.0
  %v2400 = vrot.slane %v2399, 4
  %v2401 = vadd.f32 %v2399, %v2400
  %v2402 = vrot.slane %v2401, 2
  %v2403 = vadd.f32 %v2401, %v2402
  %v2404 = vrot.slane %v2403, 1
  %v2405 = vadd.f32 %v2403, %v2404
  %v2406 = vsel %vm67, %v2368, 0.0
  %v2407 = vrot.slane %v2406, 4
  %v2408 = vadd.f32 %v2406, %v2407
  %v2409 = vrot.slane %v2408, 2
  %v2410 = vadd.f32 %v2408, %v2409
  %v2411 = vrot.slane %v2410, 1
  %v2412 = vadd.f32 %v2410, %v2411
  %v2413 = vsel %vm67, %v2369, 0.0
  %v2414 = vrot.slane %v2413, 4
  %v2415 = vadd.f32 %v2413, %v2414
  %v2416 = vrot.slane %v2415, 2
  %v2417 = vadd.f32 %v2415, %v2416
  %v2418 = vrot.slane %v2417, 1
  %v2419 = vadd.f32 %v2417, %v2418
  %v2420 = vsel %vm67, %v2370, 0.0
  %v2421 = vrot.slane %v2420, 4
  %v2422 = vadd.f32 %v2420, %v2421
  %v2423 = vrot.slane %v2422, 2
  %v2424 = vadd.f32 %v2422, %v2423
  %v2425 = vrot.slane %v2424, 1
  %v2426 = vadd.f32 %v2424, %v2425
  %v2427 = vmul.f32 %v2377, 0.25
  %v2428 = vmul.f32 %v2384, 0.25
  %v2429 = vmul.f32 %v2391, 0.25
  %v2430 = vmul.f32 %v2398, 0.25
  %v2431 = vmul.f32 %v2405, 0.25
  %v2432 = vmul.f32 %v2412, 0.25
  %v2433 = vmul.f32 %v2419, 0.25
  %v2434 = vmul.f32 %v2426, 0.25
  %v2435 = vsub.f32 %v2351, %v2427
  %v2436 = vsub.f32 %v2352, %v2428
  %v2437 = vsub.f32 %v2353, %v2429
  %v2438 = vsub.f32 %v2354, %v2430
  %v2439 = vsub.f32 %v2355, %v2431
  %v2440 = vsub.f32 %v2356, %v2432
  %v2441 = vsub.f32 %v2357, %v2433
  %v2442 = vsub.f32 %v2358, %v2434
  %v2443 = vmul.f32 %v2435, %v48
  %v2444 = vmul.f32 %v2436, %v48
  %v2445 = vmul.f32 %v2437, %v48
  %v2446 = vmul.f32 %v2438, %v48
  %v2447 = vmul.f32 %v2439, %v48
  %v2448 = vmul.f32 %v2440, %v48
  %v2449 = vmul.f32 %v2441, %v48
  %v2450 = vmul.f32 %v2442, %v48
  %v2451 = vmul.f32 %v2443, %v2443
  %v2452 = vmul.f32 %v2444, %v2444
  %v2453 = vmul.f32 %v2445, %v2445
  %v2454 = vmul.f32 %v2446, %v2446
  %v2455 = vmul.f32 %v2447, %v2447
  %v2456 = vmul.f32 %v2448, %v2448
  %v2457 = vmul.f32 %v2449, %v2449
  %v2458 = vmul.f32 %v2450, %v2450
  %v2459 = vsel %vm67, %v2451, 0.0
  %v2460 = vrot.slane %v2459, 4
  %v2461 = vadd.f32 %v2459, %v2460
  %v2462 = vrot.slane %v2461, 2
  %v2463 = vadd.f32 %v2461, %v2462
  %v2464 = vrot.slane %v2463, 1
  %v2465 = vadd.f32 %v2463, %v2464
  %v2466 = vsel %vm67, %v2452, 0.0
  %v2467 = vrot.slane %v2466, 4
  %v2468 = vadd.f32 %v2466, %v2467
  %v2469 = vrot.slane %v2468, 2
  %v2470 = vadd.f32 %v2468, %v2469
  %v2471 = vrot.slane %v2470, 1
  %v2472 = vadd.f32 %v2470, %v2471
  %v2473 = vsel %vm67, %v2453, 0.0
  %v2474 = vrot.slane %v2473, 4
  %v2475 = vadd.f32 %v2473, %v2474
  %v2476 = vrot.slane %v2475, 2
  %v2477 = vadd.f32 %v2475, %v2476
  %v2478 = vrot.slane %v2477, 1
  %v2479 = vadd.f32 %v2477, %v2478
  %v2480 = vsel %vm67, %v2454, 0.0
  %v2481 = vrot.slane %v2480, 4
  %v2482 = vadd.f32 %v2480, %v2481
  %v2483 = vrot.slane %v2482, 2
  %v2484 = vadd.f32 %v2482, %v2483
  %v2485 = vrot.slane %v2484, 1
  %v2486 = vadd.f32 %v2484, %v2485
  %v2487 = vsel %vm67, %v2455, 0.0
  %v2488 = vrot.slane %v2487, 4
  %v2489 = vadd.f32 %v2487, %v2488
  %v2490 = vrot.slane %v2489, 2
  %v2491 = vadd.f32 %v2489, %v2490
  %v2492 = vrot.slane %v2491, 1
  %v2493 = vadd.f32 %v2491, %v2492
  %v2494 = vsel %vm67, %v2456, 0.0
  %v2495 = vrot.slane %v2494, 4
  %v2496 = vadd.f32 %v2494, %v2495
  %v2497 = vrot.slane %v2496, 2
  %v2498 = vadd.f32 %v2496, %v2497
  %v2499 = vrot.slane %v2498, 1
  %v2500 = vadd.f32 %v2498, %v2499
  %v2501 = vsel %vm67, %v2457, 0.0
  %v2502 = vrot.slane %v2501, 4
  %v2503 = vadd.f32 %v2501, %v2502
  %v2504 = vrot.slane %v2503, 2
  %v2505 = vadd.f32 %v2503, %v2504
  %v2506 = vrot.slane %v2505, 1
  %v2507 = vadd.f32 %v2505, %v2506
  %v2508 = vsel %vm67, %v2458, 0.0
  %v2509 = vrot.slane %v2508, 4
  %v2510 = vadd.f32 %v2508, %v2509
  %v2511 = vrot.slane %v2510, 2
  %v2512 = vadd.f32 %v2510, %v2511
  %v2513 = vrot.slane %v2512, 1
  %v2514 = vadd.f32 %v2512, %v2513
  %v2515 = vmul.f32 %v2465, 0.25
  %v2516 = vmul.f32 %v2472, 0.25
  %v2517 = vmul.f32 %v2479, 0.25
  %v2518 = vmul.f32 %v2486, 0.25
  %v2519 = vmul.f32 %v2493, 0.25
  %v2520 = vmul.f32 %v2500, 0.25
  %v2521 = vmul.f32 %v2507, 0.25
  %v2522 = vmul.f32 %v2514, 0.25
  %v2523 = vadd.f32 %v2515, 1e-05
  %v2524 = vadd.f32 %v2516, 1e-05
  %v2525 = vadd.f32 %v2517, 1e-05
  %v2526 = vadd.f32 %v2518, 1e-05
  %v2527 = vadd.f32 %v2519, 1e-05
  %v2528 = vadd.f32 %v2520, 1e-05
  %v2529 = vadd.f32 %v2521, 1e-05
  %v2530 = vadd.f32 %v2522, 1e-05
  %v2531 = vrsqrt.pop %v2523
  %v2532 = vrsqrt.pop %v2524
  %v2533 = vrsqrt.pop %v2525
  %v2534 = vrsqrt.pop %v2526
  %v2535 = vrsqrt.pop %v2527
  %v2536 = vrsqrt.pop %v2528
  %v2537 = vrsqrt.pop %v2529
  %v2538 = vrsqrt.pop %v2530
  %v2539 = vmul.f32 %v2443, %v2531
  %v2540 = vmul.f32 %v2444, %v2532
  %v2541 = vmul.f32 %v2445, %v2533
  %v2542 = vmul.f32 %v2446, %v2534
  %v2543 = vmul.f32 %v2447, %v2535
  %v2544 = vmul.f32 %v2448, %v2536
  %v2545 = vmul.f32 %v2449, %v2537
  %v2546 = vmul.f32 %v2450, %v2538
  %2548 = vset.pattern.permute.xlu0 0
  %2549 = vperm.xlu0 %2548, %v2360
  %v2550 = vpop.permute.xlu0 %2549
  %v2552 = vmul.f32 %v2539, %v2550
  %v2553 = vmul.f32 %v2540, %v2550
  %v2554 = vmul.f32 %v2541, %v2550
  %v2555 = vmul.f32 %v2542, %v2550
  %v2556 = vmul.f32 %v2543, %v2550
  %v2557 = vmul.f32 %v2544, %v2550
  %v2558 = vmul.f32 %v2545, %v2550
  %v2559 = vmul.f32 %v2546, %v2550
  %2561 = vset.pattern.permute.xlu0 0
  %2562 = vperm.xlu0 %2561, %v2362
  %v2563 = vpop.permute.xlu0 %2562
  %v2565 = vadd.f32 %v2552, %v2563
  %v2566 = vadd.f32 %v2553, %v2563
  %v2567 = vadd.f32 %v2554, %v2563
  %v2568 = vadd.f32 %v2555, %v2563
  %v2569 = vadd.f32 %v2556, %v2563
  %v2570 = vadd.f32 %v2557, %v2563
  %v2571 = vadd.f32 %v2558, %v2563
  %v2572 = vadd.f32 %v2559, %v2563
  %s2573 = scalar_lea.vmem %s7, 32
  %v2574 = vld [vmem:[%s2573] sm:$0xff]
  %v2575 = vld [vmem:[%s2573 + $0x8] sm:$0xff]
  %v2576 = vld [vmem:[%s2573 + $0x10] sm:$0xff]
  %v2577 = vld [vmem:[%s2573 + $0x18] sm:$0xff]
  %s2578 = scalar_lea.vmem %s8, 32
  %v2579 = vld [vmem:[%s2578] sm:$0xff]
  %v2580 = vld [vmem:[%s2578 + $0x8] sm:$0xff]
  %v2581 = vld [vmem:[%s2578 + $0x10] sm:$0xff]
  %v2582 = vld [vmem:[%s2578 + $0x18] sm:$0xff]
  %2584 = vset.pattern.permute.xlu0 0
  %2585 = vperm.xlu0 %2584, %v2579
  %v2586 = vpop.permute.xlu0 %2585
  %2589 = vset.pattern.permute.xlu0 0
  %2590 = vperm.xlu0 %2589, %v2580
  %v2591 = vpop.permute.xlu0 %2590
  %2594 = vset.pattern.permute.xlu0 0
  %2595 = vperm.xlu0 %2594, %v2581
  %v2596 = vpop.permute.xlu0 %2595
  %2599 = vset.pattern.permute.xlu0 0
  %2600 = vperm.xlu0 %2599, %v2582
  %v2601 = vpop.permute.xlu0 %2600
  %v2604 = vsel %vm67, %v2574, 0
  %v2607 = vsel %vm67, %v2575, 0
  %v2610 = vsel %vm67, %v2576, 0
  %v2613 = vsel %vm67, %v2577, 0
  %2615 = vmatprep.subr.mxu0 0.0
  %2616 = vmatpush1.msra.mxu0 %v2565
  %2617 = vmatprep.subr.mxu0 0.0
  %2618 = vmatpush1.msra.mxu0 0.0
  %2619 = vmatprep.subr.mxu0 0.0
  %2620 = vmatpush1.msra.mxu0 0.0
  %2621 = vmatprep.subr.mxu0 0.0
  %2622 = vmatpush1.msra.mxu0 0.0
  %2623 = vmatprep.subr.mxu0 0.0
  %2624 = vmatpush1.msra.mxu0 0.0
  %2625 = vmatprep.subr.mxu0 0.0
  %2626 = vmatpush1.msra.mxu0 0.0
  %2627 = vmatprep.subr.mxu0 0.0
  %2628 = vmatpush1.msra.mxu0 0.0
  %2629 = vmatprep.subr.mxu0 0.0
  %2630 = vmatpush1.msra.mxu0 0.0
  %2631 = vmatprep.subr.mxu0 0.0
  %2632 = vmatpush1.msra.mxu0 0.0
  %2633 = vmatprep.subr.mxu0 0.0
  %2634 = vmatpush1.msra.mxu0 0.0
  %2635 = vmatprep.subr.mxu0 0.0
  %2636 = vmatpush1.msra.mxu0 0.0
  %2637 = vmatprep.subr.mxu0 0.0
  %2638 = vmatpush1.msra.mxu0 0.0
  %2639 = vmatprep.subr.mxu0 0.0
  %2640 = vmatpush1.msra.mxu0 0.0
  %2641 = vmatprep.subr.mxu0 0.0
  %2642 = vmatpush1.msra.mxu0 0.0
  %2643 = vmatprep.subr.mxu0 0.0
  %2644 = vmatpush1.msra.mxu0 0.0
  %2645 = vmatprep.subr.mxu0 0.0
  %2646 = vmatpush1.msra.mxu0 0.0
  %2647 = vmatprep.subr.mxu0 0.0
  %2648 = vmatpush1.msra.mxu0 0.0
  %2649 = vmatprep.subr.mxu0 0.0
  %2650 = vmatpush1.msra.mxu0 0.0
  %2651 = vmatprep.subr.mxu0 0.0
  %2652 = vmatpush1.msra.mxu0 0.0
  %2653 = vmatprep.subr.mxu0 0.0
  %2654 = vmatpush1.msra.mxu0 0.0
  %2655 = vmatprep.subr.mxu0 0.0
  %2656 = vmatpush1.msra.mxu0 0.0
  %2657 = vmatprep.subr.mxu0 0.0
  %2658 = vmatpush1.msra.mxu0 0.0
  %2659 = vmatprep.subr.mxu0 0.0
  %2660 = vmatpush1.msra.mxu0 0.0
  %2661 = vmatprep.subr.mxu0 0.0
  %2662 = vmatpush1.msra.mxu0 0.0
  %2663 = vmatprep.subr.mxu0 0.0
  %2664 = vmatpush1.msra.mxu0 0.0
  %2665 = vmatprep.subr.mxu0 0.0
  %2666 = vmatpush1.msra.mxu0 0.0
  %2667 = vmatprep.subr.mxu0 0.0
  %2668 = vmatpush1.msra.mxu0 0.0
  %2669 = vmatprep.subr.mxu0 0.0
  %2670 = vmatpush1.msra.mxu0 0.0
  %2671 = vmatprep.subr.mxu0 0.0
  %2672 = vmatpush1.msra.mxu0 0.0
  %2673 = vmatprep.subr.mxu0 0.0
  %2674 = vmatpush1.msra.mxu0 0.0
  %2675 = vmatprep.subr.mxu0 0.0
  %2676 = vmatpush1.msra.mxu0 0.0
  %2677 = vmatprep.subr.mxu0 0.0
  %2678 = vmatpush1.msra.mxu0 0.0
  %2679 = vmatprep.mubr.f32.mxu0 0.0
  %2680 = vmatmul.mubr.f32.gmra.mrb[0].mxu0 %v2604
  %v2681 = vpop.f32.mrb[0].mxu0
  %v2682 = vadd.f32 %v2586, %v2681
  %v2683 = vpop.f32.mrb[0].mxu0
  %2684 = vmatprep.mubr.f32.mxu0 0.0
  %2685 = vmatmul.mubr.f32.gmra.mrb[0].mxu0 %v2607
  %v2686 = vpop.f32.mrb[0].mxu0
  %v2687 = vadd.f32 %v2591, %v2686
  %v2688 = vpop.f32.mrb[0].mxu0
  %2689 = vmatprep.mubr.f32.mxu0 0.0
  %2690 = vmatmul.mubr.f32.gmra.mrb[0].mxu0 %v2610
  %v2691 = vpop.f32.mrb[0].mxu0
  %v2692 = vadd.f32 %v2596, %v2691
  %v2693 = vpop.f32.mrb[0].mxu0
  %2694 = vmatprep.mubr.f32.mxu0 0.0
  %2695 = vmatmul.mubr.f32.gmra.mrb[0].mxu0 %v2613
  %v2696 = vpop.f32.mrb[0].mxu0
  %v2697 = vadd.f32 %v2601, %v2696
  %v2698 = vpop.f32.mrb[0].mxu0
  %2699 = vdwg.mxu0
  %2700 = vmatprep.subr.mxu0 0.0
  %2701 = vmatpush1.msra.mxu0 %v2566
  %2702 = vmatprep.subr.mxu0 0.0
  %2703 = vmatpush1.msra.mxu0 0.0
  %2704 = vmatprep.subr.mxu0 0.0
  %2705 = vmatpush1.msra.mxu0 0.0
  %2706 = vmatprep.subr.mxu0 0.0
  %2707 = vmatpush1.msra.mxu0 0.0
  %2708 = vmatprep.subr.mxu0 0.0
  %2709 = vmatpush1.msra.mxu0 0.0
  %2710 = vmatprep.subr.mxu0 0.0
  %2711 = vmatpush1.msra.mxu0 0.0
  %2712 = vmatprep.subr.mxu0 0.0
  %2713 = vmatpush1.msra.mxu0 0.0
  %2714 = vmatprep.subr.mxu0 0.0
  %2715 = vmatpush1.msra.mxu0 0.0
  %2716 = vmatprep.subr.mxu0 0.0
  %2717 = vmatpush1.msra.mxu0 0.0
  %2718 = vmatprep.subr.mxu0 0.0
  %2719 = vmatpush1.msra.mxu0 0.0
  %2720 = vmatprep.subr.mxu0 0.0
  %2721 = vmatpush1.msra.mxu0 0.0
  %2722 = vmatprep.subr.mxu0 0.0
  %2723 = vmatpush1.msra.mxu0 0.0
  %2724 = vmatprep.subr.mxu0 0.0
  %2725 = vmatpush1.msra.mxu0 0.0
  %2726 = vmatprep.subr.mxu0 0.0
  %2727 = vmatpush1.msra.mxu0 0.0
  %2728 = vmatprep.subr.mxu0 0.0
  %2729 = vmatpush1.msra.mxu0 0.0
  %2730 = vmatprep.subr.mxu0 0.0
  %2731 = vmatpush1.msra.mxu0 0.0
  %2732 = vmatprep.subr.mxu0 0.0
  %2733 = vmatpush1.msra.mxu0 0.0
  %2734 = vmatprep.subr.mxu0 0.0
  %2735 = vmatpush1.msra.mxu0 0.0
  %2736 = vmatprep.subr.mxu0 0.0
  %2737 = vmatpush1.msra.mxu0 0.0
  %2738 = vmatprep.subr.mxu0 0.0
  %2739 = vmatpush1.msra.mxu0 0.0
  %2740 = vmatprep.subr.mxu0 0.0
  %2741 = vmatpush1.msra.mxu0 0.0
  %2742 = vmatprep.subr.mxu0 0.0
  %2743 = vmatpush1.msra.mxu0 0.0
  %2744 = vmatprep.subr.mxu0 0.0
  %2745 = vmatpush1.msra.mxu0 0.0
  %2746 = vmatprep.subr.mxu0 0.0
  %2747 = vmatpush1.msra.mxu0 0.0
  %2748 = vmatprep.subr.mxu0 0.0
  %2749 = vmatpush1.msra.mxu0 0.0
  %2750 = vmatprep.subr.mxu0 0.0
  %2751 = vmatpush1.msra.mxu0 0.0
  %2752 = vmatprep.subr.mxu0 0.0
  %2753 = vmatpush1.msra.mxu0 0.0
  %2754 = vmatprep.subr.mxu0 0.0
  %2755 = vmatpush1.msra.mxu0 0.0
  %2756 = vmatprep.subr.mxu0 0.0
  %2757 = vmatpush1.msra.mxu0 0.0
  %2758 = vmatprep.subr.mxu0 0.0
  %2759 = vmatpush1.msra.mxu0 0.0
  %2760 = vmatprep.subr.mxu0 0.0
  %2761 = vmatpush1.msra.mxu0 0.0
  %2762 = vmatprep.subr.mxu0 0.0
  %2763 = vmatpush1.msra.mxu0 0.0
  %2764 = vmatprep.mubr.f32.mxu0 0.0
  %2765 = vmatmul.mubr.f32.gmra.mrb[0].mxu0 %v2604
  %v2766 = vpop.f32.mrb[0].mxu0
  %v2767 = vadd.f32 %v2586, %v2766
  %v2768 = vpop.f32.mrb[0].mxu0
  %2769 = vmatprep.mubr.f32.mxu0 0.0
  %2770 = vmatmul.mubr.f32.gmra.mrb[0].mxu0 %v2607
  %v2771 = vpop.f32.mrb[0].mxu0
  %v2772 = vadd.f32 %v2591, %v2771
  %v2773 = vpop.f32.mrb[0].mxu0
  %2774 = vmatprep.mubr.f32.mxu0 0.0
  %2775 = vmatmul.mubr.f32.gmra.mrb[0].mxu0 %v2610
  %v2776 = vpop.f32.mrb[0].mxu0
  %v2777 = vadd.f32 %v2596, %v2776
  %v2778 = vpop.f32.mrb[0].mxu0
  %2779 = vmatprep.mubr.f32.mxu0 0.0
  %2780 = vmatmul.mubr.f32.gmra.mrb[0].mxu0 %v2613
  %v2781 = vpop.f32.mrb[0].mxu0
  %v2782 = vadd.f32 %v2601, %v2781
  %v2783 = vpop.f32.mrb[0].mxu0
  %2784 = vdwg.mxu0
  %2785 = vmatprep.subr.mxu0 0.0
  %2786 = vmatpush1.msra.mxu0 %v2567
  %2787 = vmatprep.subr.mxu0 0.0
  %2788 = vmatpush1.msra.mxu0 0.0
  %2789 = vmatprep.subr.mxu0 0.0
  %2790 = vmatpush1.msra.mxu0 0.0
  %2791 = vmatprep.subr.mxu0 0.0
  %2792 = vmatpush1.msra.mxu0 0.0
  %2793 = vmatprep.subr.mxu0 0.0
  %2794 = vmatpush1.msra.mxu0 0.0
  %2795 = vmatprep.subr.mxu0 0.0
  %2796 = vmatpush1.msra.mxu0 0.0
  %2797 = vmatprep.subr.mxu0 0.0
  %2798 = vmatpush1.msra.mxu0 0.0
  %2799 = vmatprep.subr.mxu0 0.0
  %2800 = vmatpush1.msra.mxu0 0.0
  %2801 = vmatprep.subr.mxu0 0.0
  %2802 = vmatpush1.msra.mxu0 0.0
  %2803 = vmatprep.subr.mxu0 0.0
  %2804 = vmatpush1.msra.mxu0 0.0
  %2805 = vmatprep.subr.mxu0 0.0
  %2806 = vmatpush1.msra.mxu0 0.0
  %2807 = vmatprep.subr.mxu0 0.0
  %2808 = vmatpush1.msra.mxu0 0.0
  %2809 = vmatprep.subr.mxu0 0.0
  %2810 = vmatpush1.msra.mxu0 0.0
  %2811 = vmatprep.subr.mxu0 0.0
  %2812 = vmatpush1.msra.mxu0 0.0
  %2813 = vmatprep.subr.mxu0 0.0
  %2814 = vmatpush1.msra.mxu0 0.0
  %2815 = vmatprep.subr.mxu0 0.0
  %2816 = vmatpush1.msra.mxu0 0.0
  %2817 = vmatprep.subr.mxu0 0.0
  %2818 = vmatpush1.msra.mxu0 0.0
  %2819 = vmatprep.subr.mxu0 0.0
  %2820 = vmatpush1.msra.mxu0 0.0
  %2821 = vmatprep.subr.mxu0 0.0
  %2822 = vmatpush1.msra.mxu0 0.0
  %2823 = vmatprep.subr.mxu0 0.0
  %2824 = vmatpush1.msra.mxu0 0.0
  %2825 = vmatprep.subr.mxu0 0.0
  %2826 = vmatpush1.msra.mxu0 0.0
  %2827 = vmatprep.subr.mxu0 0.0
  %2828 = vmatpush1.msra.mxu0 0.0
  %2829 = vmatprep.subr.mxu0 0.0
  %2830 = vmatpush1.msra.mxu0 0.0
  %2831 = vmatprep.subr.mxu0 0.0
  %2832 = vmatpush1.msra.mxu0 0.0
  %2833 = vmatprep.subr.mxu0 0.0
  %2834 = vmatpush1.msra.mxu0 0.0
  %2835 = vmatprep.subr.mxu0 0.0
  %2836 = vmatpush1.msra.mxu0 0.0
  %2837 = vmatprep.subr.mxu0 0.0
  %2838 = vmatpush1.msra.mxu0 0.0
  %2839 = vmatprep.subr.mxu0 0.0
  %2840 = vmatpush1.msra.mxu0 0.0
  %2841 = vmatprep.subr.mxu0 0.0
  %2842 = vmatpush1.msra.mxu0 0.0
  %2843 = vmatprep.subr.mxu0 0.0
  %2844 = vmatpush1.msra.mxu0 0.0
  %2845 = vmatprep.subr.mxu0 0.0
  %2846 = vmatpush1.msra.mxu0 0.0
  %2847 = vmatprep.subr.mxu0 0.0
  %2848 = vmatpush1.msra.mxu0 0.0
  %2849 = vmatprep.mubr.f32.mxu0 0.0
  %2850 = vmatmul.mubr.f32.gmra.mrb[0].mxu0 %v2604
  %v2851 = vpop.f32.mrb[0].mxu0
  %v2852 = vadd.f32 %v2586, %v2851
  %v2853 = vpop.f32.mrb[0].mxu0
  %2854 = vmatprep.mubr.f32.mxu0 0.0
  %2855 = vmatmul.mubr.f32.gmra.mrb[0].mxu0 %v2607
  %v2856 = vpop.f32.mrb[0].mxu0
  %v2857 = vadd.f32 %v2591, %v2856
  %v2858 = vpop.f32.mrb[0].mxu0
  %2859 = vmatprep.mubr.f32.mxu0 0.0
  %2860 = vmatmul.mubr.f32.gmra.mrb[0].mxu0 %v2610
  %v2861 = vpop.f32.mrb[0].mxu0
  %v2862 = vadd.f32 %v2596, %v2861
  %v2863 = vpop.f32.mrb[0].mxu0
  %2864 = vmatprep.mubr.f32.mxu0 0.0
  %2865 = vmatmul.mubr.f32.gmra.mrb[0].mxu0 %v2613
  %v2866 = vpop.f32.mrb[0].mxu0
  %v2867 = vadd.f32 %v2601, %v2866
  %v2868 = vpop.f32.mrb[0].mxu0
  %2869 = vdwg.mxu0
  %2870 = vmatprep.subr.mxu0 0.0
  %2871 = vmatpush1.msra.mxu0 %v2568
  %2872 = vmatprep.subr.mxu0 0.0
  %2873 = vmatpush1.msra.mxu0 0.0
  %2874 = vmatprep.subr.mxu0 0.0
  %2875 = vmatpush1.msra.mxu0 0.0
  %2876 = vmatprep.subr.mxu0 0.0
  %2877 = vmatpush1.msra.mxu0 0.0
  %2878 = vmatprep.subr.mxu0 0.0
  %2879 = vmatpush1.msra.mxu0 0.0
  %2880 = vmatprep.subr.mxu0 0.0
  %2881 = vmatpush1.msra.mxu0 0.0
  %2882 = vmatprep.subr.mxu0 0.0
  %2883 = vmatpush1.msra.mxu0 0.0
  %2884 = vmatprep.subr.mxu0 0.0
  %2885 = vmatpush1.msra.mxu0 0.0
  %2886 = vmatprep.subr.mxu0 0.0
  %2887 = vmatpush1.msra.mxu0 0.0
  %2888 = vmatprep.subr.mxu0 0.0
  %2889 = vmatpush1.msra.mxu0 0.0
  %2890 = vmatprep.subr.mxu0 0.0
  %2891 = vmatpush1.msra.mxu0 0.0
  %2892 = vmatprep.subr.mxu0 0.0
  %2893 = vmatpush1.msra.mxu0 0.0
  %2894 = vmatprep.subr.mxu0 0.0
  %2895 = vmatpush1.msra.mxu0 0.0
  %2896 = vmatprep.subr.mxu0 0.0
  %2897 = vmatpush1.msra.mxu0 0.0
  %2898 = vmatprep.subr.mxu0 0.0
  %2899 = vmatpush1.msra.mxu0 0.0
  %2900 = vmatprep.subr.mxu0 0.0
  %2901 = vmatpush1.msra.mxu0 0.0
  %2902 = vmatprep.subr.mxu0 0.0
  %2903 = vmatpush1.msra.mxu0 0.0
  %2904 = vmatprep.subr.mxu0 0.0
  %2905 = vmatpush1.msra.mxu0 0.0
  %2906 = vmatprep.subr.mxu0 0.0
  %2907 = vmatpush1.msra.mxu0 0.0
  %2908 = vmatprep.subr.mxu0 0.0
  %2909 = vmatpush1.msra.mxu0 0.0
  %2910 = vmatprep.subr.mxu0 0.0
  %2911 = vmatpush1.msra.mxu0 0.0
  %2912 = vmatprep.subr.mxu0 0.0
  %2913 = vmatpush1.msra.mxu0 0.0
  %2914 = vmatprep.subr.mxu0 0.0
  %2915 = vmatpush1.msra.mxu0 0.0
  %2916 = vmatprep.subr.mxu0 0.0
  %2917 = vmatpush1.msra.mxu0 0.0
  %2918 = vmatprep.subr.mxu0 0.0
  %2919 = vmatpush1.msra.mxu0 0.0
  %2920 = vmatprep.subr.mxu0 0.0
  %2921 = vmatpush1.msra.mxu0 0.0
  %2922 = vmatprep.subr.mxu0 0.0
  %2923 = vmatpush1.msra.mxu0 0.0
  %2924 = vmatprep.subr.mxu0 0.0
  %2925 = vmatpush1.msra.mxu0 0.0
  %2926 = vmatprep.subr.mxu0 0.0
  %2927 = vmatpush1.msra.mxu0 0.0
  %2928 = vmatprep.subr.mxu0 0.0
  %2929 = vmatpush1.msra.mxu0 0.0
  %2930 = vmatprep.subr.mxu0 0.0
  %2931 = vmatpush1.msra.mxu0 0.0
  %2932 = vmatprep.subr.mxu0 0.0
  %2933 = vmatpush1.msra.mxu0 0.0
  %2934 = vmatprep.mubr.f32.mxu0 0.0
  %2935 = vmatmul.mubr.f32.gmra.mrb[0].mxu0 %v2604
  %v2936 = vpop.f32.mrb[0].mxu0
  %v2937 = vadd.f32 %v2586, %v2936
  %v2938 = vpop.f32.mrb[0].mxu0
  %2939 = vmatprep.mubr.f32.mxu0 0.0
  %2940 = vmatmul.mubr.f32.gmra.mrb[0].mxu0 %v2607
  %v2941 = vpop.f32.mrb[0].mxu0
  %v2942 = vadd.f32 %v2591, %v2941
  %v2943 = vpop.f32.mrb[0].mxu0
  %2944 = vmatprep.mubr.f32.mxu0 0.0
  %2945 = vmatmul.mubr.f32.gmra.mrb[0].mxu0 %v2610
  %v2946 = vpop.f32.mrb[0].mxu0
  %v2947 = vadd.f32 %v2596, %v2946
  %v2948 = vpop.f32.mrb[0].mxu0
  %2949 = vmatprep.mubr.f32.mxu0 0.0
  %2950 = vmatmul.mubr.f32.gmra.mrb[0].mxu0 %v2613
  %v2951 = vpop.f32.mrb[0].mxu0
  %v2952 = vadd.f32 %v2601, %v2951
  %v2953 = vpop.f32.mrb[0].mxu0
  %2954 = vdwg.mxu0
  %2955 = vmatprep.subr.mxu0 0.0
  %2956 = vmatpush1.msra.mxu0 %v2569
  %2957 = vmatprep.subr.mxu0 0.0
  %2958 = vmatpush1.msra.mxu0 0.0
  %2959 = vmatprep.subr.mxu0 0.0
  %2960 = vmatpush1.msra.mxu0 0.0
  %2961 = vmatprep.subr.mxu0 0.0
  %2962 = vmatpush1.msra.mxu0 0.0
  %2963 = vmatprep.subr.mxu0 0.0
  %2964 = vmatpush1.msra.mxu0 0.0
  %2965 = vmatprep.subr.mxu0 0.0
  %2966 = vmatpush1.msra.mxu0 0.0
  %2967 = vmatprep.subr.mxu0 0.0
  %2968 = vmatpush1.msra.mxu0 0.0
  %2969 = vmatprep.subr.mxu0 0.0
  %2970 = vmatpush1.msra.mxu0 0.0
  %2971 = vmatprep.subr.mxu0 0.0
  %2972 = vmatpush1.msra.mxu0 0.0
  %2973 = vmatprep.subr.mxu0 0.0
  %2974 = vmatpush1.msra.mxu0 0.0
  %2975 = vmatprep.subr.mxu0 0.0
  %2976 = vmatpush1.msra.mxu0 0.0
  %2977 = vmatprep.subr.mxu0 0.0
  %2978 = vmatpush1.msra.mxu0 0.0
  %2979 = vmatprep.subr.mxu0 0.0
  %2980 = vmatpush1.msra.mxu0 0.0
  %2981 = vmatprep.subr.mxu0 0.0
  %2982 = vmatpush1.msra.mxu0 0.0
  %2983 = vmatprep.subr.mxu0 0.0
  %2984 = vmatpush1.msra.mxu0 0.0
  %2985 = vmatprep.subr.mxu0 0.0
  %2986 = vmatpush1.msra.mxu0 0.0
  %2987 = vmatprep.subr.mxu0 0.0
  %2988 = vmatpush1.msra.mxu0 0.0
  %2989 = vmatprep.subr.mxu0 0.0
  %2990 = vmatpush1.msra.mxu0 0.0
  %2991 = vmatprep.subr.mxu0 0.0
  %2992 = vmatpush1.msra.mxu0 0.0
  %2993 = vmatprep.subr.mxu0 0.0
  %2994 = vmatpush1.msra.mxu0 0.0
  %2995 = vmatprep.subr.mxu0 0.0
  %2996 = vmatpush1.msra.mxu0 0.0
  %2997 = vmatprep.subr.mxu0 0.0
  %2998 = vmatpush1.msra.mxu0 0.0
  %2999 = vmatprep.subr.mxu0 0.0
  %3000 = vmatpush1.msra.mxu0 0.0
  %3001 = vmatprep.subr.mxu0 0.0
  %3002 = vmatpush1.msra.mxu0 0.0
  %3003 = vmatprep.subr.mxu0 0.0
  %3004 = vmatpush1.msra.mxu0 0.0
  %3005 = vmatprep.subr.mxu0 0.0
  %3006 = vmatpush1.msra.mxu0 0.0
  %3007 = vmatprep.subr.mxu0 0.0
  %3008 = vmatpush1.msra.mxu0 0.0
  %3009 = vmatprep.subr.mxu0 0.0
  %3010 = vmatpush1.msra.mxu0 0.0
  %3011 = vmatprep.subr.mxu0 0.0
  %3012 = vmatpush1.msra.mxu0 0.0
  %3013 = vmatprep.subr.mxu0 0.0
  %3014 = vmatpush1.msra.mxu0 0.0
  %3015 = vmatprep.subr.mxu0 0.0
  %3016 = vmatpush1.msra.mxu0 0.0
  %3017 = vmatprep.subr.mxu0 0.0
  %3018 = vmatpush1.msra.mxu0 0.0
  %3019 = vmatprep.mubr.f32.mxu0 0.0
  %3020 = vmatmul.mubr.f32.gmra.mrb[0].mxu0 %v2604
  %v3021 = vpop.f32.mrb[0].mxu0
  %v3022 = vadd.f32 %v2586, %v3021
  %v3023 = vpop.f32.mrb[0].mxu0
  %3024 = vmatprep.mubr.f32.mxu0 0.0
  %3025 = vmatmul.mubr.f32.gmra.mrb[0].mxu0 %v2607
  %v3026 = vpop.f32.mrb[0].mxu0
  %v3027 = vadd.f32 %v2591, %v3026
  %v3028 = vpop.f32.mrb[0].mxu0
  %3029 = vmatprep.mubr.f32.mxu0 0.0
  %3030 = vmatmul.mubr.f32.gmra.mrb[0].mxu0 %v2610
  %v3031 = vpop.f32.mrb[0].mxu0
  %v3032 = vadd.f32 %v2596, %v3031
  %v3033 = vpop.f32.mrb[0].mxu0
  %3034 = vmatprep.mubr.f32.mxu0 0.0
  %3035 = vmatmul.mubr.f32.gmra.mrb[0].mxu0 %v2613
  %v3036 = vpop.f32.mrb[0].mxu0
  %v3037 = vadd.f32 %v2601, %v3036
  %v3038 = vpop.f32.mrb[0].mxu0
  %3039 = vdwg.mxu0
  %3040 = vmatprep.subr.mxu0 0.0
  %3041 = vmatpush1.msra.mxu0 %v2570
  %3042 = vmatprep.subr.mxu0 0.0
  %3043 = vmatpush1.msra.mxu0 0.0
  %3044 = vmatprep.subr.mxu0 0.0
  %3045 = vmatpush1.msra.mxu0 0.0
  %3046 = vmatprep.subr.mxu0 0.0
  %3047 = vmatpush1.msra.mxu0 0.0
  %3048 = vmatprep.subr.mxu0 0.0
  %3049 = vmatpush1.msra.mxu0 0.0
  %3050 = vmatprep.subr.mxu0 0.0
  %3051 = vmatpush1.msra.mxu0 0.0
  %3052 = vmatprep.subr.mxu0 0.0
  %3053 = vmatpush1.msra.mxu0 0.0
  %3054 = vmatprep.subr.mxu0 0.0
  %3055 = vmatpush1.msra.mxu0 0.0
  %3056 = vmatprep.subr.mxu0 0.0
  %3057 = vmatpush1.msra.mxu0 0.0
  %3058 = vmatprep.subr.mxu0 0.0
  %3059 = vmatpush1.msra.mxu0 0.0
  %3060 = vmatprep.subr.mxu0 0.0
  %3061 = vmatpush1.msra.mxu0 0.0
  %3062 = vmatprep.subr.mxu0 0.0
  %3063 = vmatpush1.msra.mxu0 0.0
  %3064 = vmatprep.subr.mxu0 0.0
  %3065 = vmatpush1.msra.mxu0 0.0
  %3066 = vmatprep.subr.mxu0 0.0
  %3067 = vmatpush1.msra.mxu0 0.0
  %3068 = vmatprep.subr.mxu0 0.0
  %3069 = vmatpush1.msra.mxu0 0.0
  %3070 = vmatprep.subr.mxu0 0.0
  %3071 = vmatpush1.msra.mxu0 0.0
  %3072 = vmatprep.subr.mxu0 0.0
  %3073 = vmatpush1.msra.mxu0 0.0
  %3074 = vmatprep.subr.mxu0 0.0
  %3075 = vmatpush1.msra.mxu0 0.0
  %3076 = vmatprep.subr.mxu0 0.0
  %3077 = vmatpush1.msra.mxu0 0.0
  %3078 = vmatprep.subr.mxu0 0.0
  %3079 = vmatpush1.msra.mxu0 0.0
  %3080 = vmatprep.subr.mxu0 0.0
  %3081 = vmatpush1.msra.mxu0 0.0
  %3082 = vmatprep.subr.mxu0 0.0
  %3083 = vmatpush1.msra.mxu0 0.0
  %3084 = vmatprep.subr.mxu0 0.0
  %3085 = vmatpush1.msra.mxu0 0.0
  %3086 = vmatprep.subr.mxu0 0.0
  %3087 = vmatpush1.msra.mxu0 0.0
  %3088 = vmatprep.subr.mxu0 0.0
  %3089 = vmatpush1.msra.mxu0 0.0
  %3090 = vmatprep.subr.mxu0 0.0
  %3091 = vmatpush1.msra.mxu0 0.0
  %3092 = vmatprep.subr.mxu0 0.0
  %3093 = vmatpush1.msra.mxu0 0.0
  %3094 = vmatprep.subr.mxu0 0.0
  %3095 = vmatpush1.msra.mxu0 0.0
  %3096 = vmatprep.subr.mxu0 0.0
  %3097 = vmatpush1.msra.mxu0 0.0
  %3098 = vmatprep.subr.mxu0 0.0
  %3099 = vmatpush1.msra.mxu0 0.0
  %3100 = vmatprep.subr.mxu0 0.0
  %3101 = vmatpush1.msra.mxu0 0.0
  %3102 = vmatprep.subr.mxu0 0.0
  %3103 = vmatpush1.msra.mxu0 0.0
  %3104 = vmatprep.mubr.f32.mxu0 0.0
  %3105 = vmatmul.mubr.f32.gmra.mrb[0].mxu0 %v2604
  %v3106 = vpop.f32.mrb[0].mxu0
  %v3107 = vadd.f32 %v2586, %v3106
  %v3108 = vpop.f32.mrb[0].mxu0
  %3109 = vmatprep.mubr.f32.mxu0 0.0
  %3110 = vmatmul.mubr.f32.gmra.mrb[0].mxu0 %v2607
  %v3111 = vpop.f32.mrb[0].mxu0
  %v3112 = vadd.f32 %v2591, %v3111
  %v3113 = vpop.f32.mrb[0].mxu0
  %3114 = vmatprep.mubr.f32.mxu0 0.0
  %3115 = vmatmul.mubr.f32.gmra.mrb[0].mxu0 %v2610
  %v3116 = vpop.f32.mrb[0].mxu0
  %v3117 = vadd.f32 %v2596, %v3116
  %v3118 = vpop.f32.mrb[0].mxu0
  %3119 = vmatprep.mubr.f32.mxu0 0.0
  %3120 = vmatmul.mubr.f32.gmra.mrb[0].mxu0 %v2613
  %v3121 = vpop.f32.mrb[0].mxu0
  %v3122 = vadd.f32 %v2601, %v3121
  %v3123 = vpop.f32.mrb[0].mxu0
  %3124 = vdwg.mxu0
  %3125 = vmatprep.subr.mxu0 0.0
  %3126 = vmatpush1.msra.mxu0 %v2571
  %3127 = vmatprep.subr.mxu0 0.0
  %3128 = vmatpush1.msra.mxu0 0.0
  %3129 = vmatprep.subr.mxu0 0.0
  %3130 = vmatpush1.msra.mxu0 0.0
  %3131 = vmatprep.subr.mxu0 0.0
  %3132 = vmatpush1.msra.mxu0 0.0
  %3133 = vmatprep.subr.mxu0 0.0
  %3134 = vmatpush1.msra.mxu0 0.0
  %3135 = vmatprep.subr.mxu0 0.0
  %3136 = vmatpush1.msra.mxu0 0.0
  %3137 = vmatprep.subr.mxu0 0.0
  %3138 = vmatpush1.msra.mxu0 0.0
  %3139 = vmatprep.subr.mxu0 0.0
  %3140 = vmatpush1.msra.mxu0 0.0
  %3141 = vmatprep.subr.mxu0 0.0
  %3142 = vmatpush1.msra.mxu0 0.0
  %3143 = vmatprep.subr.mxu0 0.0
  %3144 = vmatpush1.msra.mxu0 0.0
  %3145 = vmatprep.subr.mxu0 0.0
  %3146 = vmatpush1.msra.mxu0 0.0
  %3147 = vmatprep.subr.mxu0 0.0
  %3148 = vmatpush1.msra.mxu0 0.0
  %3149 = vmatprep.subr.mxu0 0.0
  %3150 = vmatpush1.msra.mxu0 0.0
  %3151 = vmatprep.subr.mxu0 0.0
  %3152 = vmatpush1.msra.mxu0 0.0
  %3153 = vmatprep.subr.mxu0 0.0
  %3154 = vmatpush1.msra.mxu0 0.0
  %3155 = vmatprep.subr.mxu0 0.0
  %3156 = vmatpush1.msra.mxu0 0.0
  %3157 = vmatprep.subr.mxu0 0.0
  %3158 = vmatpush1.msra.mxu0 0.0
  %3159 = vmatprep.subr.mxu0 0.0
  %3160 = vmatpush1.msra.mxu0 0.0
  %3161 = vmatprep.subr.mxu0 0.0
  %3162 = vmatpush1.msra.mxu0 0.0
  %3163 = vmatprep.subr.mxu0 0.0
  %3164 = vmatpush1.msra.mxu0 0.0
  %3165 = vmatprep.subr.mxu0 0.0
  %3166 = vmatpush1.msra.mxu0 0.0
  %3167 = vmatprep.subr.mxu0 0.0
  %3168 = vmatpush1.msra.mxu0 0.0
  %3169 = vmatprep.subr.mxu0 0.0
  %3170 = vmatpush1.msra.mxu0 0.0
  %3171 = vmatprep.subr.mxu0 0.0
  %3172 = vmatpush1.msra.mxu0 0.0
  %3173 = vmatprep.subr.mxu0 0.0
  %3174 = vmatpush1.msra.mxu0 0.0
  %3175 = vmatprep.subr.mxu0 0.0
  %3176 = vmatpush1.msra.mxu0 0.0
  %3177 = vmatprep.subr.mxu0 0.0
  %3178 = vmatpush1.msra.mxu0 0.0
  %3179 = vmatprep.subr.mxu0 0.0
  %3180 = vmatpush1.msra.mxu0 0.0
  %3181 = vmatprep.subr.mxu0 0.0
  %3182 = vmatpush1.msra.mxu0 0.0
  %3183 = vmatprep.subr.mxu0 0.0
  %3184 = vmatpush1.msra.mxu0 0.0
  %3185 = vmatprep.subr.mxu0 0.0
  %3186 = vmatpush1.msra.mxu0 0.0
  %3187 = vmatprep.subr.mxu0 0.0
  %3188 = vmatpush1.msra.mxu0 0.0
  %3189 = vmatprep.mubr.f32.mxu0 0.0
  %3190 = vmatmul.mubr.f32.gmra.mrb[0].mxu0 %v2604
  %v3191 = vpop.f32.mrb[0].mxu0
  %v3192 = vadd.f32 %v2586, %v3191
  %v3193 = vpop.f32.mrb[0].mxu0
  %3194 = vmatprep.mubr.f32.mxu0 0.0
  %3195 = vmatmul.mubr.f32.gmra.mrb[0].mxu0 %v2607
  %v3196 = vpop.f32.mrb[0].mxu0
  %v3197 = vadd.f32 %v2591, %v3196
  %v3198 = vpop.f32.mrb[0].mxu0
  %3199 = vmatprep.mubr.f32.mxu0 0.0
  %3200 = vmatmul.mubr.f32.gmra.mrb[0].mxu0 %v2610
  %v3201 = vpop.f32.mrb[0].mxu0
  %v3202 = vadd.f32 %v2596, %v3201
  %v3203 = vpop.f32.mrb[0].mxu0
  %3204 = vmatprep.mubr.f32.mxu0 0.0
  %3205 = vmatmul.mubr.f32.gmra.mrb[0].mxu0 %v2613
  %v3206 = vpop.f32.mrb[0].mxu0
  %v3207 = vadd.f32 %v2601, %v3206
  %v3208 = vpop.f32.mrb[0].mxu0
  %3209 = vdwg.mxu0
  %3210 = vmatprep.subr.mxu0 0.0
  %3211 = vmatpush1.msra.mxu0 %v2572
  %3212 = vmatprep.subr.mxu0 0.0
  %3213 = vmatpush1.msra.mxu0 0.0
  %3214 = vmatprep.subr.mxu0 0.0
  %3215 = vmatpush1.msra.mxu0 0.0
  %3216 = vmatprep.subr.mxu0 0.0
  %3217 = vmatpush1.msra.mxu0 0.0
  %3218 = vmatprep.subr.mxu0 0.0
  %3219 = vmatpush1.msra.mxu0 0.0
  %3220 = vmatprep.subr.mxu0 0.0
  %3221 = vmatpush1.msra.mxu0 0.0
  %3222 = vmatprep.subr.mxu0 0.0
  %3223 = vmatpush1.msra.mxu0 0.0
  %3224 = vmatprep.subr.mxu0 0.0
  %3225 = vmatpush1.msra.mxu0 0.0
  %3226 = vmatprep.subr.mxu0 0.0
  %3227 = vmatpush1.msra.mxu0 0.0
  %3228 = vmatprep.subr.mxu0 0.0
  %3229 = vmatpush1.msra.mxu0 0.0
  %3230 = vmatprep.subr.mxu0 0.0
  %3231 = vmatpush1.msra.mxu0 0.0
  %3232 = vmatprep.subr.mxu0 0.0
  %3233 = vmatpush1.msra.mxu0 0.0
  %3234 = vmatprep.subr.mxu0 0.0
  %3235 = vmatpush1.msra.mxu0 0.0
  %3236 = vmatprep.subr.mxu0 0.0
  %3237 = vmatpush1.msra.mxu0 0.0
  %3238 = vmatprep.subr.mxu0 0.0
  %3239 = vmatpush1.msra.mxu0 0.0
  %3240 = vmatprep.subr.mxu0 0.0
  %3241 = vmatpush1.msra.mxu0 0.0
  %3242 = vmatprep.subr.mxu0 0.0
  %3243 = vmatpush1.msra.mxu0 0.0
  %3244 = vmatprep.subr.mxu0 0.0
  %3245 = vmatpush1.msra.mxu0 0.0
  %3246 = vmatprep.subr.mxu0 0.0
  %3247 = vmatpush1.msra.mxu0 0.0
  %3248 = vmatprep.subr.mxu0 0.0
  %3249 = vmatpush1.msra.mxu0 0.0
  %3250 = vmatprep.subr.mxu0 0.0
  %3251 = vmatpush1.msra.mxu0 0.0
  %3252 = vmatprep.subr.mxu0 0.0
  %3253 = vmatpush1.msra.mxu0 0.0
  %3254 = vmatprep.subr.mxu0 0.0
  %3255 = vmatpush1.msra.mxu0 0.0
  %3256 = vmatprep.subr.mxu0 0.0
  %3257 = vmatpush1.msra.mxu0 0.0
  %3258 = vmatprep.subr.mxu0 0.0
  %3259 = vmatpush1.msra.mxu0 0.0
  %3260 = vmatprep.subr.mxu0 0.0
  %3261 = vmatpush1.msra.mxu0 0.0
  %3262 = vmatprep.subr.mxu0 0.0
  %3263 = vmatpush1.msra.mxu0 0.0
  %3264 = vmatprep.subr.mxu0 0.0
  %3265 = vmatpush1.msra.mxu0 0.0
  %3266 = vmatprep.subr.mxu0 0.0
  %3267 = vmatpush1.msra.mxu0 0.0
  %3268 = vmatprep.subr.mxu0 0.0
  %3269 = vmatpush1.msra.mxu0 0.0
  %3270 = vmatprep.subr.mxu0 0.0
  %3271 = vmatpush1.msra.mxu0 0.0
  %3272 = vmatprep.subr.mxu0 0.0
  %3273 = vmatpush1.msra.mxu0 0.0
  %3274 = vmatprep.mubr.f32.mxu0 0.0
  %3275 = vmatmul.mubr.f32.gmra.mrb[0].mxu0 %v2604
  %v3276 = vpop.f32.mrb[0].mxu0
  %v3277 = vadd.f32 %v2586, %v3276
  %v3278 = vpop.f32.mrb[0].mxu0
  %3279 = vmatprep.mubr.f32.mxu0 0.0
  %3280 = vmatmul.mubr.f32.gmra.mrb[0].mxu0 %v2607
  %v3281 = vpop.f32.mrb[0].mxu0
  %v3282 = vadd.f32 %v2591, %v3281
  %v3283 = vpop.f32.mrb[0].mxu0
  %3284 = vmatprep.mubr.f32.mxu0 0.0
  %3285 = vmatmul.mubr.f32.gmra.mrb[0].mxu0 %v2610
  %v3286 = vpop.f32.mrb[0].mxu0
  %v3287 = vadd.f32 %v2596, %v3286
  %v3288 = vpop.f32.mrb[0].mxu0
  %3289 = vmatprep.mubr.f32.mxu0 0.0
  %3290 = vmatmul.mubr.f32.gmra.mrb[0].mxu0 %v2613
  %v3291 = vpop.f32.mrb[0].mxu0
  %v3292 = vadd.f32 %v2601, %v3291
  %v3293 = vpop.f32.mrb[0].mxu0
  %3294 = vdwg.mxu0
  %v3295 = vmax.f32 %v2682, 0.0
  %v3296 = vmax.f32 %v2687, 0.0
  %v3297 = vmax.f32 %v2692, 0.0
  %v3298 = vmax.f32 %v2697, 0.0
  %v3299 = vmax.f32 %v2767, 0.0
  %v3300 = vmax.f32 %v2772, 0.0
  %v3301 = vmax.f32 %v2777, 0.0
  %v3302 = vmax.f32 %v2782, 0.0
  %v3303 = vmax.f32 %v2852, 0.0
  %v3304 = vmax.f32 %v2857, 0.0
  %v3305 = vmax.f32 %v2862, 0.0
  %v3306 = vmax.f32 %v2867, 0.0
  %v3307 = vmax.f32 %v2937, 0.0
  %v3308 = vmax.f32 %v2942, 0.0
  %v3309 = vmax.f32 %v2947, 0.0
  %v3310 = vmax.f32 %v2952, 0.0
  %v3311 = vmax.f32 %v3022, 0.0
  %v3312 = vmax.f32 %v3027, 0.0
  %v3313 = vmax.f32 %v3032, 0.0
  %v3314 = vmax.f32 %v3037, 0.0
  %v3315 = vmax.f32 %v3107, 0.0
  %v3316 = vmax.f32 %v3112, 0.0
  %v3317 = vmax.f32 %v3117, 0.0
  %v3318 = vmax.f32 %v3122, 0.0
  %v3319 = vmax.f32 %v3192, 0.0
  %v3320 = vmax.f32 %v3197, 0.0
  %v3321 = vmax.f32 %v3202, 0.0
  %v3322 = vmax.f32 %v3207, 0.0
  %v3323 = vmax.f32 %v3277, 0.0
  %v3324 = vmax.f32 %v3282, 0.0
  %v3325 = vmax.f32 %v3287, 0.0
  %v3326 = vmax.f32 %v3292, 0.0
  %s3327 = scalar_lea.vmem %s9, 8
  %v3328 = vld [vmem:[%s3327] sm:$0xff]
  %v3330 = vsel %vm1396, %v3328, 0
  %3332 = vmatprep.subr.mxu0 0.0
  %3333 = vmatpush1.msra.mxu0 %v3295
  %3334 = vmatprep.subr.mxu0 0.0
  %3335 = vmatpush1.msra.mxu0 %v3296
  %3336 = vmatprep.subr.mxu0 0.0
  %3337 = vmatpush1.msra.mxu0 %v3297
  %3338 = vmatprep.subr.mxu0 0.0
  %3339 = vmatpush1.msra.mxu0 %v3298
  %3340 = vmatprep.subr.mxu0 0.0
  %3341 = vmatpush1.msra.mxu0 0.0
  %3342 = vmatprep.subr.mxu0 0.0
  %3343 = vmatpush1.msra.mxu0 0.0
  %3344 = vmatprep.subr.mxu0 0.0
  %3345 = vmatpush1.msra.mxu0 0.0
  %3346 = vmatprep.subr.mxu0 0.0
  %3347 = vmatpush1.msra.mxu0 0.0
  %3348 = vmatprep.subr.mxu0 0.0
  %3349 = vmatpush1.msra.mxu0 0.0
  %3350 = vmatprep.subr.mxu0 0.0
  %3351 = vmatpush1.msra.mxu0 0.0
  %3352 = vmatprep.subr.mxu0 0.0
  %3353 = vmatpush1.msra.mxu0 0.0
  %3354 = vmatprep.subr.mxu0 0.0
  %3355 = vmatpush1.msra.mxu0 0.0
  %3356 = vmatprep.subr.mxu0 0.0
  %3357 = vmatpush1.msra.mxu0 0.0
  %3358 = vmatprep.subr.mxu0 0.0
  %3359 = vmatpush1.msra.mxu0 0.0
  %3360 = vmatprep.subr.mxu0 0.0
  %3361 = vmatpush1.msra.mxu0 0.0
  %3362 = vmatprep.subr.mxu0 0.0
  %3363 = vmatpush1.msra.mxu0 0.0
  %3364 = vmatprep.subr.mxu0 0.0
  %3365 = vmatpush1.msra.mxu0 0.0
  %3366 = vmatprep.subr.mxu0 0.0
  %3367 = vmatpush1.msra.mxu0 0.0
  %3368 = vmatprep.subr.mxu0 0.0
  %3369 = vmatpush1.msra.mxu0 0.0
  %3370 = vmatprep.subr.mxu0 0.0
  %3371 = vmatpush1.msra.mxu0 0.0
  %3372 = vmatprep.subr.mxu0 0.0
  %3373 = vmatpush1.msra.mxu0 0.0
  %3374 = vmatprep.subr.mxu0 0.0
  %3375 = vmatpush1.msra.mxu0 0.0
  %3376 = vmatprep.subr.mxu0 0.0
  %3377 = vmatpush1.msra.mxu0 0.0
  %3378 = vmatprep.subr.mxu0 0.0
  %3379 = vmatpush1.msra.mxu0 0.0
  %3380 = vmatprep.subr.mxu0 0.0
  %3381 = vmatpush1.msra.mxu0 0.0
  %3382 = vmatprep.subr.mxu0 0.0
  %3383 = vmatpush1.msra.mxu0 0.0
  %3384 = vmatprep.subr.mxu0 0.0
  %3385 = vmatpush1.msra.mxu0 0.0
  %3386 = vmatprep.subr.mxu0 0.0
  %3387 = vmatpush1.msra.mxu0 0.0
  %3388 = vmatprep.subr.mxu0 0.0
  %3389 = vmatpush1.msra.mxu0 0.0
  %3390 = vmatprep.subr.mxu0 0.0
  %3391 = vmatpush1.msra.mxu0 0.0
  %3392 = vmatprep.subr.mxu0 0.0
  %3393 = vmatpush1.msra.mxu0 0.0
  %3394 = vmatprep.subr.mxu0 0.0
  %3395 = vmatpush1.msra.mxu0 0.0
  %3396 = vmatprep.mubr.f32.mxu0 0.0
  %3397 = vmatmul.mubr.f32.gmra.mrb[0].mxu0 %v3330
  %v3398 = vpop.f32.mrb[0].mxu0
  %v3399 = vadd.f32 0.0, %v3398
  %v3400 = vpop.f32.mrb[0].mxu0
  %3401 = vdwg.mxu0
  %3402 = vmatprep.subr.mxu0 0.0
  %3403 = vmatpush1.msra.mxu0 %v3299
  %3404 = vmatprep.subr.mxu0 0.0
  %3405 = vmatpush1.msra.mxu0 %v3300
  %3406 = vmatprep.subr.mxu0 0.0
  %3407 = vmatpush1.msra.mxu0 %v3301
  %3408 = vmatprep.subr.mxu0 0.0
  %3409 = vmatpush1.msra.mxu0 %v3302
  %3410 = vmatprep.subr.mxu0 0.0
  %3411 = vmatpush1.msra.mxu0 0.0
  %3412 = vmatprep.subr.mxu0 0.0
  %3413 = vmatpush1.msra.mxu0 0.0
  %3414 = vmatprep.subr.mxu0 0.0
  %3415 = vmatpush1.msra.mxu0 0.0
  %3416 = vmatprep.subr.mxu0 0.0
  %3417 = vmatpush1.msra.mxu0 0.0
  %3418 = vmatprep.subr.mxu0 0.0
  %3419 = vmatpush1.msra.mxu0 0.0
  %3420 = vmatprep.subr.mxu0 0.0
  %3421 = vmatpush1.msra.mxu0 0.0
  %3422 = vmatprep.subr.mxu0 0.0
  %3423 = vmatpush1.msra.mxu0 0.0
  %3424 = vmatprep.subr.mxu0 0.0
  %3425 = vmatpush1.msra.mxu0 0.0
  %3426 = vmatprep.subr.mxu0 0.0
  %3427 = vmatpush1.msra.mxu0 0.0
  %3428 = vmatprep.subr.mxu0 0.0
  %3429 = vmatpush1.msra.mxu0 0.0
  %3430 = vmatprep.subr.mxu0 0.0
  %3431 = vmatpush1.msra.mxu0 0.0
  %3432 = vmatprep.subr.mxu0 0.0
  %3433 = vmatpush1.msra.mxu0 0.0
  %3434 = vmatprep.subr.mxu0 0.0
  %3435 = vmatpush1.msra.mxu0 0.0
  %3436 = vmatprep.subr.mxu0 0.0
  %3437 = vmatpush1.msra.mxu0 0.0
  %3438 = vmatprep.subr.mxu0 0.0
  %3439 = vmatpush1.msra.mxu0 0.0
  %3440 = vmatprep.subr.mxu0 0.0
  %3441 = vmatpush1.msra.mxu0 0.0
  %3442 = vmatprep.subr.mxu0 0.0
  %3443 = vmatpush1.msra.mxu0 0.0
  %3444 = vmatprep.subr.mxu0 0.0
  %3445 = vmatpush1.msra.mxu0 0.0
  %3446 = vmatprep.subr.mxu0 0.0
  %3447 = vmatpush1.msra.mxu0 0.0
  %3448 = vmatprep.subr.mxu0 0.0
  %3449 = vmatpush1.msra.mxu0 0.0
  %3450 = vmatprep.subr.mxu0 0.0
  %3451 = vmatpush1.msra.mxu0 0.0
  %3452 = vmatprep.subr.mxu0 0.0
  %3453 = vmatpush1.msra.mxu0 0.0
  %3454 = vmatprep.subr.mxu0 0.0
  %3455 = vmatpush1.msra.mxu0 0.0
  %3456 = vmatprep.subr.mxu0 0.0
  %3457 = vmatpush1.msra.mxu0 0.0
  %3458 = vmatprep.subr.mxu0 0.0
  %3459 = vmatpush1.msra.mxu0 0.0
  %3460 = vmatprep.subr.mxu0 0.0
  %3461 = vmatpush1.msra.mxu0 0.0
  %3462 = vmatprep.subr.mxu0 0.0
  %3463 = vmatpush1.msra.mxu0 0.0
  %3464 = vmatprep.subr.mxu0 0.0
  %3465 = vmatpush1.msra.mxu0 0.0
  %3466 = vmatprep.mubr.f32.mxu0 0.0
  %3467 = vmatmul.mubr.f32.gmra.mrb[0].mxu0 %v3330
  %v3468 = vpop.f32.mrb[0].mxu0
  %v3469 = vadd.f32 0.0, %v3468
  %v3470 = vpop.f32.mrb[0].mxu0
  %3471 = vdwg.mxu0
  %3472 = vmatprep.subr.mxu0 0.0
  %3473 = vmatpush1.msra.mxu0 %v3303
  %3474 = vmatprep.subr.mxu0 0.0
  %3475 = vmatpush1.msra.mxu0 %v3304
  %3476 = vmatprep.subr.mxu0 0.0
  %3477 = vmatpush1.msra.mxu0 %v3305
  %3478 = vmatprep.subr.mxu0 0.0
  %3479 = vmatpush1.msra.mxu0 %v3306
  %3480 = vmatprep.subr.mxu0 0.0
  %3481 = vmatpush1.msra.mxu0 0.0
  %3482 = vmatprep.subr.mxu0 0.0
  %3483 = vmatpush1.msra.mxu0 0.0
  %3484 = vmatprep.subr.mxu0 0.0
  %3485 = vmatpush1.msra.mxu0 0.0
  %3486 = vmatprep.subr.mxu0 0.0
  %3487 = vmatpush1.msra.mxu0 0.0
  %3488 = vmatprep.subr.mxu0 0.0
  %3489 = vmatpush1.msra.mxu0 0.0
  %3490 = vmatprep.subr.mxu0 0.0
  %3491 = vmatpush1.msra.mxu0 0.0
  %3492 = vmatprep.subr.mxu0 0.0
  %3493 = vmatpush1.msra.mxu0 0.0
  %3494 = vmatprep.subr.mxu0 0.0
  %3495 = vmatpush1.msra.mxu0 0.0
  %3496 = vmatprep.subr.mxu0 0.0
  %3497 = vmatpush1.msra.mxu0 0.0
  %3498 = vmatprep.subr.mxu0 0.0
  %3499 = vmatpush1.msra.mxu0 0.0
  %3500 = vmatprep.subr.mxu0 0.0
  %3501 = vmatpush1.msra.mxu0 0.0
  %3502 = vmatprep.subr.mxu0 0.0
  %3503 = vmatpush1.msra.mxu0 0.0
  %3504 = vmatprep.subr.mxu0 0.0
  %3505 = vmatpush1.msra.mxu0 0.0
  %3506 = vmatprep.subr.mxu0 0.0
  %3507 = vmatpush1.msra.mxu0 0.0
  %3508 = vmatprep.subr.mxu0 0.0
  %3509 = vmatpush1.msra.mxu0 0.0
  %3510 = vmatprep.subr.mxu0 0.0
  %3511 = vmatpush1.msra.mxu0 0.0
  %3512 = vmatprep.subr.mxu0 0.0
  %3513 = vmatpush1.msra.mxu0 0.0
  %3514 = vmatprep.subr.mxu0 0.0
  %3515 = vmatpush1.msra.mxu0 0.0
  %3516 = vmatprep.subr.mxu0 0.0
  %3517 = vmatpush1.msra.mxu0 0.0
  %3518 = vmatprep.subr.mxu0 0.0
  %3519 = vmatpush1.msra.mxu0 0.0
  %3520 = vmatprep.subr.mxu0 0.0
  %3521 = vmatpush1.msra.mxu0 0.0
  %3522 = vmatprep.subr.mxu0 0.0
  %3523 = vmatpush1.msra.mxu0 0.0
  %3524 = vmatprep.subr.mxu0 0.0
  %3525 = vmatpush1.msra.mxu0 0.0
  %3526 = vmatprep.subr.mxu0 0.0
  %3527 = vmatpush1.msra.mxu0 0.0
  %3528 = vmatprep.subr.mxu0 0.0
  %3529 = vmatpush1.msra.mxu0 0.0
  %3530 = vmatprep.subr.mxu0 0.0
  %3531 = vmatpush1.msra.mxu0 0.0
  %3532 = vmatprep.subr.mxu0 0.0
  %3533 = vmatpush1.msra.mxu0 0.0
  %3534 = vmatprep.subr.mxu0 0.0
  %3535 = vmatpush1.msra.mxu0 0.0
  %3536 = vmatprep.mubr.f32.mxu0 0.0
  %3537 = vmatmul.mubr.f32.gmra.mrb[0].mxu0 %v3330
  %v3538 = vpop.f32.mrb[0].mxu0
  %v3539 = vadd.f32 0.0, %v3538
  %v3540 = vpop.f32.mrb[0].mxu0
  %3541 = vdwg.mxu0
  %3542 = vmatprep.subr.mxu0 0.0
  %3543 = vmatpush1.msra.mxu0 %v3307
  %3544 = vmatprep.subr.mxu0 0.0
  %3545 = vmatpush1.msra.mxu0 %v3308
  %3546 = vmatprep.subr.mxu0 0.0
  %3547 = vmatpush1.msra.mxu0 %v3309
  %3548 = vmatprep.subr.mxu0 0.0
  %3549 = vmatpush1.msra.mxu0 %v3310
  %3550 = vmatprep.subr.mxu0 0.0
  %3551 = vmatpush1.msra.mxu0 0.0
  %3552 = vmatprep.subr.mxu0 0.0
  %3553 = vmatpush1.msra.mxu0 0.0
  %3554 = vmatprep.subr.mxu0 0.0
  %3555 = vmatpush1.msra.mxu0 0.0
  %3556 = vmatprep.subr.mxu0 0.0
  %3557 = vmatpush1.msra.mxu0 0.0
  %3558 = vmatprep.subr.mxu0 0.0
  %3559 = vmatpush1.msra.mxu0 0.0
  %3560 = vmatprep.subr.mxu0 0.0
  %3561 = vmatpush1.msra.mxu0 0.0
  %3562 = vmatprep.subr.mxu0 0.0
  %3563 = vmatpush1.msra.mxu0 0.0
  %3564 = vmatprep.subr.mxu0 0.0
  %3565 = vmatpush1.msra.mxu0 0.0
  %3566 = vmatprep.subr.mxu0 0.0
  %3567 = vmatpush1.msra.mxu0 0.0
  %3568 = vmatprep.subr.mxu0 0.0
  %3569 = vmatpush1.msra.mxu0 0.0
  %3570 = vmatprep.subr.mxu0 0.0
  %3571 = vmatpush1.msra.mxu0 0.0
  %3572 = vmatprep.subr.mxu0 0.0
  %3573 = vmatpush1.msra.mxu0 0.0
  %3574 = vmatprep.subr.mxu0 0.0
  %3575 = vmatpush1.msra.mxu0 0.0
  %3576 = vmatprep.subr.mxu0 0.0
  %3577 = vmatpush1.msra.mxu0 0.0
  %3578 = vmatprep.subr.mxu0 0.0
  %3579 = vmatpush1.msra.mxu0 0.0
  %3580 = vmatprep.subr.mxu0 0.0
  %3581 = vmatpush1.msra.mxu0 0.0
  %3582 = vmatprep.subr.mxu0 0.0
  %3583 = vmatpush1.msra.mxu0 0.0
  %3584 = vmatprep.subr.mxu0 0.0
  %3585 = vmatpush1.msra.mxu0 0.0
  %3586 = vmatprep.subr.mxu0 0.0
  %3587 = vmatpush1.msra.mxu0 0.0
  %3588 = vmatprep.subr.mxu0 0.0
  %3589 = vmatpush1.msra.mxu0 0.0
  %3590 = vmatprep.subr.mxu0 0.0
  %3591 = vmatpush1.msra.mxu0 0.0
  %3592 = vmatprep.subr.mxu0 0.0
  %3593 = vmatpush1.msra.mxu0 0.0
  %3594 = vmatprep.subr.mxu0 0.0
  %3595 = vmatpush1.msra.mxu0 0.0
  %3596 = vmatprep.subr.mxu0 0.0
  %3597 = vmatpush1.msra.mxu0 0.0
  %3598 = vmatprep.subr.mxu0 0.0
  %3599 = vmatpush1.msra.mxu0 0.0
  %3600 = vmatprep.subr.mxu0 0.0
  %3601 = vmatpush1.msra.mxu0 0.0
  %3602 = vmatprep.subr.mxu0 0.0
  %3603 = vmatpush1.msra.mxu0 0.0
  %3604 = vmatprep.subr.mxu0 0.0
  %3605 = vmatpush1.msra.mxu0 0.0
  %3606 = vmatprep.mubr.f32.mxu0 0.0
  %3607 = vmatmul.mubr.f32.gmra.mrb[0].mxu0 %v3330
  %v3608 = vpop.f32.mrb[0].mxu0
  %v3609 = vadd.f32 0.0, %v3608
  %v3610 = vpop.f32.mrb[0].mxu0
  %3611 = vdwg.mxu0
  %3612 = vmatprep.subr.mxu0 0.0
  %3613 = vmatpush1.msra.mxu0 %v3311
  %3614 = vmatprep.subr.mxu0 0.0
  %3615 = vmatpush1.msra.mxu0 %v3312
  %3616 = vmatprep.subr.mxu0 0.0
  %3617 = vmatpush1.msra.mxu0 %v3313
  %3618 = vmatprep.subr.mxu0 0.0
  %3619 = vmatpush1.msra.mxu0 %v3314
  %3620 = vmatprep.subr.mxu0 0.0
  %3621 = vmatpush1.msra.mxu0 0.0
  %3622 = vmatprep.subr.mxu0 0.0
  %3623 = vmatpush1.msra.mxu0 0.0
  %3624 = vmatprep.subr.mxu0 0.0
  %3625 = vmatpush1.msra.mxu0 0.0
  %3626 = vmatprep.subr.mxu0 0.0
  %3627 = vmatpush1.msra.mxu0 0.0
  %3628 = vmatprep.subr.mxu0 0.0
  %3629 = vmatpush1.msra.mxu0 0.0
  %3630 = vmatprep.subr.mxu0 0.0
  %3631 = vmatpush1.msra.mxu0 0.0
  %3632 = vmatprep.subr.mxu0 0.0
  %3633 = vmatpush1.msra.mxu0 0.0
  %3634 = vmatprep.subr.mxu0 0.0
  %3635 = vmatpush1.msra.mxu0 0.0
  %3636 = vmatprep.subr.mxu0 0.0
  %3637 = vmatpush1.msra.mxu0 0.0
  %3638 = vmatprep.subr.mxu0 0.0
  %3639 = vmatpush1.msra.mxu0 0.0
  %3640 = vmatprep.subr.mxu0 0.0
  %3641 = vmatpush1.msra.mxu0 0.0
  %3642 = vmatprep.subr.mxu0 0.0
  %3643 = vmatpush1.msra.mxu0 0.0
  %3644 = vmatprep.subr.mxu0 0.0
  %3645 = vmatpush1.msra.mxu0 0.0
  %3646 = vmatprep.subr.mxu0 0.0
  %3647 = vmatpush1.msra.mxu0 0.0
  %3648 = vmatprep.subr.mxu0 0.0
  %3649 = vmatpush1.msra.mxu0 0.0
  %3650 = vmatprep.subr.mxu0 0.0
  %3651 = vmatpush1.msra.mxu0 0.0
  %3652 = vmatprep.subr.mxu0 0.0
  %3653 = vmatpush1.msra.mxu0 0.0
  %3654 = vmatprep.subr.mxu0 0.0
  %3655 = vmatpush1.msra.mxu0 0.0
  %3656 = vmatprep.subr.mxu0 0.0
  %3657 = vmatpush1.msra.mxu0 0.0
  %3658 = vmatprep.subr.mxu0 0.0
  %3659 = vmatpush1.msra.mxu0 0.0
  %3660 = vmatprep.subr.mxu0 0.0
  %3661 = vmatpush1.msra.mxu0 0.0
  %3662 = vmatprep.subr.mxu0 0.0
  %3663 = vmatpush1.msra.mxu0 0.0
  %3664 = vmatprep.subr.mxu0 0.0
  %3665 = vmatpush1.msra.mxu0 0.0
  %3666 = vmatprep.subr.mxu0 0.0
  %3667 = vmatpush1.msra.mxu0 0.0
  %3668 = vmatprep.subr.mxu0 0.0
  %3669 = vmatpush1.msra.mxu0 0.0
  %3670 = vmatprep.subr.mxu0 0.0
  %3671 = vmatpush1.msra.mxu0 0.0
  %3672 = vmatprep.subr.mxu0 0.0
  %3673 = vmatpush1.msra.mxu0 0.0
  %3674 = vmatprep.subr.mxu0 0.0
  %3675 = vmatpush1.msra.mxu0 0.0
  %3676 = vmatprep.mubr.f32.mxu0 0.0
  %3677 = vmatmul.mubr.f32.gmra.mrb[0].mxu0 %v3330
  %v3678 = vpop.f32.mrb[0].mxu0
  %v3679 = vadd.f32 0.0, %v3678
  %v3680 = vpop.f32.mrb[0].mxu0
  %3681 = vdwg.mxu0
  %3682 = vmatprep.subr.mxu0 0.0
  %3683 = vmatpush1.msra.mxu0 %v3315
  %3684 = vmatprep.subr.mxu0 0.0
  %3685 = vmatpush1.msra.mxu0 %v3316
  %3686 = vmatprep.subr.mxu0 0.0
  %3687 = vmatpush1.msra.mxu0 %v3317
  %3688 = vmatprep.subr.mxu0 0.0
  %3689 = vmatpush1.msra.mxu0 %v3318
  %3690 = vmatprep.subr.mxu0 0.0
  %3691 = vmatpush1.msra.mxu0 0.0
  %3692 = vmatprep.subr.mxu0 0.0
  %3693 = vmatpush1.msra.mxu0 0.0
  %3694 = vmatprep.subr.mxu0 0.0
  %3695 = vmatpush1.msra.mxu0 0.0
  %3696 = vmatprep.subr.mxu0 0.0
  %3697 = vmatpush1.msra.mxu0 0.0
  %3698 = vmatprep.subr.mxu0 0.0
  %3699 = vmatpush1.msra.mxu0 0.0
  %3700 = vmatprep.subr.mxu0 0.0
  %3701 = vmatpush1.msra.mxu0 0.0
  %3702 = vmatprep.subr.mxu0 0.0
  %3703 = vmatpush1.msra.mxu0 0.0
  %3704 = vmatprep.subr.mxu0 0.0
  %3705 = vmatpush1.msra.mxu0 0.0
  %3706 = vmatprep.subr.mxu0 0.0
  %3707 = vmatpush1.msra.mxu0 0.0
  %3708 = vmatprep.subr.mxu0 0.0
  %3709 = vmatpush1.msra.mxu0 0.0
  %3710 = vmatprep.subr.mxu0 0.0
  %3711 = vmatpush1.msra.mxu0 0.0
  %3712 = vmatprep.subr.mxu0 0.0
  %3713 = vmatpush1.msra.mxu0 0.0
  %3714 = vmatprep.subr.mxu0 0.0
  %3715 = vmatpush1.msra.mxu0 0.0
  %3716 = vmatprep.subr.mxu0 0.0
  %3717 = vmatpush1.msra.mxu0 0.0
  %3718 = vmatprep.subr.mxu0 0.0
  %3719 = vmatpush1.msra.mxu0 0.0
  %3720 = vmatprep.subr.mxu0 0.0
  %3721 = vmatpush1.msra.mxu0 0.0
  %3722 = vmatprep.subr.mxu0 0.0
  %3723 = vmatpush1.msra.mxu0 0.0
  %3724 = vmatprep.subr.mxu0 0.0
  %3725 = vmatpush1.msra.mxu0 0.0
  %3726 = vmatprep.subr.mxu0 0.0
  %3727 = vmatpush1.msra.mxu0 0.0
  %3728 = vmatprep.subr.mxu0 0.0
  %3729 = vmatpush1.msra.mxu0 0.0
  %3730 = vmatprep.subr.mxu0 0.0
  %3731 = vmatpush1.msra.mxu0 0.0
  %3732 = vmatprep.subr.mxu0 0.0
  %3733 = vmatpush1.msra.mxu0 0.0
  %3734 = vmatprep.subr.mxu0 0.0
  %3735 = vmatpush1.msra.mxu0 0.0
  %3736 = vmatprep.subr.mxu0 0.0
  %3737 = vmatpush1.msra.mxu0 0.0
  %3738 = vmatprep.subr.mxu0 0.0
  %3739 = vmatpush1.msra.mxu0 0.0
  %3740 = vmatprep.subr.mxu0 0.0
  %3741 = vmatpush1.msra.mxu0 0.0
  %3742 = vmatprep.subr.mxu0 0.0
  %3743 = vmatpush1.msra.mxu0 0.0
  %3744 = vmatprep.subr.mxu0 0.0
  %3745 = vmatpush1.msra.mxu0 0.0
  %3746 = vmatprep.mubr.f32.mxu0 0.0
  %3747 = vmatmul.mubr.f32.gmra.mrb[0].mxu0 %v3330
  %v3748 = vpop.f32.mrb[0].mxu0
  %v3749 = vadd.f32 0.0, %v3748
  %v3750 = vpop.f32.mrb[0].mxu0
  %3751 = vdwg.mxu0
  %3752 = vmatprep.subr.mxu0 0.0
  %3753 = vmatpush1.msra.mxu0 %v3319
  %3754 = vmatprep.subr.mxu0 0.0
  %3755 = vmatpush1.msra.mxu0 %v3320
  %3756 = vmatprep.subr.mxu0 0.0
  %3757 = vmatpush1.msra.mxu0 %v3321
  %3758 = vmatprep.subr.mxu0 0.0
  %3759 = vmatpush1.msra.mxu0 %v3322
  %3760 = vmatprep.subr.mxu0 0.0
  %3761 = vmatpush1.msra.mxu0 0.0
  %3762 = vmatprep.subr.mxu0 0.0
  %3763 = vmatpush1.msra.mxu0 0.0
  %3764 = vmatprep.subr.mxu0 0.0
  %3765 = vmatpush1.msra.mxu0 0.0
  %3766 = vmatprep.subr.mxu0 0.0
  %3767 = vmatpush1.msra.mxu0 0.0
  %3768 = vmatprep.subr.mxu0 0.0
  %3769 = vmatpush1.msra.mxu0 0.0
  %3770 = vmatprep.subr.mxu0 0.0
  %3771 = vmatpush1.msra.mxu0 0.0
  %3772 = vmatprep.subr.mxu0 0.0
  %3773 = vmatpush1.msra.mxu0 0.0
  %3774 = vmatprep.subr.mxu0 0.0
  %3775 = vmatpush1.msra.mxu0 0.0
  %3776 = vmatprep.subr.mxu0 0.0
  %3777 = vmatpush1.msra.mxu0 0.0
  %3778 = vmatprep.subr.mxu0 0.0
  %3779 = vmatpush1.msra.mxu0 0.0
  %3780 = vmatprep.subr.mxu0 0.0
  %3781 = vmatpush1.msra.mxu0 0.0
  %3782 = vmatprep.subr.mxu0 0.0
  %3783 = vmatpush1.msra.mxu0 0.0
  %3784 = vmatprep.subr.mxu0 0.0
  %3785 = vmatpush1.msra.mxu0 0.0
  %3786 = vmatprep.subr.mxu0 0.0
  %3787 = vmatpush1.msra.mxu0 0.0
  %3788 = vmatprep.subr.mxu0 0.0
  %3789 = vmatpush1.msra.mxu0 0.0
  %3790 = vmatprep.subr.mxu0 0.0
  %3791 = vmatpush1.msra.mxu0 0.0
  %3792 = vmatprep.subr.mxu0 0.0
  %3793 = vmatpush1.msra.mxu0 0.0
  %3794 = vmatprep.subr.mxu0 0.0
  %3795 = vmatpush1.msra.mxu0 0.0
  %3796 = vmatprep.subr.mxu0 0.0
  %3797 = vmatpush1.msra.mxu0 0.0
  %3798 = vmatprep.subr.mxu0 0.0
  %3799 = vmatpush1.msra.mxu0 0.0
  %3800 = vmatprep.subr.mxu0 0.0
  %3801 = vmatpush1.msra.mxu0 0.0
  %3802 = vmatprep.subr.mxu0 0.0
  %3803 = vmatpush1.msra.mxu0 0.0
  %3804 = vmatprep.subr.mxu0 0.0
  %3805 = vmatpush1.msra.mxu0 0.0
  %3806 = vmatprep.subr.mxu0 0.0
  %3807 = vmatpush1.msra.mxu0 0.0
  %3808 = vmatprep.subr.mxu0 0.0
  %3809 = vmatpush1.msra.mxu0 0.0
  %3810 = vmatprep.subr.mxu0 0.0
  %3811 = vmatpush1.msra.mxu0 0.0
  %3812 = vmatprep.subr.mxu0 0.0
  %3813 = vmatpush1.msra.mxu0 0.0
  %3814 = vmatprep.subr.mxu0 0.0
  %3815 = vmatpush1.msra.mxu0 0.0
  %3816 = vmatprep.mubr.f32.mxu0 0.0
  %3817 = vmatmul.mubr.f32.gmra.mrb[0].mxu0 %v3330
  %v3818 = vpop.f32.mrb[0].mxu0
  %v3819 = vadd.f32 0.0, %v3818
  %v3820 = vpop.f32.mrb[0].mxu0
  %3821 = vdwg.mxu0
  %3822 = vmatprep.subr.mxu0 0.0
  %3823 = vmatpush1.msra.mxu0 %v3323
  %3824 = vmatprep.subr.mxu0 0.0
  %3825 = vmatpush1.msra.mxu0 %v3324
  %3826 = vmatprep.subr.mxu0 0.0
  %3827 = vmatpush1.msra.mxu0 %v3325
  %3828 = vmatprep.subr.mxu0 0.0
  %3829 = vmatpush1.msra.mxu0 %v3326
  %3830 = vmatprep.subr.mxu0 0.0
  %3831 = vmatpush1.msra.mxu0 0.0
  %3832 = vmatprep.subr.mxu0 0.0
  %3833 = vmatpush1.msra.mxu0 0.0
  %3834 = vmatprep.subr.mxu0 0.0
  %3835 = vmatpush1.msra.mxu0 0.0
  %3836 = vmatprep.subr.mxu0 0.0
  %3837 = vmatpush1.msra.mxu0 0.0
  %3838 = vmatprep.subr.mxu0 0.0
  %3839 = vmatpush1.msra.mxu0 0.0
  %3840 = vmatprep.subr.mxu0 0.0
  %3841 = vmatpush1.msra.mxu0 0.0
  %3842 = vmatprep.subr.mxu0 0.0
  %3843 = vmatpush1.msra.mxu0 0.0
  %3844 = vmatprep.subr.mxu0 0.0
  %3845 = vmatpush1.msra.mxu0 0.0
  %3846 = vmatprep.subr.mxu0 0.0
  %3847 = vmatpush1.msra.mxu0 0.0
  %3848 = vmatprep.subr.mxu0 0.0
  %3849 = vmatpush1.msra.mxu0 0.0
  %3850 = vmatprep.subr.mxu0 0.0
  %3851 = vmatpush1.msra.mxu0 0.0
  %3852 = vmatprep.subr.mxu0 0.0
  %3853 = vmatpush1.msra.mxu0 0.0
  %3854 = vmatprep.subr.mxu0 0.0
  %3855 = vmatpush1.msra.mxu0 0.0
  %3856 = vmatprep.subr.mxu0 0.0
  %3857 = vmatpush1.msra.mxu0 0.0
  %3858 = vmatprep.subr.mxu0 0.0
  %3859 = vmatpush1.msra.mxu0 0.0
  %3860 = vmatprep.subr.mxu0 0.0
  %3861 = vmatpush1.msra.mxu0 0.0
  %3862 = vmatprep.subr.mxu0 0.0
  %3863 = vmatpush1.msra.mxu0 0.0
  %3864 = vmatprep.subr.mxu0 0.0
  %3865 = vmatpush1.msra.mxu0 0.0
  %3866 = vmatprep.subr.mxu0 0.0
  %3867 = vmatpush1.msra.mxu0 0.0
  %3868 = vmatprep.subr.mxu0 0.0
  %3869 = vmatpush1.msra.mxu0 0.0
  %3870 = vmatprep.subr.mxu0 0.0
  %3871 = vmatpush1.msra.mxu0 0.0
  %3872 = vmatprep.subr.mxu0 0.0
  %3873 = vmatpush1.msra.mxu0 0.0
  %3874 = vmatprep.subr.mxu0 0.0
  %3875 = vmatpush1.msra.mxu0 0.0
  %3876 = vmatprep.subr.mxu0 0.0
  %3877 = vmatpush1.msra.mxu0 0.0
  %3878 = vmatprep.subr.mxu0 0.0
  %3879 = vmatpush1.msra.mxu0 0.0
  %3880 = vmatprep.subr.mxu0 0.0
  %3881 = vmatpush1.msra.mxu0 0.0
  %3882 = vmatprep.subr.mxu0 0.0
  %3883 = vmatpush1.msra.mxu0 0.0
  %3884 = vmatprep.subr.mxu0 0.0
  %3885 = vmatpush1.msra.mxu0 0.0
  %3886 = vmatprep.mubr.f32.mxu0 0.0
  %3887 = vmatmul.mubr.f32.gmra.mrb[0].mxu0 %v3330
  %v3888 = vpop.f32.mrb[0].mxu0
  %v3889 = vadd.f32 0.0, %v3888
  %v3890 = vpop.f32.mrb[0].mxu0
  %3891 = vdwg.mxu0
  %v3892 = vadd.f32 %v2351, %v3399
  %v3893 = vadd.f32 %v2352, %v3469
  %v3894 = vadd.f32 %v2353, %v3539
  %v3895 = vadd.f32 %v2354, %v3609
  %v3896 = vadd.f32 %v2355, %v3679
  %v3897 = vadd.f32 %v2356, %v3749
  %v3898 = vadd.f32 %v2357, %v3819
  %v3899 = vadd.f32 %v2358, %v3889
  %s3900 = scalar_lea.vmem %s10, 8
  %v3901 = vld [vmem:[%s3900] sm:$0xff]
  %3903 = vset.pattern.permute.xlu0 0
  %3904 = vperm.xlu0 %3903, %v3901
  %v3905 = vpop.permute.xlu0 %3904
  %v3907 = vadd.f32 %v3892, %v3905
  %v3908 = vadd.f32 %v3893, %v3905
  %v3909 = vadd.f32 %v3894, %v3905
  %v3910 = vadd.f32 %v3895, %v3905
  %v3911 = vadd.f32 %v3896, %v3905
  %v3912 = vadd.f32 %v3897, %v3905
  %v3913 = vadd.f32 %v3898, %v3905
  %v3914 = vadd.f32 %v3899, %v3905
  %v3915 = vld [vmem:[%s11] sm:$0xff]
  %v3916 = vld [vmem:[%s12] sm:$0x1]
  %v3918 = vlaneseq
  %v3919 = vshrl.u32 %v3918, 7
  %v3920 = vsub.s32 0, %v3919
  %v3921 = vrot.slane %v3916, %v3920
  %v3924 = vsel %vm67, %v3907, 0
  %v3927 = vsel %vm67, %v3908, 0
  %v3930 = vsel %vm67, %v3909, 0
  %v3933 = vsel %vm67, %v3910, 0
  %v3936 = vsel %vm67, %v3911, 0
  %v3939 = vsel %vm67, %v3912, 0
  %v3942 = vsel %vm67, %v3913, 0
  %v3945 = vsel %vm67, %v3914, 0
  %3947 = vmatprep.subr.mxu0 0.0
  %3948 = vmatpush1.msra.mxu0 %v3915
  %3949 = vmatprep.subr.mxu0 0.0
  %3950 = vmatpush1.msra.mxu0 0.0
  %3951 = vmatprep.subr.mxu0 0.0
  %3952 = vmatpush1.msra.mxu0 0.0
  %3953 = vmatprep.subr.mxu0 0.0
  %3954 = vmatpush1.msra.mxu0 0.0
  %3955 = vmatprep.subr.mxu0 0.0
  %3956 = vmatpush1.msra.mxu0 0.0
  %3957 = vmatprep.subr.mxu0 0.0
  %3958 = vmatpush1.msra.mxu0 0.0
  %3959 = vmatprep.subr.mxu0 0.0
  %3960 = vmatpush1.msra.mxu0 0.0
  %3961 = vmatprep.subr.mxu0 0.0
  %3962 = vmatpush1.msra.mxu0 0.0
  %3963 = vmatprep.subr.mxu0 0.0
  %3964 = vmatpush1.msra.mxu0 0.0
  %3965 = vmatprep.subr.mxu0 0.0
  %3966 = vmatpush1.msra.mxu0 0.0
  %3967 = vmatprep.subr.mxu0 0.0
  %3968 = vmatpush1.msra.mxu0 0.0
  %3969 = vmatprep.subr.mxu0 0.0
  %3970 = vmatpush1.msra.mxu0 0.0
  %3971 = vmatprep.subr.mxu0 0.0
  %3972 = vmatpush1.msra.mxu0 0.0
  %3973 = vmatprep.subr.mxu0 0.0
  %3974 = vmatpush1.msra.mxu0 0.0
  %3975 = vmatprep.subr.mxu0 0.0
  %3976 = vmatpush1.msra.mxu0 0.0
  %3977 = vmatprep.subr.mxu0 0.0
  %3978 = vmatpush1.msra.mxu0 0.0
  %3979 = vmatprep.subr.mxu0 0.0
  %3980 = vmatpush1.msra.mxu0 0.0
  %3981 = vmatprep.subr.mxu0 0.0
  %3982 = vmatpush1.msra.mxu0 0.0
  %3983 = vmatprep.subr.mxu0 0.0
  %3984 = vmatpush1.msra.mxu0 0.0
  %3985 = vmatprep.subr.mxu0 0.0
  %3986 = vmatpush1.msra.mxu0 0.0
  %3987 = vmatprep.subr.mxu0 0.0
  %3988 = vmatpush1.msra.mxu0 0.0
  %3989 = vmatprep.subr.mxu0 0.0
  %3990 = vmatpush1.msra.mxu0 0.0
  %3991 = vmatprep.subr.mxu0 0.0
  %3992 = vmatpush1.msra.mxu0 0.0
  %3993 = vmatprep.subr.mxu0 0.0
  %3994 = vmatpush1.msra.mxu0 0.0
  %3995 = vmatprep.subr.mxu0 0.0
  %3996 = vmatpush1.msra.mxu0 0.0
  %3997 = vmatprep.subr.mxu0 0.0
  %3998 = vmatpush1.msra.mxu0 0.0
  %3999 = vmatprep.subr.mxu0 0.0
  %4000 = vmatpush1.msra.mxu0 0.0
  %4001 = vmatprep.subr.mxu0 0.0
  %4002 = vmatpush1.msra.mxu0 0.0
  %4003 = vmatprep.subr.mxu0 0.0
  %4004 = vmatpush1.msra.mxu0 0.0
  %4005 = vmatprep.subr.mxu0 0.0
  %4006 = vmatpush1.msra.mxu0 0.0
  %4007 = vmatprep.subr.mxu0 0.0
  %4008 = vmatpush1.msra.mxu0 0.0
  %4009 = vmatprep.subr.mxu0 0.0
  %4010 = vmatpush1.msra.mxu0 0.0
  %4011 = vmatprep.mubr.f32.mxu0 0.0
  %4012 = vmatmul.mubr.f32.gmra.mrb[0].mxu0 %v3924
  %v4013 = vpop.f32.mrb[0].mxu0
  %v4014 = vadd.f32 %v3921, %v4013
  %v4015 = vpop.f32.mrb[0].mxu0
  %4016 = vmatprep.mubr.f32.mxu0 0.0
  %4017 = vmatmul.mubr.f32.gmra.mrb[0].mxu0 %v3927
  %v4018 = vpop.f32.mrb[0].mxu0
  %v4019 = vadd.f32 %v3921, %v4018
  %v4020 = vpop.f32.mrb[0].mxu0
  %4021 = vmatprep.mubr.f32.mxu0 0.0
  %4022 = vmatmul.mubr.f32.gmra.mrb[0].mxu0 %v3930
  %v4023 = vpop.f32.mrb[0].mxu0
  %v4024 = vadd.f32 %v3921, %v4023
  %v4025 = vpop.f32.mrb[0].mxu0
  %4026 = vmatprep.mubr.f32.mxu0 0.0
  %4027 = vmatmul.mubr.f32.gmra.mrb[0].mxu0 %v3933
  %v4028 = vpop.f32.mrb[0].mxu0
  %v4029 = vadd.f32 %v3921, %v4028
  %v4030 = vpop.f32.mrb[0].mxu0
  %4031 = vmatprep.mubr.f32.mxu0 0.0
  %4032 = vmatmul.mubr.f32.gmra.mrb[0].mxu0 %v3936
  %v4033 = vpop.f32.mrb[0].mxu0
  %v4034 = vadd.f32 %v3921, %v4033
  %v4035 = vpop.f32.mrb[0].mxu0
  %4036 = vmatprep.mubr.f32.mxu0 0.0
  %4037 = vmatmul.mubr.f32.gmra.mrb[0].mxu0 %v3939
  %v4038 = vpop.f32.mrb[0].mxu0
  %v4039 = vadd.f32 %v3921, %v4038
  %v4040 = vpop.f32.mrb[0].mxu0
  %4041 = vmatprep.mubr.f32.mxu0 0.0
  %4042 = vmatmul.mubr.f32.gmra.mrb[0].mxu0 %v3942
  %v4043 = vpop.f32.mrb[0].mxu0
  %v4044 = vadd.f32 %v3921, %v4043
  %v4045 = vpop.f32.mrb[0].mxu0
  %4046 = vmatprep.mubr.f32.mxu0 0.0
  %4047 = vmatmul.mubr.f32.gmra.mrb[0].mxu0 %v3945
  %v4048 = vpop.f32.mrb[0].mxu0
  %v4049 = vadd.f32 %v3921, %v4048
  %v4050 = vpop.f32.mrb[0].mxu0
  %4051 = vdwg.mxu0
  %vm4052 = vcmask 48128
  %4053 = vst.msk [vmem:[%s13] sm:$0xff] %vm4052, %v4014
  %4054 = vst.msk [vmem:[%s13 + $0x8] sm:$0xff] %vm4052, %v4019
  %4055 = vst.msk [vmem:[%s13 + $0x10] sm:$0xff] %vm4052, %v4024
  %4056 = vst.msk [vmem:[%s13 + $0x18] sm:$0xff] %vm4052, %v4029
  %4057 = vst.msk [vmem:[%s13 + $0x20] sm:$0xff] %vm4052, %v4034
  %4058 = vst.msk [vmem:[%s13 + $0x28] sm:$0xff] %vm4052, %v4039
  %4059 = vst.msk [vmem:[%s13 + $0x30] sm:$0xff] %vm4052, %v4044
  %4060 = vst.msk [vmem:[%s13 + $0x38] sm:$0xff] %vm4052, %v4049
  // Predicated region
  $region54: #{tpu_custom_call.1} parent=0 // pred_check
    _
  $region55: #{tpu_custom_call.1} parent=0 // pred_check_branch
    %4062 = sbr.rel (0) target = $region57
  $region56: #{tpu_custom_call.1} parent=0 // pred_region
    _
  $region57: #{tpu_custom_call.1} parent=0 // pred_fallthru
    _
  // Predicated region
  $region58: #{tpu_custom_call.1} parent=0 // pred_check
    _
  $region59: #{tpu_custom_call.1} parent=0 // pred_check_branch
    %4064 = sbr.rel (0) target = $region61
  $region60: #{tpu_custom_call.1} parent=0 // pred_region
    _
  $region61: #{tpu_custom_call.1} parent=0 // pred_fallthru
    _

</llo_original>
